<compile_context>
chip_gen: v7x
topology: tpu7x:2x2x1
jax: 0.10.0
libtpu: 0.0.40
codegen_flags: <defaults>
</compile_context>

<pallas_src>
import numpy as np

import jax
import jax.numpy as jnp
from jax.experimental import pallas as pl
from jax.experimental.pallas import tpu as pltpu


# ----------------------------- model config -----------------------------
IMG_SIZE = 16
PATCH = 4
IN_CHANS = 3
EMBED_DIM = 32
DEPTH = 2
NUM_HEADS = 2
NUM_CLASSES = 10
MLP_RATIO = 4.0

NUM_PATCHES = (IMG_SIZE // PATCH) ** 2         # 16
SEQ = NUM_PATCHES + 1                          # 17 real tokens (cls + patches)
HEAD_DIM = EMBED_DIM // NUM_HEADS              # 16
MLP_HIDDEN = int(EMBED_DIM * MLP_RATIO)        # 128
CPP = IN_CHANS * PATCH * PATCH                 # 48

# ------------------------ padded (Pallas-facing) layout ------------------------
D_PAD = 128          # lane-dense embedding dim (real features in lanes [0,32))
S_PAD = 32           # sublane-aligned sequence length (>= SEQ, multiple of 8)
CPP_PAD = 128        # padded flattened-patch length (K of patch-embed matmul)
C_PAD = 128          # padded classifier width (real classes in lanes [0,10))
QKV_PAD = 128        # fused QKV output width (real cols [0, 3*EMBED_DIM)=96)
HID = MLP_HIDDEN     # 128, already lane aligned
CLS_ROW = 0          # cls token lives at row 0 of each sample (PyTorch order)

LN_EPS = 1e-5
ATTN_SCALE = HEAD_DIM ** -0.5                  # 0.25 (exact in bf16)
_NEG_INF = -1e30
_SQRT1_2 = 0.7071067811865476


# ----------------------------- fused Pallas kernel -----------------------------

def _make_kernel(bt):
    """Build the fused ViT kernel for a batch-block of `bt` samples."""
    f32 = jnp.float32
    bf16 = jnp.bfloat16
    m_rows = bt * S_PAD                         # flattened token-parallel M

    def kernel(patches_ref, patch_w_ref, addc_ref,
               ln1_g_ref, ln1_b_ref,
               wqkv_ref, bqkv_ref, wproj_ref, bproj_ref,
               ln2_g_ref, ln2_b_ref,
               wfc1_ref, bfc1_ref, wfc2_ref, bfc2_ref,
               normf_g_ref, normf_b_ref,
               head_w_ref, head_b_ref,
               out_ref):
        # Hoisted masks (computed once per grid step).
        # Real key tokens live at rows [0, SEQ) of each sample block.
        kmask = jax.lax.broadcasted_iota(jnp.int32, (1, 1, S_PAD), 2) < SEQ
        # One-hot selector for the CLS row (row 0 of every sample block).
        cls_sel = (jax.lax.broadcasted_iota(jnp.int32, (1, S_PAD, 1), 1)
                   == CLS_ROW).astype(f32)

        def mm(a, w):
            """MXU matmul: bf16 operands, f32 accumulation."""
            return jnp.dot(a.astype(bf16), w.astype(bf16),
                           preferred_element_type=f32)

        def layer_norm(x, g, b):
            # x: (rows, D_PAD) f32 with padded feature lanes exactly 0, so the
            # sums over all 128 lanes equal the sums over the 32 real features.
            mu = jnp.sum(x, axis=-1, keepdims=True) * (1.0 / EMBED_DIM)
            var = (jnp.sum(x * x, axis=-1, keepdims=True) * (1.0 / EMBED_DIM)
                   - mu * mu)
            inv = jax.lax.rsqrt(var + LN_EPS)
            # Zero-padded gamma/beta keep padded feature lanes exactly 0.
            return (x - mu) * inv * g + b

        # ---- patch embedding (+ pos-embed / cls token / folded patch bias) ----
        p2 = patches_ref[...].reshape(m_rows, CPP_PAD)          # bf16 input
        h = mm(p2, patch_w_ref[...])                            # (M, D_PAD) f32
        h = (h.reshape(bt, S_PAD, D_PAD) + addc_ref[...][None]
             ).reshape(m_rows, D_PAD)

        # ---- transformer blocks (DEPTH small: unrolled statically) ----
        for d in range(DEPTH):
            # --- multi-head self-attention (fused QKV, fused out-proj) ---
            y = layer_norm(h, ln1_g_ref[d], ln1_b_ref[d])
            qkv = mm(y, wqkv_ref[d]) + bqkv_ref[d]              # (M, 128): Q|K|V|pad

            o_heads = []
            for hh in range(NUM_HEADS):
                def head_view(section, _hh=hh):
                    c0 = section * EMBED_DIM + _hh * HEAD_DIM
                    return (qkv[:, c0:c0 + HEAD_DIM]
                            .reshape(bt, S_PAD, HEAD_DIM).astype(bf16))
                q = head_view(0)      # ATTN_SCALE pre-folded into wqkv Q cols
                k = head_view(1)
                v = head_view(2)
                s = jnp.einsum('bqd,bkd->bqk', q, k,
                               preferred_element_type=f32)       # (bt, S, S)
                s = jnp.where(kmask, s, _NEG_INF)
                s = s - jnp.max(s, axis=-1, keepdims=True)
                p = jnp.exp(s)
                p = p * pl.reciprocal(jnp.sum(p, axis=-1, keepdims=True),
                                      approx=True)
                o = jnp.einsum('bqk,bkd->bqd', p.astype(bf16), v,
                               preferred_element_type=f32)       # (bt, S, Dh)
                o_heads.append(o.reshape(m_rows, HEAD_DIM))
            o_all = jnp.concatenate(o_heads, axis=-1)            # (M, EMBED_DIM)
            h = h + mm(o_all, wproj_ref[d]) + bproj_ref[d]

            # --- MLP ---
            y = layer_norm(h, ln2_g_ref[d], ln2_b_ref[d])
            y1 = mm(y, wfc1_ref[d]) + bfc1_ref[d]                # (M, HID)
            # exact (erf) GELU in f32; tanh-approx would move work to the EUP
            # on v6e/v7x but changes numerics slightly.
            y1 = 0.5 * y1 * (1.0 + jax.lax.erf(y1 * _SQRT1_2))
            h = h + mm(y1, wfc2_ref[d]) + bfc2_ref[d]

        # ---- gather CLS rows, final LayerNorm, classifier head ----
        cls = jnp.sum(h.reshape(bt, S_PAD, D_PAD) * cls_sel, axis=1)  # (bt, D_PAD)
        cls = layer_norm(cls, normf_g_ref[...], normf_b_ref[...])
        out_ref[...] = mm(cls, head_w_ref[...]) + head_b_ref[...]     # (bt, C_PAD)

    return kernel


# ----------------------------- kernel wrapper -----------------------------

def _const_spec(shape):
    """Full-extent block, constant index map (weights resident in VMEM)."""
    nd = len(shape)
    return pl.BlockSpec(shape, lambda b, _nd=nd: (0,) * _nd)


def vit_forward(x, params, block_batch=8):
    """x: (B, 3, IMG_SIZE, IMG_SIZE) float32 NCHW.  Returns logits (B, NUM_CLASSES).

    block_batch: samples per grid step (8 matches the 256x256 MXU on v6e/v7x;
    use 4 on v5e).  If B < block_batch the whole batch runs in one grid step.
    """
    B = x.shape[0]
    bt = block_batch if B >= block_batch else B
    num_blocks = pl.cdiv(B, bt)
    b_pad = num_blocks * bt
    nh = nw = IMG_SIZE // PATCH

    # Patch extraction: tiny one-time XLA glue, then ONE jnp.pad builds the
    # lane/sublane-aligned bf16 layout (batch pad, CLS row at 0, patches at
    # rows [1, 1+NUM_PATCHES), padded rows/cols zero).
    p = x.reshape(B, IN_CHANS, nh, PATCH, nw, PATCH)
    p = p.transpose(0, 2, 4, 1, 3, 5).reshape(B, NUM_PATCHES, CPP)
    patches = jnp.pad(
        p.astype(jnp.bfloat16),
        ((0, b_pad - B), (1, S_PAD - 1 - NUM_PATCHES), (0, CPP_PAD - CPP)))

    ordered = (
        patches,
        params["patch_w"], params["addc"],
        params["ln1_g"], params["ln1_b"],
        params["wqkv"], params["bqkv"],
        params["wproj"], params["bproj"],
        params["ln2_g"], params["ln2_b"],
        params["wfc1"], params["bfc1"], params["wfc2"], params["bfc2"],
        params["normf_g"], params["normf_b"],
        params["head_w"], params["head_b"],
    )

    in_specs = [pl.BlockSpec((bt, S_PAD, CPP_PAD), lambda b: (b, 0, 0))]
    in_specs += [_const_spec(a.shape) for a in ordered[1:]]

    out = pl.pallas_call(
        _make_kernel(bt),
        out_shape=jax.ShapeDtypeStruct((b_pad, C_PAD), jnp.float32),
        grid=(num_blocks,),
        in_specs=in_specs,
        out_specs=pl.BlockSpec((bt, C_PAD), lambda b: (b, 0)),
        compiler_params=pltpu.CompilerParams(
            dimension_semantics=("parallel",)),
    )(*ordered)

    return out[:B, :NUM_CLASSES]


# ----------------------------- parameter init -----------------------------

def _xavier_uniform(key, shape, fan_in, fan_out):
    limit = float(np.sqrt(6.0 / (fan_in + fan_out)))
    return jax.random.uniform(key, shape, jnp.float32, -limit, limit)


def _sinusoid_pos_embed(n_pos, d):
    pos = np.arange(n_pos, dtype=np.float64)[:, None]
    i = np.arange(d, dtype=np.float64)[None, :]
    angle = pos / np.power(10000.0, 2.0 * (i // 2) / d)
    pe = np.zeros((n_pos, d), dtype=np.float64)
    pe[:, 0::2] = np.sin(angle[:, 0::2])
    pe[:, 1::2] = np.cos(angle[:, 1::2])
    return jnp.asarray(pe, jnp.float32)            # (n_pos, d)


def _pad2(w, rows, cols):
    return jnp.pad(w, ((0, rows - w.shape[0]), (0, cols - w.shape[1])))


def init_params(key):
    keys = jax.random.split(key, 2 + 4 * DEPTH + 1)
    ki = iter(keys)

    # PatchEmbed: Conv2d(3, D, k=P, s=P) == matmul over flattened patches.
    patch_w = _xavier_uniform(next(ki), (CPP, EMBED_DIM),
                              fan_in=CPP, fan_out=EMBED_DIM * PATCH * PATCH)
    patch_b = jnp.zeros((EMBED_DIM,), jnp.float32)

    cls_token = 0.02 * jax.random.normal(next(ki), (EMBED_DIM,), jnp.float32)
    pos = _sinusoid_pos_embed(SEQ, EMBED_DIM)       # fixed cosine pos-embed

    # Additive constant: cls token + pos[0] at row 0, pos-embed (+ folded patch
    # bias) on patch rows [1, SEQ), zeros on padded rows / feature lanes.
    addc = jnp.zeros((S_PAD, D_PAD), jnp.float32)
    addc = addc.at[CLS_ROW, :EMBED_DIM].set(cls_token + pos[0])
    addc = addc.at[1:SEQ, :EMBED_DIM].set(pos[1:] + patch_b[None, :])

    wqkv, wproj = [], []
    ln1_g, ln1_b, ln2_g, ln2_b = [], [], [], []
    bproj, wfc1, bfc1, wfc2, bfc2 = [], [], [], [], []
    for _ in range(DEPTH):
        qkv_w = _xavier_uniform(next(ki), (EMBED_DIM, 3 * EMBED_DIM),
                                EMBED_DIM, 3 * EMBED_DIM)
        # Fold the attention scale into the Q columns (bias is zero so folding
        # it there is a no-op); scores then need no per-element multiply.
        qkv_w = qkv_w.at[:, :EMBED_DIM].multiply(ATTN_SCALE)
        proj_w = _xavier_uniform(next(ki), (EMBED_DIM, EMBED_DIM),
                                 EMBED_DIM, EMBED_DIM)
        fc1_w = _xavier_uniform(next(ki), (EMBED_DIM, MLP_HIDDEN),
                                EMBED_DIM, MLP_HIDDEN)
        fc2_w = _xavier_uniform(next(ki), (MLP_HIDDEN, EMBED_DIM),
                                MLP_HIDDEN, EMBED_DIM)
        # Fused, lane-dense Pallas layouts (zero padding preserves numerics).
        wqkv.append(_pad2(qkv_w, D_PAD, QKV_PAD))          # (128, 128)
        wproj.append(_pad2(proj_w, EMBED_DIM, D_PAD))       # (32, 128)
        ln1_g.append(_pad2(jnp.ones((1, EMBED_DIM), jnp.float32), 1, D_PAD))
        ln1_b.append(jnp.zeros((1, D_PAD), jnp.float32))
        ln2_g.append(_pad2(jnp.ones((1, EMBED_DIM), jnp.float32), 1, D_PAD))
        ln2_b.append(jnp.zeros((1, D_PAD), jnp.float32))
        bproj.append(jnp.zeros((1, D_PAD), jnp.float32))
        wfc1.append(_pad2(fc1_w, D_PAD, HID))
        bfc1.append(jnp.zeros((1, HID), jnp.float32))
        wfc2.append(_pad2(fc2_w, HID, D_PAD))
        bfc2.append(jnp.zeros((1, D_PAD), jnp.float32))

    head_w = _xavier_uniform(next(ki), (EMBED_DIM, NUM_CLASSES),
                             EMBED_DIM, NUM_CLASSES)

    bf16 = jnp.bfloat16
    return {
        "patch_w": _pad2(patch_w, CPP_PAD, D_PAD).astype(bf16),
        "addc": addc,
        "ln1_g": jnp.stack(ln1_g), "ln1_b": jnp.stack(ln1_b),
        # Fused QKV: real cols [0:96) ordered [Q_h0|Q_h1|K_h0|K_h1|V_h0|V_h1].
        "wqkv": jnp.stack(wqkv).astype(bf16),
        # qkv_bias=True: zero-initialised but kept as a real input.
        "bqkv": jnp.zeros((DEPTH, 1, QKV_PAD), jnp.float32),
        "wproj": jnp.stack(wproj).astype(bf16),
        "bproj": jnp.stack(bproj),
        "ln2_g": jnp.stack(ln2_g), "ln2_b": jnp.stack(ln2_b),
        "wfc1": jnp.stack(wfc1).astype(bf16), "bfc1": jnp.stack(bfc1),
        "wfc2": jnp.stack(wfc2).astype(bf16), "bfc2": jnp.stack(bfc2),
        "normf_g": _pad2(jnp.ones((1, EMBED_DIM), jnp.float32), 1, D_PAD),
        "normf_b": jnp.zeros((1, D_PAD), jnp.float32),
        "head_w": _pad2(head_w, D_PAD, C_PAD).astype(bf16),
        "head_b": jnp.zeros((1, C_PAD), jnp.float32),
    }


if __name__ == "__main__":
    root = jax.random.PRNGKey(0)
    k_param, k_data = jax.random.split(root)

    params = init_params(k_param)
    x = jax.random.normal(k_data, (2, IN_CHANS, IMG_SIZE, IMG_SIZE), jnp.float32)

    logits = jax.jit(vit_forward)(x, params)
    logits = jax.block_until_ready(logits)

    assert logits.shape == (2, NUM_CLASSES)
    assert bool(jnp.all(jnp.isfinite(logits)))
    print("KERNEL_OK")
</pallas_src>

<mosaic_0001>
module attributes {stable_mosaic.version = 11 : i64} {
  func.func @kernel(%arg0: i32, %arg1: memref<2x32x128xbf16, #tpu.memory_space<vmem>>, %arg2: memref<128x128xbf16, #tpu.memory_space<vmem>>, %arg3: memref<32x128xf32, #tpu.memory_space<vmem>>, %arg4: memref<2x1x128xf32, #tpu.memory_space<vmem>>, %arg5: memref<2x1x128xf32, #tpu.memory_space<vmem>>, %arg6: memref<2x128x128xbf16, #tpu.memory_space<vmem>>, %arg7: memref<2x1x128xf32, #tpu.memory_space<vmem>>, %arg8: memref<2x32x128xbf16, #tpu.memory_space<vmem>>, %arg9: memref<2x1x128xf32, #tpu.memory_space<vmem>>, %arg10: memref<2x1x128xf32, #tpu.memory_space<vmem>>, %arg11: memref<2x1x128xf32, #tpu.memory_space<vmem>>, %arg12: memref<2x128x128xbf16, #tpu.memory_space<vmem>>, %arg13: memref<2x1x128xf32, #tpu.memory_space<vmem>>, %arg14: memref<2x128x128xbf16, #tpu.memory_space<vmem>>, %arg15: memref<2x1x128xf32, #tpu.memory_space<vmem>>, %arg16: memref<1x128xf32, #tpu.memory_space<vmem>>, %arg17: memref<1x128xf32, #tpu.memory_space<vmem>>, %arg18: memref<128x128xbf16, #tpu.memory_space<vmem>>, %arg19: memref<1x128xf32, #tpu.memory_space<vmem>>, %arg20: memref<2x128xf32, #tpu.memory_space<vmem>>) attributes {dimension_semantics = [#tpu.dimension_semantics<parallel>], iteration_bounds = array<i64: 1>, scalar_prefetch = 0 : i64, scratch_operands = 0 : i64, tpu.core_type = #tpu.core_type<tc>, window_params = [{transform_indices = @transform_0, window_bounds = array<i64: 2, 32, 128>}, {pipeline_mode = #tpu.pipeline_mode<synchronous>, transform_indices = @transform_1, window_bounds = array<i64: 128, 128>}, {pipeline_mode = #tpu.pipeline_mode<synchronous>, transform_indices = @transform_2, window_bounds = array<i64: 32, 128>}, {pipeline_mode = #tpu.pipeline_mode<synchronous>, transform_indices = @transform_3, window_bounds = array<i64: 2, 1, 128>}, {pipeline_mode = #tpu.pipeline_mode<synchronous>, transform_indices = @transform_4, window_bounds = array<i64: 2, 1, 128>}, {pipeline_mode = #tpu.pipeline_mode<synchronous>, transform_indices = @transform_5, window_bounds = array<i64: 2, 128, 128>}, {pipeline_mode = #tpu.pipeline_mode<synchronous>, transform_indices = @transform_6, window_bounds = array<i64: 2, 1, 128>}, {pipeline_mode = #tpu.pipeline_mode<synchronous>, transform_indices = @transform_7, window_bounds = array<i64: 2, 32, 128>}, {pipeline_mode = #tpu.pipeline_mode<synchronous>, transform_indices = @transform_8, window_bounds = array<i64: 2, 1, 128>}, {pipeline_mode = #tpu.pipeline_mode<synchronous>, transform_indices = @transform_9, window_bounds = array<i64: 2, 1, 128>}, {pipeline_mode = #tpu.pipeline_mode<synchronous>, transform_indices = @transform_10, window_bounds = array<i64: 2, 1, 128>}, {pipeline_mode = #tpu.pipeline_mode<synchronous>, transform_indices = @transform_11, window_bounds = array<i64: 2, 128, 128>}, {pipeline_mode = #tpu.pipeline_mode<synchronous>, transform_indices = @transform_12, window_bounds = array<i64: 2, 1, 128>}, {pipeline_mode = #tpu.pipeline_mode<synchronous>, transform_indices = @transform_13, window_bounds = array<i64: 2, 128, 128>}, {pipeline_mode = #tpu.pipeline_mode<synchronous>, transform_indices = @transform_14, window_bounds = array<i64: 2, 1, 128>}, {pipeline_mode = #tpu.pipeline_mode<synchronous>, transform_indices = @transform_15, window_bounds = array<i64: 1, 128>}, {pipeline_mode = #tpu.pipeline_mode<synchronous>, transform_indices = @transform_16, window_bounds = array<i64: 1, 128>}, {pipeline_mode = #tpu.pipeline_mode<synchronous>, transform_indices = @transform_17, window_bounds = array<i64: 128, 128>}, {pipeline_mode = #tpu.pipeline_mode<synchronous>, transform_indices = @transform_18, window_bounds = array<i64: 1, 128>}, {transform_indices = @transform_19, window_bounds = array<i64: 2, 128>}]} {
    %0 = tpu.iota {dimensions = array<i32: 2>} : vector<1x1x32xi32>
    %c17_i32 = arith.constant 17 : i32
    %1 = vector.broadcast %c17_i32 : i32 to vector<1x1x32xi32>
    %2 = arith.cmpi slt, %0, %1 : vector<1x1x32xi32>
    %3 = tpu.iota {dimensions = array<i32: 1>} : vector<1x32x1xi32>
    %c0_i32 = arith.constant 0 : i32
    %4 = vector.broadcast %c0_i32 : i32 to vector<1x32x1xi32>
    %5 = arith.cmpi eq, %3, %4 : vector<1x32x1xi32>
    %6 = arith.extui %5 : vector<1x32x1xi1> to vector<1x32x1xi32>
    %7 = arith.sitofp %6 : vector<1x32x1xi32> to vector<1x32x1xf32>
    %c0 = arith.constant 0 : index
    %c0_0 = arith.constant 0 : index
    %c0_1 = arith.constant 0 : index
    %8 = vector.load %arg1[%c0, %c0_0, %c0_1] : memref<2x32x128xbf16, #tpu.memory_space<vmem>>, vector<2x32x128xbf16>
    %9 = vector.shape_cast %8 : vector<2x32x128xbf16> to vector<64x128xbf16>
    %c0_2 = arith.constant 0 : index
    %c0_3 = arith.constant 0 : index
    %10 = vector.load %arg2[%c0_2, %c0_3] : memref<128x128xbf16, #tpu.memory_space<vmem>>, vector<128x128xbf16>
    %cst = arith.constant dense<0.000000e+00> : vector<64x128xf32>
    %11 = tpu.matmul %9, %10, %cst {dimension_numbers = #tpu.dot_dimension_numbers<[1], [0], [0], [1], [0, 0, 1, 1], [], []>} : vector<64x128xbf16>, vector<128x128xbf16>, vector<64x128xf32> -> vector<64x128xf32>
    %12 = vector.shape_cast %11 : vector<64x128xf32> to vector<2x32x128xf32>
    %c0_4 = arith.constant 0 : index
    %c0_5 = arith.constant 0 : index
    %13 = vector.load %arg3[%c0_4, %c0_5] : memref<32x128xf32, #tpu.memory_space<vmem>>, vector<32x128xf32>
    %14 = vector.shape_cast %13 : vector<32x128xf32> to vector<1x32x128xf32>
    %15 = vector.broadcast %14 : vector<1x32x128xf32> to vector<2x32x128xf32>
    %16 = arith.addf %12, %15 : vector<2x32x128xf32>
    %17 = vector.shape_cast %16 : vector<2x32x128xf32> to vector<64x128xf32>
    %c0_6 = arith.constant 0 : index
    %c0_7 = arith.constant 0 : index
    %c0_8 = arith.constant 0 : index
    %18 = vector.load %arg4[%c0_6, %c0_7, %c0_8] : memref<2x1x128xf32, #tpu.memory_space<vmem>>, vector<1x1x128xf32>
    %19 = vector.shape_cast %18 : vector<1x1x128xf32> to vector<1x128xf32>
    %c0_9 = arith.constant 0 : index
    %c0_10 = arith.constant 0 : index
    %c0_11 = arith.constant 0 : index
    %20 = vector.load %arg5[%c0_9, %c0_10, %c0_11] : memref<2x1x128xf32, #tpu.memory_space<vmem>>, vector<1x1x128xf32>
    %21 = vector.shape_cast %20 : vector<1x1x128xf32> to vector<1x128xf32>
    %cst_12 = arith.constant dense<0.000000e+00> : vector<64xf32>
    %22 = vector.multi_reduction <add>, %17, %cst_12 [1] : vector<64x128xf32> to vector<64xf32>
    %23 = vector.shape_cast %22 : vector<64xf32> to vector<64x1xf32>
    %cst_13 = arith.constant 3.125000e-02 : f32
    %24 = vector.broadcast %cst_13 : f32 to vector<64x1xf32>
    %25 = arith.mulf %23, %24 : vector<64x1xf32>
    %26 = arith.mulf %17, %17 : vector<64x128xf32>
    %cst_14 = arith.constant dense<0.000000e+00> : vector<64xf32>
    %27 = vector.multi_reduction <add>, %26, %cst_14 [1] : vector<64x128xf32> to vector<64xf32>
    %28 = vector.shape_cast %27 : vector<64xf32> to vector<64x1xf32>
    %cst_15 = arith.constant 3.125000e-02 : f32
    %29 = vector.broadcast %cst_15 : f32 to vector<64x1xf32>
    %30 = arith.mulf %28, %29 : vector<64x1xf32>
    %31 = arith.mulf %25, %25 : vector<64x1xf32>
    %32 = arith.subf %30, %31 : vector<64x1xf32>
    %cst_16 = arith.constant 9.99999974E-6 : f32
    %33 = vector.broadcast %cst_16 : f32 to vector<64x1xf32>
    %34 = arith.addf %32, %33 : vector<64x1xf32>
    %35 = math.rsqrt %34 : vector<64x1xf32>
    %36 = vector.broadcast %25 : vector<64x1xf32> to vector<64x128xf32>
    %37 = arith.subf %17, %36 : vector<64x128xf32>
    %38 = vector.broadcast %35 : vector<64x1xf32> to vector<64x128xf32>
    %39 = arith.mulf %37, %38 : vector<64x128xf32>
    %40 = vector.broadcast %19 : vector<1x128xf32> to vector<64x128xf32>
    %41 = arith.mulf %39, %40 : vector<64x128xf32>
    %42 = vector.broadcast %21 : vector<1x128xf32> to vector<64x128xf32>
    %43 = arith.addf %41, %42 : vector<64x128xf32>
    %c0_17 = arith.constant 0 : index
    %c0_18 = arith.constant 0 : index
    %c0_19 = arith.constant 0 : index
    %44 = vector.load %arg6[%c0_17, %c0_18, %c0_19] : memref<2x128x128xbf16, #tpu.memory_space<vmem>>, vector<1x128x128xbf16>
    %45 = vector.shape_cast %44 : vector<1x128x128xbf16> to vector<128x128xbf16>
    %46 = arith.truncf %43 : vector<64x128xf32> to vector<64x128xbf16>
    %cst_20 = arith.constant dense<0.000000e+00> : vector<64x128xf32>
    %47 = tpu.matmul %46, %45, %cst_20 {dimension_numbers = #tpu.dot_dimension_numbers<[1], [0], [0], [1], [0, 0, 1, 1], [], []>} : vector<64x128xbf16>, vector<128x128xbf16>, vector<64x128xf32> -> vector<64x128xf32>
    %c0_21 = arith.constant 0 : index
    %c0_22 = arith.constant 0 : index
    %c0_23 = arith.constant 0 : index
    %48 = vector.load %arg7[%c0_21, %c0_22, %c0_23] : memref<2x1x128xf32, #tpu.memory_space<vmem>>, vector<1x1x128xf32>
    %49 = vector.shape_cast %48 : vector<1x1x128xf32> to vector<1x128xf32>
    %50 = vector.broadcast %49 : vector<1x128xf32> to vector<64x128xf32>
    %51 = arith.addf %47, %50 : vector<64x128xf32>
    %52 = vector.extract_strided_slice %51 {offsets = [0, 0], sizes = [64, 16], strides = [1, 1]} : vector<64x128xf32> to vector<64x16xf32>
    %53 = vector.shape_cast %52 : vector<64x16xf32> to vector<2x32x16xf32>
    %54 = arith.truncf %53 : vector<2x32x16xf32> to vector<2x32x16xbf16>
    %55 = vector.extract_strided_slice %51 {offsets = [0, 32], sizes = [64, 16], strides = [1, 1]} : vector<64x128xf32> to vector<64x16xf32>
    %56 = vector.shape_cast %55 : vector<64x16xf32> to vector<2x32x16xf32>
    %57 = arith.truncf %56 : vector<2x32x16xf32> to vector<2x32x16xbf16>
    %58 = vector.extract_strided_slice %51 {offsets = [0, 64], sizes = [64, 16], strides = [1, 1]} : vector<64x128xf32> to vector<64x16xf32>
    %59 = vector.shape_cast %58 : vector<64x16xf32> to vector<2x32x16xf32>
    %60 = arith.truncf %59 : vector<2x32x16xf32> to vector<2x32x16xbf16>
    "tpu.trace_start"() <{level = 10 : i32, message = "bqd,bkd->bqk"}> : () -> ()
    %cst_24 = arith.constant dense<0.000000e+00> : vector<2x32x32xf32>
    %61 = tpu.matmul %54, %57, %cst_24 {dimension_numbers = #tpu.dot_dimension_numbers<[2], [2], [1], [1], [0, 0, 0, 1, 1, 1], [0], [0]>} : vector<2x32x16xbf16>, vector<2x32x16xbf16>, vector<2x32x32xf32> -> vector<2x32x32xf32>
    %cst_25 = arith.constant -1.000000e+30 : f32
    "tpu.trace_stop"() : () -> ()
    %62 = vector.shape_cast %2 : vector<1x1x32xi1> to vector<1x1x32xi1>
    %63 = vector.broadcast %62 : vector<1x1x32xi1> to vector<2x32x32xi1>
    %64 = vector.broadcast %cst_25 : f32 to vector<2x32x32xf32>
    %65 = arith.select %63, %61, %64 : vector<2x32x32xi1>, vector<2x32x32xf32>
    %cst_26 = arith.constant dense<0xFF800000> : vector<2x32xf32>
    %66 = vector.multi_reduction <maximumf>, %65, %cst_26 [2] : vector<2x32x32xf32> to vector<2x32xf32>
    %67 = vector.shape_cast %66 : vector<2x32xf32> to vector<2x32x1xf32>
    %68 = vector.broadcast %67 : vector<2x32x1xf32> to vector<2x32x32xf32>
    %69 = arith.subf %65, %68 : vector<2x32x32xf32>
    %70 = math.exp %69 : vector<2x32x32xf32>
    %cst_27 = arith.constant dense<0.000000e+00> : vector<2x32xf32>
    %71 = vector.multi_reduction <add>, %70, %cst_27 [2] : vector<2x32x32xf32> to vector<2x32xf32>
    %72 = vector.shape_cast %71 : vector<2x32xf32> to vector<2x32x1xf32>
    %73 = tpu.reciprocal %72 {approx = true} : vector<2x32x1xf32> -> vector<2x32x1xf32>
    %74 = vector.broadcast %73 : vector<2x32x1xf32> to vector<2x32x32xf32>
    %75 = arith.mulf %70, %74 : vector<2x32x32xf32>
    %76 = arith.truncf %75 : vector<2x32x32xf32> to vector<2x32x32xbf16>
    "tpu.trace_start"() <{level = 10 : i32, message = "bqk,bkd->bqd"}> : () -> ()
    %cst_28 = arith.constant dense<0.000000e+00> : vector<2x32x16xf32>
    %77 = tpu.matmul %76, %60, %cst_28 {dimension_numbers = #tpu.dot_dimension_numbers<[2], [1], [1], [2], [0, 0, 0, 1, 1, 2], [0], [0]>} : vector<2x32x32xbf16>, vector<2x32x16xbf16>, vector<2x32x16xf32> -> vector<2x32x16xf32>
    "tpu.trace_stop"() : () -> ()
    %78 = vector.shape_cast %77 : vector<2x32x16xf32> to vector<64x16xf32>
    %79 = vector.extract_strided_slice %51 {offsets = [0, 16], sizes = [64, 16], strides = [1, 1]} : vector<64x128xf32> to vector<64x16xf32>
    %80 = vector.shape_cast %79 : vector<64x16xf32> to vector<2x32x16xf32>
    %81 = arith.truncf %80 : vector<2x32x16xf32> to vector<2x32x16xbf16>
    %82 = vector.extract_strided_slice %51 {offsets = [0, 48], sizes = [64, 16], strides = [1, 1]} : vector<64x128xf32> to vector<64x16xf32>
    %83 = vector.shape_cast %82 : vector<64x16xf32> to vector<2x32x16xf32>
    %84 = arith.truncf %83 : vector<2x32x16xf32> to vector<2x32x16xbf16>
    %85 = vector.extract_strided_slice %51 {offsets = [0, 80], sizes = [64, 16], strides = [1, 1]} : vector<64x128xf32> to vector<64x16xf32>
    %86 = vector.shape_cast %85 : vector<64x16xf32> to vector<2x32x16xf32>
    %87 = arith.truncf %86 : vector<2x32x16xf32> to vector<2x32x16xbf16>
    "tpu.trace_start"() <{level = 10 : i32, message = "bqd,bkd->bqk"}> : () -> ()
    %cst_29 = arith.constant dense<0.000000e+00> : vector<2x32x32xf32>
    %88 = tpu.matmul %81, %84, %cst_29 {dimension_numbers = #tpu.dot_dimension_numbers<[2], [2], [1], [1], [0, 0, 0, 1, 1, 1], [0], [0]>} : vector<2x32x16xbf16>, vector<2x32x16xbf16>, vector<2x32x32xf32> -> vector<2x32x32xf32>
    %cst_30 = arith.constant -1.000000e+30 : f32
    "tpu.trace_stop"() : () -> ()
    %89 = vector.shape_cast %2 : vector<1x1x32xi1> to vector<1x1x32xi1>
    %90 = vector.broadcast %89 : vector<1x1x32xi1> to vector<2x32x32xi1>
    %91 = vector.broadcast %cst_30 : f32 to vector<2x32x32xf32>
    %92 = arith.select %90, %88, %91 : vector<2x32x32xi1>, vector<2x32x32xf32>
    %cst_31 = arith.constant dense<0xFF800000> : vector<2x32xf32>
    %93 = vector.multi_reduction <maximumf>, %92, %cst_31 [2] : vector<2x32x32xf32> to vector<2x32xf32>
    %94 = vector.shape_cast %93 : vector<2x32xf32> to vector<2x32x1xf32>
    %95 = vector.broadcast %94 : vector<2x32x1xf32> to vector<2x32x32xf32>
    %96 = arith.subf %92, %95 : vector<2x32x32xf32>
    %97 = math.exp %96 : vector<2x32x32xf32>
    %cst_32 = arith.constant dense<0.000000e+00> : vector<2x32xf32>
    %98 = vector.multi_reduction <add>, %97, %cst_32 [2] : vector<2x32x32xf32> to vector<2x32xf32>
    %99 = vector.shape_cast %98 : vector<2x32xf32> to vector<2x32x1xf32>
    %100 = tpu.reciprocal %99 {approx = true} : vector<2x32x1xf32> -> vector<2x32x1xf32>
    %101 = vector.broadcast %100 : vector<2x32x1xf32> to vector<2x32x32xf32>
    %102 = arith.mulf %97, %101 : vector<2x32x32xf32>
    %103 = arith.truncf %102 : vector<2x32x32xf32> to vector<2x32x32xbf16>
    "tpu.trace_start"() <{level = 10 : i32, message = "bqk,bkd->bqd"}> : () -> ()
    %cst_33 = arith.constant dense<0.000000e+00> : vector<2x32x16xf32>
    %104 = tpu.matmul %103, %87, %cst_33 {dimension_numbers = #tpu.dot_dimension_numbers<[2], [1], [1], [2], [0, 0, 0, 1, 1, 2], [0], [0]>} : vector<2x32x32xbf16>, vector<2x32x16xbf16>, vector<2x32x16xf32> -> vector<2x32x16xf32>
    "tpu.trace_stop"() : () -> ()
    %105 = vector.shape_cast %104 : vector<2x32x16xf32> to vector<64x16xf32>
    %106 = tpu.concatenate %78, %105 in 1 : vector<64x16xf32>, vector<64x16xf32> -> vector<64x32xf32>
    %c0_34 = arith.constant 0 : index
    %c0_35 = arith.constant 0 : index
    %c0_36 = arith.constant 0 : index
    %107 = vector.load %arg8[%c0_34, %c0_35, %c0_36] : memref<2x32x128xbf16, #tpu.memory_space<vmem>>, vector<1x32x128xbf16>
    %108 = vector.shape_cast %107 : vector<1x32x128xbf16> to vector<32x128xbf16>
    %109 = arith.truncf %106 : vector<64x32xf32> to vector<64x32xbf16>
    %cst_37 = arith.constant dense<0.000000e+00> : vector<64x128xf32>
    %110 = tpu.matmul %109, %108, %cst_37 {dimension_numbers = #tpu.dot_dimension_numbers<[1], [0], [0], [1], [0, 0, 1, 1], [], []>} : vector<64x32xbf16>, vector<32x128xbf16>, vector<64x128xf32> -> vector<64x128xf32>
    %111 = arith.addf %17, %110 : vector<64x128xf32>
    %c0_38 = arith.constant 0 : index
    %c0_39 = arith.constant 0 : index
    %c0_40 = arith.constant 0 : index
    %112 = vector.load %arg9[%c0_38, %c0_39, %c0_40] : memref<2x1x128xf32, #tpu.memory_space<vmem>>, vector<1x1x128xf32>
    %113 = vector.shape_cast %112 : vector<1x1x128xf32> to vector<1x128xf32>
    %114 = vector.broadcast %113 : vector<1x128xf32> to vector<64x128xf32>
    %115 = arith.addf %111, %114 : vector<64x128xf32>
    %c0_41 = arith.constant 0 : index
    %c0_42 = arith.constant 0 : index
    %c0_43 = arith.constant 0 : index
    %116 = vector.load %arg10[%c0_41, %c0_42, %c0_43] : memref<2x1x128xf32, #tpu.memory_space<vmem>>, vector<1x1x128xf32>
    %117 = vector.shape_cast %116 : vector<1x1x128xf32> to vector<1x128xf32>
    %c0_44 = arith.constant 0 : index
    %c0_45 = arith.constant 0 : index
    %c0_46 = arith.constant 0 : index
    %118 = vector.load %arg11[%c0_44, %c0_45, %c0_46] : memref<2x1x128xf32, #tpu.memory_space<vmem>>, vector<1x1x128xf32>
    %119 = vector.shape_cast %118 : vector<1x1x128xf32> to vector<1x128xf32>
    %cst_47 = arith.constant dense<0.000000e+00> : vector<64xf32>
    %120 = vector.multi_reduction <add>, %115, %cst_47 [1] : vector<64x128xf32> to vector<64xf32>
    %121 = vector.shape_cast %120 : vector<64xf32> to vector<64x1xf32>
    %cst_48 = arith.constant 3.125000e-02 : f32
    %122 = vector.broadcast %cst_48 : f32 to vector<64x1xf32>
    %123 = arith.mulf %121, %122 : vector<64x1xf32>
    %124 = arith.mulf %115, %115 : vector<64x128xf32>
    %cst_49 = arith.constant dense<0.000000e+00> : vector<64xf32>
    %125 = vector.multi_reduction <add>, %124, %cst_49 [1] : vector<64x128xf32> to vector<64xf32>
    %126 = vector.shape_cast %125 : vector<64xf32> to vector<64x1xf32>
    %cst_50 = arith.constant 3.125000e-02 : f32
    %127 = vector.broadcast %cst_50 : f32 to vector<64x1xf32>
    %128 = arith.mulf %126, %127 : vector<64x1xf32>
    %129 = arith.mulf %123, %123 : vector<64x1xf32>
    %130 = arith.subf %128, %129 : vector<64x1xf32>
    %cst_51 = arith.constant 9.99999974E-6 : f32
    %131 = vector.broadcast %cst_51 : f32 to vector<64x1xf32>
    %132 = arith.addf %130, %131 : vector<64x1xf32>
    %133 = math.rsqrt %132 : vector<64x1xf32>
    %134 = vector.broadcast %123 : vector<64x1xf32> to vector<64x128xf32>
    %135 = arith.subf %115, %134 : vector<64x128xf32>
    %136 = vector.broadcast %133 : vector<64x1xf32> to vector<64x128xf32>
    %137 = arith.mulf %135, %136 : vector<64x128xf32>
    %138 = vector.broadcast %117 : vector<1x128xf32> to vector<64x128xf32>
    %139 = arith.mulf %137, %138 : vector<64x128xf32>
    %140 = vector.broadcast %119 : vector<1x128xf32> to vector<64x128xf32>
    %141 = arith.addf %139, %140 : vector<64x128xf32>
    %c0_52 = arith.constant 0 : index
    %c0_53 = arith.constant 0 : index
    %c0_54 = arith.constant 0 : index
    %142 = vector.load %arg12[%c0_52, %c0_53, %c0_54] : memref<2x128x128xbf16, #tpu.memory_space<vmem>>, vector<1x128x128xbf16>
    %143 = vector.shape_cast %142 : vector<1x128x128xbf16> to vector<128x128xbf16>
    %144 = arith.truncf %141 : vector<64x128xf32> to vector<64x128xbf16>
    %cst_55 = arith.constant dense<0.000000e+00> : vector<64x128xf32>
    %145 = tpu.matmul %144, %143, %cst_55 {dimension_numbers = #tpu.dot_dimension_numbers<[1], [0], [0], [1], [0, 0, 1, 1], [], []>} : vector<64x128xbf16>, vector<128x128xbf16>, vector<64x128xf32> -> vector<64x128xf32>
    %c0_56 = arith.constant 0 : index
    %c0_57 = arith.constant 0 : index
    %c0_58 = arith.constant 0 : index
    %146 = vector.load %arg13[%c0_56, %c0_57, %c0_58] : memref<2x1x128xf32, #tpu.memory_space<vmem>>, vector<1x1x128xf32>
    %147 = vector.shape_cast %146 : vector<1x1x128xf32> to vector<1x128xf32>
    %148 = vector.broadcast %147 : vector<1x128xf32> to vector<64x128xf32>
    %149 = arith.addf %145, %148 : vector<64x128xf32>
    %cst_59 = arith.constant 5.000000e-01 : f32
    %150 = vector.broadcast %cst_59 : f32 to vector<64x128xf32>
    %151 = arith.mulf %150, %149 : vector<64x128xf32>
    %cst_60 = arith.constant 0.707106769 : f32
    %152 = vector.broadcast %cst_60 : f32 to vector<64x128xf32>
    %153 = arith.mulf %149, %152 : vector<64x128xf32>
    %154 = math.erf %153 : vector<64x128xf32>
    %cst_61 = arith.constant 1.000000e+00 : f32
    %155 = vector.broadcast %cst_61 : f32 to vector<64x128xf32>
    %156 = arith.addf %155, %154 : vector<64x128xf32>
    %157 = arith.mulf %151, %156 : vector<64x128xf32>
    %c0_62 = arith.constant 0 : index
    %c0_63 = arith.constant 0 : index
    %c0_64 = arith.constant 0 : index
    %158 = vector.load %arg14[%c0_62, %c0_63, %c0_64] : memref<2x128x128xbf16, #tpu.memory_space<vmem>>, vector<1x128x128xbf16>
    %159 = vector.shape_cast %158 : vector<1x128x128xbf16> to vector<128x128xbf16>
    %160 = arith.truncf %157 : vector<64x128xf32> to vector<64x128xbf16>
    %cst_65 = arith.constant dense<0.000000e+00> : vector<64x128xf32>
    %161 = tpu.matmul %160, %159, %cst_65 {dimension_numbers = #tpu.dot_dimension_numbers<[1], [0], [0], [1], [0, 0, 1, 1], [], []>} : vector<64x128xbf16>, vector<128x128xbf16>, vector<64x128xf32> -> vector<64x128xf32>
    %162 = arith.addf %115, %161 : vector<64x128xf32>
    %c0_66 = arith.constant 0 : index
    %c0_67 = arith.constant 0 : index
    %c0_68 = arith.constant 0 : index
    %163 = vector.load %arg15[%c0_66, %c0_67, %c0_68] : memref<2x1x128xf32, #tpu.memory_space<vmem>>, vector<1x1x128xf32>
    %164 = vector.shape_cast %163 : vector<1x1x128xf32> to vector<1x128xf32>
    %165 = vector.broadcast %164 : vector<1x128xf32> to vector<64x128xf32>
    %166 = arith.addf %162, %165 : vector<64x128xf32>
    %c1 = arith.constant 1 : index
    %c0_69 = arith.constant 0 : index
    %c0_70 = arith.constant 0 : index
    %167 = vector.load %arg4[%c1, %c0_69, %c0_70] : memref<2x1x128xf32, #tpu.memory_space<vmem>>, vector<1x1x128xf32>
    %168 = vector.shape_cast %167 : vector<1x1x128xf32> to vector<1x128xf32>
    %c1_71 = arith.constant 1 : index
    %c0_72 = arith.constant 0 : index
    %c0_73 = arith.constant 0 : index
    %169 = vector.load %arg5[%c1_71, %c0_72, %c0_73] : memref<2x1x128xf32, #tpu.memory_space<vmem>>, vector<1x1x128xf32>
    %170 = vector.shape_cast %169 : vector<1x1x128xf32> to vector<1x128xf32>
    %cst_74 = arith.constant dense<0.000000e+00> : vector<64xf32>
    %171 = vector.multi_reduction <add>, %166, %cst_74 [1] : vector<64x128xf32> to vector<64xf32>
    %172 = vector.shape_cast %171 : vector<64xf32> to vector<64x1xf32>
    %cst_75 = arith.constant 3.125000e-02 : f32
    %173 = vector.broadcast %cst_75 : f32 to vector<64x1xf32>
    %174 = arith.mulf %172, %173 : vector<64x1xf32>
    %175 = arith.mulf %166, %166 : vector<64x128xf32>
    %cst_76 = arith.constant dense<0.000000e+00> : vector<64xf32>
    %176 = vector.multi_reduction <add>, %175, %cst_76 [1] : vector<64x128xf32> to vector<64xf32>
    %177 = vector.shape_cast %176 : vector<64xf32> to vector<64x1xf32>
    %cst_77 = arith.constant 3.125000e-02 : f32
    %178 = vector.broadcast %cst_77 : f32 to vector<64x1xf32>
    %179 = arith.mulf %177, %178 : vector<64x1xf32>
    %180 = arith.mulf %174, %174 : vector<64x1xf32>
    %181 = arith.subf %179, %180 : vector<64x1xf32>
    %cst_78 = arith.constant 9.99999974E-6 : f32
    %182 = vector.broadcast %cst_78 : f32 to vector<64x1xf32>
    %183 = arith.addf %181, %182 : vector<64x1xf32>
    %184 = math.rsqrt %183 : vector<64x1xf32>
    %185 = vector.broadcast %174 : vector<64x1xf32> to vector<64x128xf32>
    %186 = arith.subf %166, %185 : vector<64x128xf32>
    %187 = vector.broadcast %184 : vector<64x1xf32> to vector<64x128xf32>
    %188 = arith.mulf %186, %187 : vector<64x128xf32>
    %189 = vector.broadcast %168 : vector<1x128xf32> to vector<64x128xf32>
    %190 = arith.mulf %188, %189 : vector<64x128xf32>
    %191 = vector.broadcast %170 : vector<1x128xf32> to vector<64x128xf32>
    %192 = arith.addf %190, %191 : vector<64x128xf32>
    %c1_79 = arith.constant 1 : index
    %c0_80 = arith.constant 0 : index
    %c0_81 = arith.constant 0 : index
    %193 = vector.load %arg6[%c1_79, %c0_80, %c0_81] : memref<2x128x128xbf16, #tpu.memory_space<vmem>>, vector<1x128x128xbf16>
    %194 = vector.shape_cast %193 : vector<1x128x128xbf16> to vector<128x128xbf16>
    %195 = arith.truncf %192 : vector<64x128xf32> to vector<64x128xbf16>
    %cst_82 = arith.constant dense<0.000000e+00> : vector<64x128xf32>
    %196 = tpu.matmul %195, %194, %cst_82 {dimension_numbers = #tpu.dot_dimension_numbers<[1], [0], [0], [1], [0, 0, 1, 1], [], []>} : vector<64x128xbf16>, vector<128x128xbf16>, vector<64x128xf32> -> vector<64x128xf32>
    %c1_83 = arith.constant 1 : index
    %c0_84 = arith.constant 0 : index
    %c0_85 = arith.constant 0 : index
    %197 = vector.load %arg7[%c1_83, %c0_84, %c0_85] : memref<2x1x128xf32, #tpu.memory_space<vmem>>, vector<1x1x128xf32>
    %198 = vector.shape_cast %197 : vector<1x1x128xf32> to vector<1x128xf32>
    %199 = vector.broadcast %198 : vector<1x128xf32> to vector<64x128xf32>
    %200 = arith.addf %196, %199 : vector<64x128xf32>
    %201 = vector.extract_strided_slice %200 {offsets = [0, 0], sizes = [64, 16], strides = [1, 1]} : vector<64x128xf32> to vector<64x16xf32>
    %202 = vector.shape_cast %201 : vector<64x16xf32> to vector<2x32x16xf32>
    %203 = arith.truncf %202 : vector<2x32x16xf32> to vector<2x32x16xbf16>
    %204 = vector.extract_strided_slice %200 {offsets = [0, 32], sizes = [64, 16], strides = [1, 1]} : vector<64x128xf32> to vector<64x16xf32>
    %205 = vector.shape_cast %204 : vector<64x16xf32> to vector<2x32x16xf32>
    %206 = arith.truncf %205 : vector<2x32x16xf32> to vector<2x32x16xbf16>
    %207 = vector.extract_strided_slice %200 {offsets = [0, 64], sizes = [64, 16], strides = [1, 1]} : vector<64x128xf32> to vector<64x16xf32>
    %208 = vector.shape_cast %207 : vector<64x16xf32> to vector<2x32x16xf32>
    %209 = arith.truncf %208 : vector<2x32x16xf32> to vector<2x32x16xbf16>
    "tpu.trace_start"() <{level = 10 : i32, message = "bqd,bkd->bqk"}> : () -> ()
    %cst_86 = arith.constant dense<0.000000e+00> : vector<2x32x32xf32>
    %210 = tpu.matmul %203, %206, %cst_86 {dimension_numbers = #tpu.dot_dimension_numbers<[2], [2], [1], [1], [0, 0, 0, 1, 1, 1], [0], [0]>} : vector<2x32x16xbf16>, vector<2x32x16xbf16>, vector<2x32x32xf32> -> vector<2x32x32xf32>
    %cst_87 = arith.constant -1.000000e+30 : f32
    "tpu.trace_stop"() : () -> ()
    %211 = vector.shape_cast %2 : vector<1x1x32xi1> to vector<1x1x32xi1>
    %212 = vector.broadcast %211 : vector<1x1x32xi1> to vector<2x32x32xi1>
    %213 = vector.broadcast %cst_87 : f32 to vector<2x32x32xf32>
    %214 = arith.select %212, %210, %213 : vector<2x32x32xi1>, vector<2x32x32xf32>
    %cst_88 = arith.constant dense<0xFF800000> : vector<2x32xf32>
    %215 = vector.multi_reduction <maximumf>, %214, %cst_88 [2] : vector<2x32x32xf32> to vector<2x32xf32>
    %216 = vector.shape_cast %215 : vector<2x32xf32> to vector<2x32x1xf32>
    %217 = vector.broadcast %216 : vector<2x32x1xf32> to vector<2x32x32xf32>
    %218 = arith.subf %214, %217 : vector<2x32x32xf32>
    %219 = math.exp %218 : vector<2x32x32xf32>
    %cst_89 = arith.constant dense<0.000000e+00> : vector<2x32xf32>
    %220 = vector.multi_reduction <add>, %219, %cst_89 [2] : vector<2x32x32xf32> to vector<2x32xf32>
    %221 = vector.shape_cast %220 : vector<2x32xf32> to vector<2x32x1xf32>
    %222 = tpu.reciprocal %221 {approx = true} : vector<2x32x1xf32> -> vector<2x32x1xf32>
    %223 = vector.broadcast %222 : vector<2x32x1xf32> to vector<2x32x32xf32>
    %224 = arith.mulf %219, %223 : vector<2x32x32xf32>
    %225 = arith.truncf %224 : vector<2x32x32xf32> to vector<2x32x32xbf16>
    "tpu.trace_start"() <{level = 10 : i32, message = "bqk,bkd->bqd"}> : () -> ()
    %cst_90 = arith.constant dense<0.000000e+00> : vector<2x32x16xf32>
    %226 = tpu.matmul %225, %209, %cst_90 {dimension_numbers = #tpu.dot_dimension_numbers<[2], [1], [1], [2], [0, 0, 0, 1, 1, 2], [0], [0]>} : vector<2x32x32xbf16>, vector<2x32x16xbf16>, vector<2x32x16xf32> -> vector<2x32x16xf32>
    "tpu.trace_stop"() : () -> ()
    %227 = vector.shape_cast %226 : vector<2x32x16xf32> to vector<64x16xf32>
    %228 = vector.extract_strided_slice %200 {offsets = [0, 16], sizes = [64, 16], strides = [1, 1]} : vector<64x128xf32> to vector<64x16xf32>
    %229 = vector.shape_cast %228 : vector<64x16xf32> to vector<2x32x16xf32>
    %230 = arith.truncf %229 : vector<2x32x16xf32> to vector<2x32x16xbf16>
    %231 = vector.extract_strided_slice %200 {offsets = [0, 48], sizes = [64, 16], strides = [1, 1]} : vector<64x128xf32> to vector<64x16xf32>
    %232 = vector.shape_cast %231 : vector<64x16xf32> to vector<2x32x16xf32>
    %233 = arith.truncf %232 : vector<2x32x16xf32> to vector<2x32x16xbf16>
    %234 = vector.extract_strided_slice %200 {offsets = [0, 80], sizes = [64, 16], strides = [1, 1]} : vector<64x128xf32> to vector<64x16xf32>
    %235 = vector.shape_cast %234 : vector<64x16xf32> to vector<2x32x16xf32>
    %236 = arith.truncf %235 : vector<2x32x16xf32> to vector<2x32x16xbf16>
    "tpu.trace_start"() <{level = 10 : i32, message = "bqd,bkd->bqk"}> : () -> ()
    %cst_91 = arith.constant dense<0.000000e+00> : vector<2x32x32xf32>
    %237 = tpu.matmul %230, %233, %cst_91 {dimension_numbers = #tpu.dot_dimension_numbers<[2], [2], [1], [1], [0, 0, 0, 1, 1, 1], [0], [0]>} : vector<2x32x16xbf16>, vector<2x32x16xbf16>, vector<2x32x32xf32> -> vector<2x32x32xf32>
    %cst_92 = arith.constant -1.000000e+30 : f32
    "tpu.trace_stop"() : () -> ()
    %238 = vector.shape_cast %2 : vector<1x1x32xi1> to vector<1x1x32xi1>
    %239 = vector.broadcast %238 : vector<1x1x32xi1> to vector<2x32x32xi1>
    %240 = vector.broadcast %cst_92 : f32 to vector<2x32x32xf32>
    %241 = arith.select %239, %237, %240 : vector<2x32x32xi1>, vector<2x32x32xf32>
    %cst_93 = arith.constant dense<0xFF800000> : vector<2x32xf32>
    %242 = vector.multi_reduction <maximumf>, %241, %cst_93 [2] : vector<2x32x32xf32> to vector<2x32xf32>
    %243 = vector.shape_cast %242 : vector<2x32xf32> to vector<2x32x1xf32>
    %244 = vector.broadcast %243 : vector<2x32x1xf32> to vector<2x32x32xf32>
    %245 = arith.subf %241, %244 : vector<2x32x32xf32>
    %246 = math.exp %245 : vector<2x32x32xf32>
    %cst_94 = arith.constant dense<0.000000e+00> : vector<2x32xf32>
    %247 = vector.multi_reduction <add>, %246, %cst_94 [2] : vector<2x32x32xf32> to vector<2x32xf32>
    %248 = vector.shape_cast %247 : vector<2x32xf32> to vector<2x32x1xf32>
    %249 = tpu.reciprocal %248 {approx = true} : vector<2x32x1xf32> -> vector<2x32x1xf32>
    %250 = vector.broadcast %249 : vector<2x32x1xf32> to vector<2x32x32xf32>
    %251 = arith.mulf %246, %250 : vector<2x32x32xf32>
    %252 = arith.truncf %251 : vector<2x32x32xf32> to vector<2x32x32xbf16>
    "tpu.trace_start"() <{level = 10 : i32, message = "bqk,bkd->bqd"}> : () -> ()
    %cst_95 = arith.constant dense<0.000000e+00> : vector<2x32x16xf32>
    %253 = tpu.matmul %252, %236, %cst_95 {dimension_numbers = #tpu.dot_dimension_numbers<[2], [1], [1], [2], [0, 0, 0, 1, 1, 2], [0], [0]>} : vector<2x32x32xbf16>, vector<2x32x16xbf16>, vector<2x32x16xf32> -> vector<2x32x16xf32>
    "tpu.trace_stop"() : () -> ()
    %254 = vector.shape_cast %253 : vector<2x32x16xf32> to vector<64x16xf32>
    %255 = tpu.concatenate %227, %254 in 1 : vector<64x16xf32>, vector<64x16xf32> -> vector<64x32xf32>
    %c1_96 = arith.constant 1 : index
    %c0_97 = arith.constant 0 : index
    %c0_98 = arith.constant 0 : index
    %256 = vector.load %arg8[%c1_96, %c0_97, %c0_98] : memref<2x32x128xbf16, #tpu.memory_space<vmem>>, vector<1x32x128xbf16>
    %257 = vector.shape_cast %256 : vector<1x32x128xbf16> to vector<32x128xbf16>
    %258 = arith.truncf %255 : vector<64x32xf32> to vector<64x32xbf16>
    %cst_99 = arith.constant dense<0.000000e+00> : vector<64x128xf32>
    %259 = tpu.matmul %258, %257, %cst_99 {dimension_numbers = #tpu.dot_dimension_numbers<[1], [0], [0], [1], [0, 0, 1, 1], [], []>} : vector<64x32xbf16>, vector<32x128xbf16>, vector<64x128xf32> -> vector<64x128xf32>
    %260 = arith.addf %166, %259 : vector<64x128xf32>
    %c1_100 = arith.constant 1 : index
    %c0_101 = arith.constant 0 : index
    %c0_102 = arith.constant 0 : index
    %261 = vector.load %arg9[%c1_100, %c0_101, %c0_102] : memref<2x1x128xf32, #tpu.memory_space<vmem>>, vector<1x1x128xf32>
    %262 = vector.shape_cast %261 : vector<1x1x128xf32> to vector<1x128xf32>
    %263 = vector.broadcast %262 : vector<1x128xf32> to vector<64x128xf32>
    %264 = arith.addf %260, %263 : vector<64x128xf32>
    %c1_103 = arith.constant 1 : index
    %c0_104 = arith.constant 0 : index
    %c0_105 = arith.constant 0 : index
    %265 = vector.load %arg10[%c1_103, %c0_104, %c0_105] : memref<2x1x128xf32, #tpu.memory_space<vmem>>, vector<1x1x128xf32>
    %266 = vector.shape_cast %265 : vector<1x1x128xf32> to vector<1x128xf32>
    %c1_106 = arith.constant 1 : index
    %c0_107 = arith.constant 0 : index
    %c0_108 = arith.constant 0 : index
    %267 = vector.load %arg11[%c1_106, %c0_107, %c0_108] : memref<2x1x128xf32, #tpu.memory_space<vmem>>, vector<1x1x128xf32>
    %268 = vector.shape_cast %267 : vector<1x1x128xf32> to vector<1x128xf32>
    %cst_109 = arith.constant dense<0.000000e+00> : vector<64xf32>
    %269 = vector.multi_reduction <add>, %264, %cst_109 [1] : vector<64x128xf32> to vector<64xf32>
    %270 = vector.shape_cast %269 : vector<64xf32> to vector<64x1xf32>
    %cst_110 = arith.constant 3.125000e-02 : f32
    %271 = vector.broadcast %cst_110 : f32 to vector<64x1xf32>
    %272 = arith.mulf %270, %271 : vector<64x1xf32>
    %273 = arith.mulf %264, %264 : vector<64x128xf32>
    %cst_111 = arith.constant dense<0.000000e+00> : vector<64xf32>
    %274 = vector.multi_reduction <add>, %273, %cst_111 [1] : vector<64x128xf32> to vector<64xf32>
    %275 = vector.shape_cast %274 : vector<64xf32> to vector<64x1xf32>
    %cst_112 = arith.constant 3.125000e-02 : f32
    %276 = vector.broadcast %cst_112 : f32 to vector<64x1xf32>
    %277 = arith.mulf %275, %276 : vector<64x1xf32>
    %278 = arith.mulf %272, %272 : vector<64x1xf32>
    %279 = arith.subf %277, %278 : vector<64x1xf32>
    %cst_113 = arith.constant 9.99999974E-6 : f32
    %280 = vector.broadcast %cst_113 : f32 to vector<64x1xf32>
    %281 = arith.addf %279, %280 : vector<64x1xf32>
    %282 = math.rsqrt %281 : vector<64x1xf32>
    %283 = vector.broadcast %272 : vector<64x1xf32> to vector<64x128xf32>
    %284 = arith.subf %264, %283 : vector<64x128xf32>
    %285 = vector.broadcast %282 : vector<64x1xf32> to vector<64x128xf32>
    %286 = arith.mulf %284, %285 : vector<64x128xf32>
    %287 = vector.broadcast %266 : vector<1x128xf32> to vector<64x128xf32>
    %288 = arith.mulf %286, %287 : vector<64x128xf32>
    %289 = vector.broadcast %268 : vector<1x128xf32> to vector<64x128xf32>
    %290 = arith.addf %288, %289 : vector<64x128xf32>
    %c1_114 = arith.constant 1 : index
    %c0_115 = arith.constant 0 : index
    %c0_116 = arith.constant 0 : index
    %291 = vector.load %arg12[%c1_114, %c0_115, %c0_116] : memref<2x128x128xbf16, #tpu.memory_space<vmem>>, vector<1x128x128xbf16>
    %292 = vector.shape_cast %291 : vector<1x128x128xbf16> to vector<128x128xbf16>
    %293 = arith.truncf %290 : vector<64x128xf32> to vector<64x128xbf16>
    %cst_117 = arith.constant dense<0.000000e+00> : vector<64x128xf32>
    %294 = tpu.matmul %293, %292, %cst_117 {dimension_numbers = #tpu.dot_dimension_numbers<[1], [0], [0], [1], [0, 0, 1, 1], [], []>} : vector<64x128xbf16>, vector<128x128xbf16>, vector<64x128xf32> -> vector<64x128xf32>
    %c1_118 = arith.constant 1 : index
    %c0_119 = arith.constant 0 : index
    %c0_120 = arith.constant 0 : index
    %295 = vector.load %arg13[%c1_118, %c0_119, %c0_120] : memref<2x1x128xf32, #tpu.memory_space<vmem>>, vector<1x1x128xf32>
    %296 = vector.shape_cast %295 : vector<1x1x128xf32> to vector<1x128xf32>
    %297 = vector.broadcast %296 : vector<1x128xf32> to vector<64x128xf32>
    %298 = arith.addf %294, %297 : vector<64x128xf32>
    %cst_121 = arith.constant 5.000000e-01 : f32
    %299 = vector.broadcast %cst_121 : f32 to vector<64x128xf32>
    %300 = arith.mulf %299, %298 : vector<64x128xf32>
    %cst_122 = arith.constant 0.707106769 : f32
    %301 = vector.broadcast %cst_122 : f32 to vector<64x128xf32>
    %302 = arith.mulf %298, %301 : vector<64x128xf32>
    %303 = math.erf %302 : vector<64x128xf32>
    %cst_123 = arith.constant 1.000000e+00 : f32
    %304 = vector.broadcast %cst_123 : f32 to vector<64x128xf32>
    %305 = arith.addf %304, %303 : vector<64x128xf32>
    %306 = arith.mulf %300, %305 : vector<64x128xf32>
    %c1_124 = arith.constant 1 : index
    %c0_125 = arith.constant 0 : index
    %c0_126 = arith.constant 0 : index
    %307 = vector.load %arg14[%c1_124, %c0_125, %c0_126] : memref<2x128x128xbf16, #tpu.memory_space<vmem>>, vector<1x128x128xbf16>
    %308 = vector.shape_cast %307 : vector<1x128x128xbf16> to vector<128x128xbf16>
    %309 = arith.truncf %306 : vector<64x128xf32> to vector<64x128xbf16>
    %cst_127 = arith.constant dense<0.000000e+00> : vector<64x128xf32>
    %310 = tpu.matmul %309, %308, %cst_127 {dimension_numbers = #tpu.dot_dimension_numbers<[1], [0], [0], [1], [0, 0, 1, 1], [], []>} : vector<64x128xbf16>, vector<128x128xbf16>, vector<64x128xf32> -> vector<64x128xf32>
    %311 = arith.addf %264, %310 : vector<64x128xf32>
    %c1_128 = arith.constant 1 : index
    %c0_129 = arith.constant 0 : index
    %c0_130 = arith.constant 0 : index
    %312 = vector.load %arg15[%c1_128, %c0_129, %c0_130] : memref<2x1x128xf32, #tpu.memory_space<vmem>>, vector<1x1x128xf32>
    %313 = vector.shape_cast %312 : vector<1x1x128xf32> to vector<1x128xf32>
    %314 = vector.broadcast %313 : vector<1x128xf32> to vector<64x128xf32>
    %315 = arith.addf %311, %314 : vector<64x128xf32>
    %316 = vector.shape_cast %315 : vector<64x128xf32> to vector<2x32x128xf32>
    %317 = vector.broadcast %7 : vector<1x32x1xf32> to vector<2x32x128xf32>
    %318 = arith.mulf %316, %317 : vector<2x32x128xf32>
    %cst_131 = arith.constant dense<0.000000e+00> : vector<2x128xf32>
    %319 = vector.multi_reduction <add>, %318, %cst_131 [1] : vector<2x32x128xf32> to vector<2x128xf32>
    %c0_132 = arith.constant 0 : index
    %c0_133 = arith.constant 0 : index
    %320 = vector.load %arg16[%c0_132, %c0_133] : memref<1x128xf32, #tpu.memory_space<vmem>>, vector<1x128xf32>
    %c0_134 = arith.constant 0 : index
    %c0_135 = arith.constant 0 : index
    %321 = vector.load %arg17[%c0_134, %c0_135] : memref<1x128xf32, #tpu.memory_space<vmem>>, vector<1x128xf32>
    %cst_136 = arith.constant dense<0.000000e+00> : vector<2xf32>
    %322 = vector.multi_reduction <add>, %319, %cst_136 [1] : vector<2x128xf32> to vector<2xf32>
    %323 = vector.shape_cast %322 : vector<2xf32> to vector<2x1xf32>
    %cst_137 = arith.constant 3.125000e-02 : f32
    %324 = vector.broadcast %cst_137 : f32 to vector<2x1xf32>
    %325 = arith.mulf %323, %324 : vector<2x1xf32>
    %326 = arith.mulf %319, %319 : vector<2x128xf32>
    %cst_138 = arith.constant dense<0.000000e+00> : vector<2xf32>
    %327 = vector.multi_reduction <add>, %326, %cst_138 [1] : vector<2x128xf32> to vector<2xf32>
    %328 = vector.shape_cast %327 : vector<2xf32> to vector<2x1xf32>
    %cst_139 = arith.constant 3.125000e-02 : f32
    %329 = vector.broadcast %cst_139 : f32 to vector<2x1xf32>
    %330 = arith.mulf %328, %329 : vector<2x1xf32>
    %331 = arith.mulf %325, %325 : vector<2x1xf32>
    %332 = arith.subf %330, %331 : vector<2x1xf32>
    %cst_140 = arith.constant 9.99999974E-6 : f32
    %333 = vector.broadcast %cst_140 : f32 to vector<2x1xf32>
    %334 = arith.addf %332, %333 : vector<2x1xf32>
    %335 = math.rsqrt %334 : vector<2x1xf32>
    %336 = vector.broadcast %325 : vector<2x1xf32> to vector<2x128xf32>
    %337 = arith.subf %319, %336 : vector<2x128xf32>
    %338 = vector.broadcast %335 : vector<2x1xf32> to vector<2x128xf32>
    %339 = arith.mulf %337, %338 : vector<2x128xf32>
    %340 = vector.broadcast %320 : vector<1x128xf32> to vector<2x128xf32>
    %341 = arith.mulf %339, %340 : vector<2x128xf32>
    %342 = vector.broadcast %321 : vector<1x128xf32> to vector<2x128xf32>
    %343 = arith.addf %341, %342 : vector<2x128xf32>
    %c0_141 = arith.constant 0 : index
    %c0_142 = arith.constant 0 : index
    %344 = vector.load %arg18[%c0_141, %c0_142] : memref<128x128xbf16, #tpu.memory_space<vmem>>, vector<128x128xbf16>
    %345 = arith.truncf %343 : vector<2x128xf32> to vector<2x128xbf16>
    %cst_143 = arith.constant dense<0.000000e+00> : vector<2x128xf32>
    %346 = tpu.matmul %345, %344, %cst_143 {dimension_numbers = #tpu.dot_dimension_numbers<[1], [0], [0], [1], [0, 0, 1, 1], [], []>} : vector<2x128xbf16>, vector<128x128xbf16>, vector<2x128xf32> -> vector<2x128xf32>
    %c0_144 = arith.constant 0 : index
    %c0_145 = arith.constant 0 : index
    %347 = vector.load %arg19[%c0_144, %c0_145] : memref<1x128xf32, #tpu.memory_space<vmem>>, vector<1x128xf32>
    %348 = vector.broadcast %347 : vector<1x128xf32> to vector<2x128xf32>
    %349 = arith.addf %346, %348 : vector<2x128xf32>
    %c0_146 = arith.constant 0 : index
    %c0_147 = arith.constant 0 : index
    %350 = vector.load %arg20[%c0_146, %c0_147] : memref<2x128xf32, #tpu.memory_space<vmem>>, vector<2x128xf32>
    tpu.vector_store %arg20[%c0_146, %c0_147], %349 {strides = array<i32>} : memref<2x128xf32, #tpu.memory_space<vmem>>, vector<2x128xf32>,
    return
  }
  func.func @transform_0(%arg0: i32) -> (i32, i32, i32) {
    %c0_i32 = arith.constant 0 : i32
    %c0_i32_0 = arith.constant 0 : i32
    %c0_i32_1 = arith.constant 0 : i32
    return %arg0, %c0_i32, %c0_i32_0 : i32, i32, i32
  }
  func.func @transform_1(%arg0: i32) -> (i32, i32) {
    %c0_i32 = arith.constant 0 : i32
    %c0_i32_0 = arith.constant 0 : i32
    %c0_i32_1 = arith.constant 0 : i32
    return %c0_i32, %c0_i32_0 : i32, i32
  }
  func.func @transform_2(%arg0: i32) -> (i32, i32) {
    %c0_i32 = arith.constant 0 : i32
    %c0_i32_0 = arith.constant 0 : i32
    %c0_i32_1 = arith.constant 0 : i32
    return %c0_i32, %c0_i32_0 : i32, i32
  }
  func.func @transform_3(%arg0: i32) -> (i32, i32, i32) {
    %c0_i32 = arith.constant 0 : i32
    %c0_i32_0 = arith.constant 0 : i32
    %c0_i32_1 = arith.constant 0 : i32
    %c0_i32_2 = arith.constant 0 : i32
    return %c0_i32, %c0_i32_0, %c0_i32_1 : i32, i32, i32
  }
  func.func @transform_4(%arg0: i32) -> (i32, i32, i32) {
    %c0_i32 = arith.constant 0 : i32
    %c0_i32_0 = arith.constant 0 : i32
    %c0_i32_1 = arith.constant 0 : i32
    %c0_i32_2 = arith.constant 0 : i32
    return %c0_i32, %c0_i32_0, %c0_i32_1 : i32, i32, i32
  }
  func.func @transform_5(%arg0: i32) -> (i32, i32, i32) {
    %c0_i32 = arith.constant 0 : i32
    %c0_i32_0 = arith.constant 0 : i32
    %c0_i32_1 = arith.constant 0 : i32
    %c0_i32_2 = arith.constant 0 : i32
    return %c0_i32, %c0_i32_0, %c0_i32_1 : i32, i32, i32
  }
  func.func @transform_6(%arg0: i32) -> (i32, i32, i32) {
    %c0_i32 = arith.constant 0 : i32
    %c0_i32_0 = arith.constant 0 : i32
    %c0_i32_1 = arith.constant 0 : i32
    %c0_i32_2 = arith.constant 0 : i32
    return %c0_i32, %c0_i32_0, %c0_i32_1 : i32, i32, i32
  }
  func.func @transform_7(%arg0: i32) -> (i32, i32, i32) {
    %c0_i32 = arith.constant 0 : i32
    %c0_i32_0 = arith.constant 0 : i32
    %c0_i32_1 = arith.constant 0 : i32
    %c0_i32_2 = arith.constant 0 : i32
    return %c0_i32, %c0_i32_0, %c0_i32_1 : i32, i32, i32
  }
  func.func @transform_8(%arg0: i32) -> (i32, i32, i32) {
    %c0_i32 = arith.constant 0 : i32
    %c0_i32_0 = arith.constant 0 : i32
    %c0_i32_1 = arith.constant 0 : i32
    %c0_i32_2 = arith.constant 0 : i32
    return %c0_i32, %c0_i32_0, %c0_i32_1 : i32, i32, i32
  }
  func.func @transform_9(%arg0: i32) -> (i32, i32, i32) {
    %c0_i32 = arith.constant 0 : i32
    %c0_i32_0 = arith.constant 0 : i32
    %c0_i32_1 = arith.constant 0 : i32
    %c0_i32_2 = arith.constant 0 : i32
    return %c0_i32, %c0_i32_0, %c0_i32_1 : i32, i32, i32
  }
  func.func @transform_10(%arg0: i32) -> (i32, i32, i32) {
    %c0_i32 = arith.constant 0 : i32
    %c0_i32_0 = arith.constant 0 : i32
    %c0_i32_1 = arith.constant 0 : i32
    %c0_i32_2 = arith.constant 0 : i32
    return %c0_i32, %c0_i32_0, %c0_i32_1 : i32, i32, i32
  }
  func.func @transform_11(%arg0: i32) -> (i32, i32, i32) {
    %c0_i32 = arith.constant 0 : i32
    %c0_i32_0 = arith.constant 0 : i32
    %c0_i32_1 = arith.constant 0 : i32
    %c0_i32_2 = arith.constant 0 : i32
    return %c0_i32, %c0_i32_0, %c0_i32_1 : i32, i32, i32
  }
  func.func @transform_12(%arg0: i32) -> (i32, i32, i32) {
    %c0_i32 = arith.constant 0 : i32
    %c0_i32_0 = arith.constant 0 : i32
    %c0_i32_1 = arith.constant 0 : i32
    %c0_i32_2 = arith.constant 0 : i32
    return %c0_i32, %c0_i32_0, %c0_i32_1 : i32, i32, i32
  }
  func.func @transform_13(%arg0: i32) -> (i32, i32, i32) {
    %c0_i32 = arith.constant 0 : i32
    %c0_i32_0 = arith.constant 0 : i32
    %c0_i32_1 = arith.constant 0 : i32
    %c0_i32_2 = arith.constant 0 : i32
    return %c0_i32, %c0_i32_0, %c0_i32_1 : i32, i32, i32
  }
  func.func @transform_14(%arg0: i32) -> (i32, i32, i32) {
    %c0_i32 = arith.constant 0 : i32
    %c0_i32_0 = arith.constant 0 : i32
    %c0_i32_1 = arith.constant 0 : i32
    %c0_i32_2 = arith.constant 0 : i32
    return %c0_i32, %c0_i32_0, %c0_i32_1 : i32, i32, i32
  }
  func.func @transform_15(%arg0: i32) -> (i32, i32) {
    %c0_i32 = arith.constant 0 : i32
    %c0_i32_0 = arith.constant 0 : i32
    %c0_i32_1 = arith.constant 0 : i32
    return %c0_i32, %c0_i32_0 : i32, i32
  }
  func.func @transform_16(%arg0: i32) -> (i32, i32) {
    %c0_i32 = arith.constant 0 : i32
    %c0_i32_0 = arith.constant 0 : i32
    %c0_i32_1 = arith.constant 0 : i32
    return %c0_i32, %c0_i32_0 : i32, i32
  }
  func.func @transform_17(%arg0: i32) -> (i32, i32) {
    %c0_i32 = arith.constant 0 : i32
    %c0_i32_0 = arith.constant 0 : i32
    %c0_i32_1 = arith.constant 0 : i32
    return %c0_i32, %c0_i32_0 : i32, i32
  }
  func.func @transform_18(%arg0: i32) -> (i32, i32) {
    %c0_i32 = arith.constant 0 : i32
    %c0_i32_0 = arith.constant 0 : i32
    %c0_i32_1 = arith.constant 0 : i32
    return %c0_i32, %c0_i32_0 : i32, i32
  }
  func.func @transform_19(%arg0: i32) -> (i32, i32) {
    %c0_i32 = arith.constant 0 : i32
    %c0_i32_0 = arith.constant 0 : i32
    return %arg0, %c0_i32 : i32, i32
  }
}

</mosaic_0001>

<llo_original>
// kernel: vit_forward.1
$region0: #{vit_forward.1}
  #allocation0 [shape = 'u32[]', space=smem, size = 0x4, offset = 0x4, fixed_abs, tag = 'smem constant byte address 0x4 - core index']
  #allocation1 [shape = 'u32[144,128]{1,0:T(1,128)}', space=vmem, size = 0x12000, scoped, tag = 'internal scratch']
  %s0 = inlined_call_operand.vmem [shape: bf16[2,32,128], index: 0, kind: input, shape index: {}]
  %s1 = inlined_call_operand.vmem [shape: bf16[128,128], index: 1, kind: input, shape index: {}]
  %s2 = inlined_call_operand.vmem [shape: f32[32,128], index: 2, kind: input, shape index: {}]
  %s3 = inlined_call_operand.vmem [shape: f32[2,1,128], index: 3, kind: input, shape index: {}]
  %s4 = inlined_call_operand.vmem [shape: f32[2,1,128], index: 4, kind: input, shape index: {}]
  %s5 = inlined_call_operand.vmem [shape: bf16[2,128,128], index: 5, kind: input, shape index: {}]
  %s6 = inlined_call_operand.vmem [shape: f32[2,1,128], index: 6, kind: input, shape index: {}]
  %s7 = inlined_call_operand.vmem [shape: bf16[2,32,128], index: 7, kind: input, shape index: {}]
  %s8 = inlined_call_operand.vmem [shape: f32[2,1,128], index: 8, kind: input, shape index: {}]
  %s9 = inlined_call_operand.vmem [shape: f32[2,1,128], index: 9, kind: input, shape index: {}]
  %s10 = inlined_call_operand.vmem [shape: f32[2,1,128], index: 10, kind: input, shape index: {}]
  %s11 = inlined_call_operand.vmem [shape: bf16[2,128,128], index: 11, kind: input, shape index: {}]
  %s12 = inlined_call_operand.vmem [shape: f32[2,1,128], index: 12, kind: input, shape index: {}]
  %s13 = inlined_call_operand.vmem [shape: bf16[2,128,128], index: 13, kind: input, shape index: {}]
  %s14 = inlined_call_operand.vmem [shape: f32[2,1,128], index: 14, kind: input, shape index: {}]
  %s15 = inlined_call_operand.vmem [shape: f32[1,128], index: 15, kind: input, shape index: {}]
  %s16 = inlined_call_operand.vmem [shape: f32[1,128], index: 16, kind: input, shape index: {}]
  %s17 = inlined_call_operand.vmem [shape: bf16[128,128], index: 17, kind: input, shape index: {}]
  %s18 = inlined_call_operand.vmem [shape: f32[1,128], index: 18, kind: input, shape index: {}]
  %s19 = inlined_call_operand.hbm [shape: f32[2,128], index: 19, kind: output, shape index: {}]
  %s20 = sld [smem:[#allocation0]]
  $region86: #{vit_forward.1} parent=0
    _
  %s22 = ssub.s32 1, %s20
  %s23 = scalar_select 0, %s22, %s20
  $region1: #{vit_forward.1} parent=0
    #allocation2 [shape = 'u8[1024]{0}', space=vmem, size = 0x400, scoped, tag = 'output window, operand 0, single buffered']
    #allocation3 [shape = 's32[1]{0}', space=sflag, size = 0x4, scoped, tag = 'scoped memory for vit_forward.1']
    %24 = vsyncpa [#allocation3], 0
    // Predicated region
    $region2: #{vit_forward.1} parent=1 // pred_check
      _
    $region3: #{vit_forward.1} parent=1 // pred_check_branch
      %26 = sbr.rel (0) target = $region5
    $region4: #{vit_forward.1} parent=1 // pred_region
      _
    $region5: #{vit_forward.1} parent=1 // pred_fallthru
      _
    // Predicated region
    $region6: #{vit_forward.1} parent=1 // pred_check
      _
    $region7: #{vit_forward.1} parent=1 // pred_check_branch
      %28 = sbr.rel (0) target = $region9
    $region8: #{vit_forward.1} parent=1 // pred_region
      _
    $region9: #{vit_forward.1} parent=1 // pred_fallthru
      _
    // Predicated region
    $region10: #{vit_forward.1} parent=1 // pred_check
      _
    $region11: #{vit_forward.1} parent=1 // pred_check_branch
      %30 = sbr.rel (0) target = $region13
    $region12: #{vit_forward.1} parent=1 // pred_region
      _
    $region13: #{vit_forward.1} parent=1 // pred_fallthru
      _
    // Predicated region
    $region14: #{vit_forward.1} parent=1 // pred_check
      _
    $region15: #{vit_forward.1} parent=1 // pred_check_branch
      %32 = sbr.rel (0) target = $region17
    $region16: #{vit_forward.1} parent=1 // pred_region
      _
    $region17: #{vit_forward.1} parent=1 // pred_fallthru
      _
    // Predicated region
    $region18: #{vit_forward.1} parent=1 // pred_check
      _
    $region19: #{vit_forward.1} parent=1 // pred_check_branch
      %34 = sbr.rel (0) target = $region21
    $region20: #{vit_forward.1} parent=1 // pred_region
      _
    $region21: #{vit_forward.1} parent=1 // pred_fallthru
      _
    // Predicated region
    $region22: #{vit_forward.1} parent=1 // pred_check
      _
    $region23: #{vit_forward.1} parent=1 // pred_check_branch
      %36 = sbr.rel (0) target = $region25
    $region24: #{vit_forward.1} parent=1 // pred_region
      _
    $region25: #{vit_forward.1} parent=1 // pred_fallthru
      _
    // Predicated region
    $region26: #{vit_forward.1} parent=1 // pred_check
      _
    $region27: #{vit_forward.1} parent=1 // pred_check_branch
      %38 = sbr.rel (0) target = $region29
    $region28: #{vit_forward.1} parent=1 // pred_region
      _
    $region29: #{vit_forward.1} parent=1 // pred_fallthru
      _
    // Predicated region
    $region30: #{vit_forward.1} parent=1 // pred_check
      _
    $region31: #{vit_forward.1} parent=1 // pred_check_branch
      %40 = sbr.rel (0) target = $region33
    $region32: #{vit_forward.1} parent=1 // pred_region
      _
    $region33: #{vit_forward.1} parent=1 // pred_fallthru
      _
    // Predicated region
    $region34: #{vit_forward.1} parent=1 // pred_check
      _
    $region35: #{vit_forward.1} parent=1 // pred_check_branch
      %42 = sbr.rel (0) target = $region37
    $region36: #{vit_forward.1} parent=1 // pred_region
      _
    $region37: #{vit_forward.1} parent=1 // pred_fallthru
      _
    // Predicated region
    $region38: #{vit_forward.1} parent=1 // pred_check
      _
    $region39: #{vit_forward.1} parent=1 // pred_check_branch
      %44 = sbr.rel (0) target = $region41
    $region40: #{vit_forward.1} parent=1 // pred_region
      _
    $region41: #{vit_forward.1} parent=1 // pred_fallthru
      _
    // Predicated region
    $region42: #{vit_forward.1} parent=1 // pred_check
      _
    $region43: #{vit_forward.1} parent=1 // pred_check_branch
      %46 = sbr.rel (0) target = $region45
    $region44: #{vit_forward.1} parent=1 // pred_region
      _
    $region45: #{vit_forward.1} parent=1 // pred_fallthru
      _
    // Predicated region
    $region46: #{vit_forward.1} parent=1 // pred_check
      _
    $region47: #{vit_forward.1} parent=1 // pred_check_branch
      %48 = sbr.rel (0) target = $region49
    $region48: #{vit_forward.1} parent=1 // pred_region
      _
    $region49: #{vit_forward.1} parent=1 // pred_fallthru
      _
    // Predicated region
    $region50: #{vit_forward.1} parent=1 // pred_check
      _
    $region51: #{vit_forward.1} parent=1 // pred_check_branch
      %50 = sbr.rel (0) target = $region53
    $region52: #{vit_forward.1} parent=1 // pred_region
      _
    $region53: #{vit_forward.1} parent=1 // pred_fallthru
      _
    // Predicated region
    $region54: #{vit_forward.1} parent=1 // pred_check
      _
    $region55: #{vit_forward.1} parent=1 // pred_check_branch
      %52 = sbr.rel (0) target = $region57
    $region56: #{vit_forward.1} parent=1 // pred_region
      _
    $region57: #{vit_forward.1} parent=1 // pred_fallthru
      _
    // Predicated region
    $region58: #{vit_forward.1} parent=1 // pred_check
      _
    $region59: #{vit_forward.1} parent=1 // pred_check_branch
      %54 = sbr.rel (0) target = $region61
    $region60: #{vit_forward.1} parent=1 // pred_region
      _
    $region61: #{vit_forward.1} parent=1 // pred_fallthru
      _
    // Predicated region
    $region62: #{vit_forward.1} parent=1 // pred_check
      _
    $region63: #{vit_forward.1} parent=1 // pred_check_branch
      %56 = sbr.rel (0) target = $region65
    $region64: #{vit_forward.1} parent=1 // pred_region
      _
    $region65: #{vit_forward.1} parent=1 // pred_fallthru
      _
    // Predicated region
    $region66: #{vit_forward.1} parent=1 // pred_check
      _
    $region67: #{vit_forward.1} parent=1 // pred_check_branch
      %58 = sbr.rel (0) target = $region69
    $region68: #{vit_forward.1} parent=1 // pred_region
      _
    $region69: #{vit_forward.1} parent=1 // pred_fallthru
      _
    // Predicated region
    $region70: #{vit_forward.1} parent=1 // pred_check
      _
    $region71: #{vit_forward.1} parent=1 // pred_check_branch
      %60 = sbr.rel (0) target = $region73
    $region72: #{vit_forward.1} parent=1 // pred_region
      _
    $region73: #{vit_forward.1} parent=1 // pred_fallthru
      _
    // Predicated region
    $region74: #{vit_forward.1} parent=1 // pred_check
      _
    $region75: #{vit_forward.1} parent=1 // pred_check_branch
      %62 = sbr.rel (0) target = $region77
    $region76: #{vit_forward.1} parent=1 // pred_region
      _
    $region77: #{vit_forward.1} parent=1 // pred_fallthru
      _
    %v64 = vlaneseq
    %v65 = vand.u32 %v64, 127
    %vm66 = vcmp.lt.s32.totalorder %v65, 17
    %v67 = vlaneseq
    %v68 = vshrl.u32 %v67, 7
    %v69 = vadd.s32 %v68, 8
    %v70 = vadd.s32 %v68, 16
    %v71 = vadd.s32 %v68, 24
    %vm72 = vcmp.eq.s32.totalorder %v68, 0
    %vm73 = vcmp.eq.s32.totalorder %v69, 0
    %vm74 = vcmp.eq.s32.totalorder %v70, 0
    %vm75 = vcmp.eq.s32.totalorder %v71, 0
    %v76 = vsel %vm72, 1, 0
    %v77 = vsel %vm73, 1, 0
    %v78 = vsel %vm74, 1, 0
    %v79 = vsel %vm75, 1, 0
    %v80 = vcvt.s32.f32 %v76
    %v81 = vcvt.s32.f32 %v77
    %v82 = vcvt.s32.f32 %v78
    %v83 = vcvt.s32.f32 %v79
    %v84 = vld [vmem:[%s0] sm:$0xf]
    %v85 = vld [vmem:[%s0 + $0x4] sm:$0xf]
    %v86 = vld [vmem:[%s0 + $0x8] sm:$0xf]
    %v87 = vld [vmem:[%s0 + $0xc] sm:$0xf]
    %v88 = vld [vmem:[%s0 + $0x10] sm:$0xf]
    %v89 = vld [vmem:[%s0 + $0x14] sm:$0xf]
    %v90 = vld [vmem:[%s0 + $0x18] sm:$0xf]
    %v91 = vld [vmem:[%s0 + $0x1c] sm:$0xf]
    %v92 = vld [vmem:[%s1] sm:$0xf]
    %v93 = vld [vmem:[%s1 + $0x4] sm:$0xf]
    %v94 = vld [vmem:[%s1 + $0x8] sm:$0xf]
    %v95 = vld [vmem:[%s1 + $0xc] sm:$0xf]
    %v96 = vld [vmem:[%s1 + $0x10] sm:$0xf]
    %v97 = vld [vmem:[%s1 + $0x14] sm:$0xf]
    %v98 = vld [vmem:[%s1 + $0x18] sm:$0xf]
    %v99 = vld [vmem:[%s1 + $0x1c] sm:$0xf]
    %v100 = vld [vmem:[%s1 + $0x20] sm:$0xf]
    %v101 = vld [vmem:[%s1 + $0x24] sm:$0xf]
    %v102 = vld [vmem:[%s1 + $0x28] sm:$0xf]
    %v103 = vld [vmem:[%s1 + $0x2c] sm:$0xf]
    %v104 = vld [vmem:[%s1 + $0x30] sm:$0xf]
    %v105 = vld [vmem:[%s1 + $0x34] sm:$0xf]
    %v106 = vld [vmem:[%s1 + $0x38] sm:$0xf]
    %v107 = vld [vmem:[%s1 + $0x3c] sm:$0xf]
    %v116 = vunpack.c.l.b16 %v84
    %v117 = vunpack.c.l.b16 %v85
    %v118 = vunpack.c.l.b16 %v86
    %v119 = vunpack.c.l.b16 %v87
    %v120 = vunpack.c.l.b16 %v88
    %v121 = vunpack.c.l.b16 %v89
    %v122 = vunpack.c.l.b16 %v90
    %v123 = vunpack.c.l.b16 %v91
    %v124 = vpack.c.b16 %v117, %v116
    %v125 = vpack.c.b16 %v119, %v118
    %v126 = vpack.c.b16 %v121, %v120
    %v127 = vpack.c.b16 %v123, %v122
    %v148 = vunpack.c.l.b16 %v92
    %v149 = vunpack.c.l.b16 %v93
    %v150 = vunpack.c.l.b16 %v94
    %v151 = vunpack.c.l.b16 %v95
    %v152 = vunpack.c.l.b16 %v96
    %v153 = vunpack.c.l.b16 %v97
    %v154 = vunpack.c.l.b16 %v98
    %v155 = vunpack.c.l.b16 %v99
    %v156 = vunpack.c.l.b16 %v100
    %v157 = vunpack.c.l.b16 %v101
    %v158 = vunpack.c.l.b16 %v102
    %v159 = vunpack.c.l.b16 %v103
    %v160 = vunpack.c.l.b16 %v104
    %v161 = vunpack.c.l.b16 %v105
    %v162 = vunpack.c.l.b16 %v106
    %v163 = vunpack.c.l.b16 %v107
    %v164 = vpack.c.b16 %v149, %v148
    %v165 = vpack.c.b16 %v151, %v150
    %v166 = vpack.c.b16 %v153, %v152
    %v167 = vpack.c.b16 %v155, %v154
    %v168 = vpack.c.b16 %v157, %v156
    %v169 = vpack.c.b16 %v159, %v158
    %v170 = vpack.c.b16 %v161, %v160
    %v171 = vpack.c.b16 %v163, %v162
    %180 = vmatprep.subr.bf16.mxu0 0
    %181 = vmatpush1.bf16.msra.mxu0 %v164
    %182 = vmatprep.subr.bf16.mxu0 0
    %183 = vmatpush1.bf16.msra.mxu0 %v165
    %184 = vmatprep.subr.bf16.mxu0 0
    %185 = vmatpush1.bf16.msra.mxu0 %v166
    %186 = vmatprep.subr.bf16.mxu0 0
    %187 = vmatpush1.bf16.msra.mxu0 %v167
    %188 = vmatprep.subr.bf16.mxu0 0
    %189 = vmatpush1.bf16.msra.mxu0 %v168
    %190 = vmatprep.subr.bf16.mxu0 0
    %191 = vmatpush1.bf16.msra.mxu0 %v169
    %192 = vmatprep.subr.bf16.mxu0 0
    %193 = vmatpush1.bf16.msra.mxu0 %v170
    %194 = vmatprep.subr.bf16.mxu0 0
    %195 = vmatpush1.bf16.msra.mxu0 %v171
    %196 = vmatprep.subr.bf16.mxu0 0
    %197 = vmatpush1.bf16.msra.mxu0 0
    %198 = vmatprep.subr.bf16.mxu0 0
    %199 = vmatpush1.bf16.msra.mxu0 0
    %200 = vmatprep.subr.bf16.mxu0 0
    %201 = vmatpush1.bf16.msra.mxu0 0
    %202 = vmatprep.subr.bf16.mxu0 0
    %203 = vmatpush1.bf16.msra.mxu0 0
    %204 = vmatprep.subr.bf16.mxu0 0
    %205 = vmatpush1.bf16.msra.mxu0 0
    %206 = vmatprep.subr.bf16.mxu0 0
    %207 = vmatpush1.bf16.msra.mxu0 0
    %208 = vmatprep.subr.bf16.mxu0 0
    %209 = vmatpush1.bf16.msra.mxu0 0
    %210 = vmatprep.subr.bf16.mxu0 0
    %211 = vmatpush1.bf16.msra.mxu0 0
    %212 = vmatprep.mubr.bf16.mxu0 0
    %213 = vmatmul.mubr.bf16.gmra.mrb[0].mxu0 %v124
    %v214 = vpop.f32.mrb[0].mxu0
    %v215 = vadd.f32 0.0, %v214
    %v216 = vpop.f32.mrb[0].mxu0
    %v217 = vpop.f32.mrb[0].mxu0
    %v218 = vadd.f32 0.0, %v217
    %v219 = vpop.f32.mrb[0].mxu0
    %220 = vmatprep.mubr.bf16.mxu0 0
    %221 = vmatmul.mubr.bf16.gmra.mrb[0].mxu0 %v125
    %v222 = vpop.f32.mrb[0].mxu0
    %v223 = vadd.f32 0.0, %v222
    %v224 = vpop.f32.mrb[0].mxu0
    %v225 = vpop.f32.mrb[0].mxu0
    %v226 = vadd.f32 0.0, %v225
    %v227 = vpop.f32.mrb[0].mxu0
    %228 = vmatprep.mubr.bf16.mxu0 0
    %229 = vmatmul.mubr.bf16.gmra.mrb[0].mxu0 %v126
    %v230 = vpop.f32.mrb[0].mxu0
    %v231 = vadd.f32 0.0, %v230
    %v232 = vpop.f32.mrb[0].mxu0
    %v233 = vpop.f32.mrb[0].mxu0
    %v234 = vadd.f32 0.0, %v233
    %v235 = vpop.f32.mrb[0].mxu0
    %236 = vmatprep.mubr.bf16.mxu0 0
    %237 = vmatmul.mubr.bf16.gmra.mrb[0].mxu0 %v127
    %v238 = vpop.f32.mrb[0].mxu0
    %v239 = vadd.f32 0.0, %v238
    %v240 = vpop.f32.mrb[0].mxu0
    %v241 = vpop.f32.mrb[0].mxu0
    %v242 = vadd.f32 0.0, %v241
    %v243 = vpop.f32.mrb[0].mxu0
    %244 = vdwg.mxu0
    %v245 = vld [vmem:[%s2] sm:$0xff]
    %v246 = vld [vmem:[%s2 + $0x8] sm:$0xff]
    %v247 = vld [vmem:[%s2 + $0x10] sm:$0xff]
    %v248 = vld [vmem:[%s2 + $0x18] sm:$0xff]
    %v249 = vadd.f32 %v215, %v245
    %v250 = vadd.f32 %v218, %v246
    %v251 = vadd.f32 %v223, %v247
    %v252 = vadd.f32 %v226, %v248
    %v253 = vadd.f32 %v231, %v245
    %v254 = vadd.f32 %v234, %v246
    %v255 = vadd.f32 %v239, %v247
    %v256 = vadd.f32 %v242, %v248
    %v257 = vld [vmem:[%s3] sm:$0x1]
    %v258 = vld [vmem:[%s4] sm:$0x1]
    %259 = vadd.xlane.f32.xlu0 %v249
    %v260 = vpop.xlane.xlu0 %259
    %261 = vadd.xlane.f32.xlu0 %v250
    %v262 = vpop.xlane.xlu0 %261
    %263 = vadd.xlane.f32.xlu0 %v251
    %v264 = vpop.xlane.xlu0 %263
    %265 = vadd.xlane.f32.xlu0 %v252
    %v266 = vpop.xlane.xlu0 %265
    %267 = vadd.xlane.f32.xlu0 %v253
    %v268 = vpop.xlane.xlu0 %267
    %269 = vadd.xlane.f32.xlu0 %v254
    %v270 = vpop.xlane.xlu0 %269
    %271 = vadd.xlane.f32.xlu0 %v255
    %v272 = vpop.xlane.xlu0 %271
    %273 = vadd.xlane.f32.xlu0 %v256
    %v274 = vpop.xlane.xlu0 %273
    %v275 = vmul.f32 %v260, 0.03125
    %v276 = vmul.f32 %v262, 0.03125
    %v277 = vmul.f32 %v264, 0.03125
    %v278 = vmul.f32 %v266, 0.03125
    %v279 = vmul.f32 %v268, 0.03125
    %v280 = vmul.f32 %v270, 0.03125
    %v281 = vmul.f32 %v272, 0.03125
    %v282 = vmul.f32 %v274, 0.03125
    %v283 = vmul.f32 %v249, %v249
    %v284 = vmul.f32 %v250, %v250
    %v285 = vmul.f32 %v251, %v251
    %v286 = vmul.f32 %v252, %v252
    %v287 = vmul.f32 %v253, %v253
    %v288 = vmul.f32 %v254, %v254
    %v289 = vmul.f32 %v255, %v255
    %v290 = vmul.f32 %v256, %v256
    %291 = vadd.xlane.f32.xlu0 %v283
    %v292 = vpop.xlane.xlu0 %291
    %293 = vadd.xlane.f32.xlu0 %v284
    %v294 = vpop.xlane.xlu0 %293
    %295 = vadd.xlane.f32.xlu0 %v285
    %v296 = vpop.xlane.xlu0 %295
    %297 = vadd.xlane.f32.xlu0 %v286
    %v298 = vpop.xlane.xlu0 %297
    %299 = vadd.xlane.f32.xlu0 %v287
    %v300 = vpop.xlane.xlu0 %299
    %301 = vadd.xlane.f32.xlu0 %v288
    %v302 = vpop.xlane.xlu0 %301
    %303 = vadd.xlane.f32.xlu0 %v289
    %v304 = vpop.xlane.xlu0 %303
    %305 = vadd.xlane.f32.xlu0 %v290
    %v306 = vpop.xlane.xlu0 %305
    %v307 = vmul.f32 %v292, 0.03125
    %v308 = vmul.f32 %v294, 0.03125
    %v309 = vmul.f32 %v296, 0.03125
    %v310 = vmul.f32 %v298, 0.03125
    %v311 = vmul.f32 %v300, 0.03125
    %v312 = vmul.f32 %v302, 0.03125
    %v313 = vmul.f32 %v304, 0.03125
    %v314 = vmul.f32 %v306, 0.03125
    %v315 = vmul.f32 %v275, %v275
    %v316 = vmul.f32 %v276, %v276
    %v317 = vmul.f32 %v277, %v277
    %v318 = vmul.f32 %v278, %v278
    %v319 = vmul.f32 %v279, %v279
    %v320 = vmul.f32 %v280, %v280
    %v321 = vmul.f32 %v281, %v281
    %v322 = vmul.f32 %v282, %v282
    %v323 = vsub.f32 %v307, %v315
    %v324 = vsub.f32 %v308, %v316
    %v325 = vsub.f32 %v309, %v317
    %v326 = vsub.f32 %v310, %v318
    %v327 = vsub.f32 %v311, %v319
    %v328 = vsub.f32 %v312, %v320
    %v329 = vsub.f32 %v313, %v321
    %v330 = vsub.f32 %v314, %v322
    %v331 = vadd.f32 %v323, 1e-05
    %v332 = vadd.f32 %v324, 1e-05
    %v333 = vadd.f32 %v325, 1e-05
    %v334 = vadd.f32 %v326, 1e-05
    %v335 = vadd.f32 %v327, 1e-05
    %v336 = vadd.f32 %v328, 1e-05
    %v337 = vadd.f32 %v329, 1e-05
    %v338 = vadd.f32 %v330, 1e-05
    %v339 = vrsqrt.pop %v331
    %v340 = vrsqrt.pop %v332
    %v341 = vrsqrt.pop %v333
    %v342 = vrsqrt.pop %v334
    %v343 = vrsqrt.pop %v335
    %v344 = vrsqrt.pop %v336
    %v345 = vrsqrt.pop %v337
    %v346 = vrsqrt.pop %v338
    %v347 = vsub.f32 %v249, %v275
    %v348 = vsub.f32 %v250, %v276
    %v349 = vsub.f32 %v251, %v277
    %v350 = vsub.f32 %v252, %v278
    %v351 = vsub.f32 %v253, %v279
    %v352 = vsub.f32 %v254, %v280
    %v353 = vsub.f32 %v255, %v281
    %v354 = vsub.f32 %v256, %v282
    %v355 = vmul.f32 %v347, %v339
    %v356 = vmul.f32 %v348, %v340
    %v357 = vmul.f32 %v349, %v341
    %v358 = vmul.f32 %v350, %v342
    %v359 = vmul.f32 %v351, %v343
    %v360 = vmul.f32 %v352, %v344
    %v361 = vmul.f32 %v353, %v345
    %v362 = vmul.f32 %v354, %v346
    %v364 = vlaneseq
    %v365 = vshrl.u32 %v364, 7
    %v366 = vsub.s32 0, %v365
    %v367 = vrot.slane %v257, %v366
    %v369 = vmul.f32 %v355, %v367
    %v370 = vmul.f32 %v356, %v367
    %v371 = vmul.f32 %v357, %v367
    %v372 = vmul.f32 %v358, %v367
    %v373 = vmul.f32 %v359, %v367
    %v374 = vmul.f32 %v360, %v367
    %v375 = vmul.f32 %v361, %v367
    %v376 = vmul.f32 %v362, %v367
    %v378 = vlaneseq
    %v379 = vshrl.u32 %v378, 7
    %v380 = vsub.s32 0, %v379
    %v381 = vrot.slane %v258, %v380
    %v383 = vadd.f32 %v369, %v381
    %v384 = vadd.f32 %v370, %v381
    %v385 = vadd.f32 %v371, %v381
    %v386 = vadd.f32 %v372, %v381
    %v387 = vadd.f32 %v373, %v381
    %v388 = vadd.f32 %v374, %v381
    %v389 = vadd.f32 %v375, %v381
    %v390 = vadd.f32 %v376, %v381
    %v391 = vld [vmem:[%s5] sm:$0xf]
    %v392 = vld [vmem:[%s5 + $0x4] sm:$0xf]
    %v393 = vld [vmem:[%s5 + $0x8] sm:$0xf]
    %v394 = vld [vmem:[%s5 + $0xc] sm:$0xf]
    %v395 = vld [vmem:[%s5 + $0x10] sm:$0xf]
    %v396 = vld [vmem:[%s5 + $0x14] sm:$0xf]
    %v397 = vld [vmem:[%s5 + $0x18] sm:$0xf]
    %v398 = vld [vmem:[%s5 + $0x1c] sm:$0xf]
    %v399 = vld [vmem:[%s5 + $0x20] sm:$0xf]
    %v400 = vld [vmem:[%s5 + $0x24] sm:$0xf]
    %v401 = vld [vmem:[%s5 + $0x28] sm:$0xf]
    %v402 = vld [vmem:[%s5 + $0x2c] sm:$0xf]
    %v403 = vld [vmem:[%s5 + $0x30] sm:$0xf]
    %v404 = vld [vmem:[%s5 + $0x34] sm:$0xf]
    %v405 = vld [vmem:[%s5 + $0x38] sm:$0xf]
    %v406 = vld [vmem:[%s5 + $0x3c] sm:$0xf]
    %v407 = vpack.c.bf16 %v384, %v383
    %v408 = vpack.c.bf16 %v386, %v385
    %v409 = vpack.c.bf16 %v388, %v387
    %v410 = vpack.c.bf16 %v390, %v389
    %v411 = vld [vmem:[%s6] sm:$0x1]
    %v413 = vlaneseq
    %v414 = vshrl.u32 %v413, 7
    %v415 = vsub.s32 0, %v414
    %v416 = vrot.slane %v411, %v415
    %v434 = vunpack.c.l.b16 %v391
    %v435 = vunpack.c.l.b16 %v392
    %v436 = vunpack.c.l.b16 %v393
    %v437 = vunpack.c.l.b16 %v394
    %v438 = vunpack.c.l.b16 %v395
    %v439 = vunpack.c.l.b16 %v396
    %v440 = vunpack.c.l.b16 %v397
    %v441 = vunpack.c.l.b16 %v398
    %v442 = vunpack.c.l.b16 %v399
    %v443 = vunpack.c.l.b16 %v400
    %v444 = vunpack.c.l.b16 %v401
    %v445 = vunpack.c.l.b16 %v402
    %v446 = vunpack.c.l.b16 %v403
    %v447 = vunpack.c.l.b16 %v404
    %v448 = vunpack.c.l.b16 %v405
    %v449 = vunpack.c.l.b16 %v406
    %v450 = vpack.c.b16 %v435, %v434
    %v451 = vpack.c.b16 %v437, %v436
    %v452 = vpack.c.b16 %v439, %v438
    %v453 = vpack.c.b16 %v441, %v440
    %v454 = vpack.c.b16 %v443, %v442
    %v455 = vpack.c.b16 %v445, %v444
    %v456 = vpack.c.b16 %v447, %v446
    %v457 = vpack.c.b16 %v449, %v448
    %466 = vmatprep.subr.bf16.mxu0 0
    %467 = vmatpush1.bf16.msra.mxu0 %v450
    %468 = vmatprep.subr.bf16.mxu0 0
    %469 = vmatpush1.bf16.msra.mxu0 %v451
    %470 = vmatprep.subr.bf16.mxu0 0
    %471 = vmatpush1.bf16.msra.mxu0 %v452
    %472 = vmatprep.subr.bf16.mxu0 0
    %473 = vmatpush1.bf16.msra.mxu0 %v453
    %474 = vmatprep.subr.bf16.mxu0 0
    %475 = vmatpush1.bf16.msra.mxu0 %v454
    %476 = vmatprep.subr.bf16.mxu0 0
    %477 = vmatpush1.bf16.msra.mxu0 %v455
    %478 = vmatprep.subr.bf16.mxu0 0
    %479 = vmatpush1.bf16.msra.mxu0 %v456
    %480 = vmatprep.subr.bf16.mxu0 0
    %481 = vmatpush1.bf16.msra.mxu0 %v457
    %482 = vmatprep.subr.bf16.mxu0 0
    %483 = vmatpush1.bf16.msra.mxu0 0
    %484 = vmatprep.subr.bf16.mxu0 0
    %485 = vmatpush1.bf16.msra.mxu0 0
    %486 = vmatprep.subr.bf16.mxu0 0
    %487 = vmatpush1.bf16.msra.mxu0 0
    %488 = vmatprep.subr.bf16.mxu0 0
    %489 = vmatpush1.bf16.msra.mxu0 0
    %490 = vmatprep.subr.bf16.mxu0 0
    %491 = vmatpush1.bf16.msra.mxu0 0
    %492 = vmatprep.subr.bf16.mxu0 0
    %493 = vmatpush1.bf16.msra.mxu0 0
    %494 = vmatprep.subr.bf16.mxu0 0
    %495 = vmatpush1.bf16.msra.mxu0 0
    %496 = vmatprep.subr.bf16.mxu0 0
    %497 = vmatpush1.bf16.msra.mxu0 0
    %498 = vmatprep.mubr.bf16.mxu0 0
    %499 = vmatmul.mubr.bf16.gmra.mrb[0].mxu0 %v407
    %v500 = vpop.f32.mrb[0].mxu0
    %v501 = vadd.f32 %v416, %v500
    %v502 = vpop.f32.mrb[0].mxu0
    %v503 = vpop.f32.mrb[0].mxu0
    %v504 = vadd.f32 %v416, %v503
    %v505 = vpop.f32.mrb[0].mxu0
    %506 = vmatprep.mubr.bf16.mxu0 0
    %507 = vmatmul.mubr.bf16.gmra.mrb[0].mxu0 %v408
    %v508 = vpop.f32.mrb[0].mxu0
    %v509 = vadd.f32 %v416, %v508
    %v510 = vpop.f32.mrb[0].mxu0
    %v511 = vpop.f32.mrb[0].mxu0
    %v512 = vadd.f32 %v416, %v511
    %v513 = vpop.f32.mrb[0].mxu0
    %514 = vmatprep.mubr.bf16.mxu0 0
    %515 = vmatmul.mubr.bf16.gmra.mrb[0].mxu0 %v409
    %v516 = vpop.f32.mrb[0].mxu0
    %v517 = vadd.f32 %v416, %v516
    %v518 = vpop.f32.mrb[0].mxu0
    %v519 = vpop.f32.mrb[0].mxu0
    %v520 = vadd.f32 %v416, %v519
    %v521 = vpop.f32.mrb[0].mxu0
    %522 = vmatprep.mubr.bf16.mxu0 0
    %523 = vmatmul.mubr.bf16.gmra.mrb[0].mxu0 %v410
    %v524 = vpop.f32.mrb[0].mxu0
    %v525 = vadd.f32 %v416, %v524
    %v526 = vpop.f32.mrb[0].mxu0
    %v527 = vpop.f32.mrb[0].mxu0
    %v528 = vadd.f32 %v416, %v527
    %v529 = vpop.f32.mrb[0].mxu0
    %530 = vdwg.mxu0
    %v531 = vpack.c.bf16 %v504, %v501
    %v532 = vpack.c.bf16 %v512, %v509
    %v533 = vpack.c.bf16 %v520, %v517
    %v534 = vpack.c.bf16 %v528, %v525
    %537 = vrot.lane.b32.xlu0 %v531, 96
    %v538 = vpop.permute.xlu0 %537
    %539 = vrot.lane.b32.xlu0 %v532, 96
    %v540 = vpop.permute.xlu0 %539
    %vm541 = vcmask 130048
    %v543 = vsel %vm541, %v531, 0
    %v546 = vsel %vm541, %v532, 0
    %v549 = vsel %vm541, %v538, 0
    %v552 = vsel %vm541, %v540, 0
    %554 = vmatprep.subr.bf16.mxu0 0
    %555 = vmatpush1.bf16.xpose.msra.mxu0 %v549
    %556 = vmatprep.subr.bf16.mxu0 0
    %557 = vmatpush1.bf16.xpose.msra.mxu0 %v552
    %558 = vmatprep.subr.bf16.mxu0 0
    %559 = vmatpush1.bf16.xpose.msra.mxu0 0
    %560 = vmatprep.subr.bf16.mxu0 0
    %561 = vmatpush1.bf16.xpose.msra.mxu0 0
    %562 = vmatprep.subr.bf16.mxu0 0
    %563 = vmatpush1.bf16.xpose.msra.mxu0 0
    %564 = vmatprep.subr.bf16.mxu0 0
    %565 = vmatpush1.bf16.xpose.msra.mxu0 0
    %566 = vmatprep.subr.bf16.mxu0 0
    %567 = vmatpush1.bf16.xpose.msra.mxu0 0
    %568 = vmatprep.subr.bf16.mxu0 0
    %569 = vmatpush1.bf16.xpose.msra.mxu0 0
    %570 = vmatprep.subr.bf16.mxu0 0
    %571 = vmatpush1.bf16.xpose.msra.mxu0 0
    %572 = vmatprep.subr.bf16.mxu0 0
    %573 = vmatpush1.bf16.xpose.msra.mxu0 0
    %574 = vmatprep.subr.bf16.mxu0 0
    %575 = vmatpush1.bf16.xpose.msra.mxu0 0
    %576 = vmatprep.subr.bf16.mxu0 0
    %577 = vmatpush1.bf16.xpose.msra.mxu0 0
    %578 = vmatprep.subr.bf16.mxu0 0
    %579 = vmatpush1.bf16.xpose.msra.mxu0 0
    %580 = vmatprep.subr.bf16.mxu0 0
    %581 = vmatpush1.bf16.xpose.msra.mxu0 0
    %582 = vmatprep.subr.bf16.mxu0 0
    %583 = vmatpush1.bf16.xpose.msra.mxu0 0
    %584 = vmatprep.subr.bf16.mxu0 0
    %585 = vmatpush1.bf16.xpose.msra.mxu0 0
    %586 = vmatprep.mubr.bf16.mxu0 0
    %587 = vmatmul.mubr.bf16.gmra.mrb[0].mxu0 %v543
    %v588 = vpop.f32.mrb[0].mxu0
    %v589 = vadd.f32 0.0, %v588
    %v590 = vpop.f32.mrb[0].mxu0
    %v591 = vpop.f32.mrb[0].mxu0
    %v592 = vadd.f32 0.0, %v591
    %v593 = vpop.f32.mrb[0].mxu0
    %594 = vmatprep.mubr.bf16.mxu0 0
    %595 = vmatmul.mubr.bf16.gmra.mrb[0].mxu0 %v546
    %v596 = vpop.f32.mrb[0].mxu0
    %v597 = vadd.f32 0.0, %v596
    %v598 = vpop.f32.mrb[0].mxu0
    %v599 = vpop.f32.mrb[0].mxu0
    %v600 = vadd.f32 0.0, %v599
    %v601 = vpop.f32.mrb[0].mxu0
    %602 = vdwg.mxu0
    %605 = vrot.lane.b32.xlu0 %v533, 96
    %v606 = vpop.permute.xlu0 %605
    %607 = vrot.lane.b32.xlu0 %v534, 96
    %v608 = vpop.permute.xlu0 %607
    %v610 = vsel %vm541, %v533, 0
    %v613 = vsel %vm541, %v534, 0
    %v616 = vsel %vm541, %v606, 0
    %v619 = vsel %vm541, %v608, 0
    %621 = vmatprep.subr.bf16.mxu0 0
    %622 = vmatpush1.bf16.xpose.msra.mxu0 %v616
    %623 = vmatprep.subr.bf16.mxu0 0
    %624 = vmatpush1.bf16.xpose.msra.mxu0 %v619
    %625 = vmatprep.subr.bf16.mxu0 0
    %626 = vmatpush1.bf16.xpose.msra.mxu0 0
    %627 = vmatprep.subr.bf16.mxu0 0
    %628 = vmatpush1.bf16.xpose.msra.mxu0 0
    %629 = vmatprep.subr.bf16.mxu0 0
    %630 = vmatpush1.bf16.xpose.msra.mxu0 0
    %631 = vmatprep.subr.bf16.mxu0 0
    %632 = vmatpush1.bf16.xpose.msra.mxu0 0
    %633 = vmatprep.subr.bf16.mxu0 0
    %634 = vmatpush1.bf16.xpose.msra.mxu0 0
    %635 = vmatprep.subr.bf16.mxu0 0
    %636 = vmatpush1.bf16.xpose.msra.mxu0 0
    %637 = vmatprep.subr.bf16.mxu0 0
    %638 = vmatpush1.bf16.xpose.msra.mxu0 0
    %639 = vmatprep.subr.bf16.mxu0 0
    %640 = vmatpush1.bf16.xpose.msra.mxu0 0
    %641 = vmatprep.subr.bf16.mxu0 0
    %642 = vmatpush1.bf16.xpose.msra.mxu0 0
    %643 = vmatprep.subr.bf16.mxu0 0
    %644 = vmatpush1.bf16.xpose.msra.mxu0 0
    %645 = vmatprep.subr.bf16.mxu0 0
    %646 = vmatpush1.bf16.xpose.msra.mxu0 0
    %647 = vmatprep.subr.bf16.mxu0 0
    %648 = vmatpush1.bf16.xpose.msra.mxu0 0
    %649 = vmatprep.subr.bf16.mxu0 0
    %650 = vmatpush1.bf16.xpose.msra.mxu0 0
    %651 = vmatprep.subr.bf16.mxu0 0
    %652 = vmatpush1.bf16.xpose.msra.mxu0 0
    %653 = vmatprep.mubr.bf16.mxu0 0
    %654 = vmatmul.mubr.bf16.gmra.mrb[0].mxu0 %v610
    %v655 = vpop.f32.mrb[0].mxu0
    %v656 = vadd.f32 0.0, %v655
    %v657 = vpop.f32.mrb[0].mxu0
    %v658 = vpop.f32.mrb[0].mxu0
    %v659 = vadd.f32 0.0, %v658
    %v660 = vpop.f32.mrb[0].mxu0
    %661 = vmatprep.mubr.bf16.mxu0 0
    %662 = vmatmul.mubr.bf16.gmra.mrb[0].mxu0 %v613
    %v663 = vpop.f32.mrb[0].mxu0
    %v664 = vadd.f32 0.0, %v663
    %v665 = vpop.f32.mrb[0].mxu0
    %v666 = vpop.f32.mrb[0].mxu0
    %v667 = vadd.f32 0.0, %v666
    %v668 = vpop.f32.mrb[0].mxu0
    %669 = vdwg.mxu0
    %v670 = vsel %vm66, 1, 0
    %vm671 = vcmp.eq.s32.totalorder %v670, 1
    %v672 = vsel %vm671, %v589, -1e+30
    %v673 = vsel %vm671, %v592, -1e+30
    %v674 = vsel %vm671, %v597, -1e+30
    %v675 = vsel %vm671, %v600, -1e+30
    %v676 = vsel %vm671, %v656, -1e+30
    %v677 = vsel %vm671, %v659, -1e+30
    %v678 = vsel %vm671, %v664, -1e+30
    %v679 = vsel %vm671, %v667, -1e+30
    %vm680 = vcmask 261120
    %v681 = vsel %vm680, %v672, -inf
    %682 = vmax.xlane.f32.xlu0 %v681
    %v683 = vpop.xlane.xlu0 %682
    %v684 = vsel %vm680, %v673, -inf
    %685 = vmax.xlane.f32.xlu0 %v684
    %v686 = vpop.xlane.xlu0 %685
    %v687 = vsel %vm680, %v674, -inf
    %688 = vmax.xlane.f32.xlu0 %v687
    %v689 = vpop.xlane.xlu0 %688
    %v690 = vsel %vm680, %v675, -inf
    %691 = vmax.xlane.f32.xlu0 %v690
    %v692 = vpop.xlane.xlu0 %691
    %v693 = vsel %vm680, %v676, -inf
    %694 = vmax.xlane.f32.xlu0 %v693
    %v695 = vpop.xlane.xlu0 %694
    %v696 = vsel %vm680, %v677, -inf
    %697 = vmax.xlane.f32.xlu0 %v696
    %v698 = vpop.xlane.xlu0 %697
    %v699 = vsel %vm680, %v678, -inf
    %700 = vmax.xlane.f32.xlu0 %v699
    %v701 = vpop.xlane.xlu0 %700
    %v702 = vsel %vm680, %v679, -inf
    %703 = vmax.xlane.f32.xlu0 %v702
    %v704 = vpop.xlane.xlu0 %703
    %v705 = vsub.f32 %v672, %v683
    %v706 = vsub.f32 %v673, %v686
    %v707 = vsub.f32 %v674, %v689
    %v708 = vsub.f32 %v675, %v692
    %v709 = vsub.f32 %v676, %v695
    %v710 = vsub.f32 %v677, %v698
    %v711 = vsub.f32 %v678, %v701
    %v712 = vsub.f32 %v679, %v704
    %v713 = vmul.f32 %v705, 1.442695
    %v714 = vpow.pop %v713
    %v715 = vmul.f32 %v706, 1.442695
    %v716 = vpow.pop %v715
    %v717 = vmul.f32 %v707, 1.442695
    %v718 = vpow.pop %v717
    %v719 = vmul.f32 %v708, 1.442695
    %v720 = vpow.pop %v719
    %v721 = vmul.f32 %v709, 1.442695
    %v722 = vpow.pop %v721
    %v723 = vmul.f32 %v710, 1.442695
    %v724 = vpow.pop %v723
    %v725 = vmul.f32 %v711, 1.442695
    %v726 = vpow.pop %v725
    %v727 = vmul.f32 %v712, 1.442695
    %v728 = vpow.pop %v727
    %v729 = vsel %vm680, %v714, 0.0
    %730 = vadd.xlane.f32.xlu0 %v729
    %v731 = vpop.xlane.xlu0 %730
    %v732 = vsel %vm680, %v716, 0.0
    %733 = vadd.xlane.f32.xlu0 %v732
    %v734 = vpop.xlane.xlu0 %733
    %v735 = vsel %vm680, %v718, 0.0
    %736 = vadd.xlane.f32.xlu0 %v735
    %v737 = vpop.xlane.xlu0 %736
    %v738 = vsel %vm680, %v720, 0.0
    %739 = vadd.xlane.f32.xlu0 %v738
    %v740 = vpop.xlane.xlu0 %739
    %v741 = vsel %vm680, %v722, 0.0
    %742 = vadd.xlane.f32.xlu0 %v741
    %v743 = vpop.xlane.xlu0 %742
    %v744 = vsel %vm680, %v724, 0.0
    %745 = vadd.xlane.f32.xlu0 %v744
    %v746 = vpop.xlane.xlu0 %745
    %v747 = vsel %vm680, %v726, 0.0
    %748 = vadd.xlane.f32.xlu0 %v747
    %v749 = vpop.xlane.xlu0 %748
    %v750 = vsel %vm680, %v728, 0.0
    %751 = vadd.xlane.f32.xlu0 %v750
    %v752 = vpop.xlane.xlu0 %751
    %v753 = vrcp.pop %v731
    %v754 = vrcp.pop %v734
    %v755 = vrcp.pop %v737
    %v756 = vrcp.pop %v740
    %v757 = vrcp.pop %v743
    %v758 = vrcp.pop %v746
    %v759 = vrcp.pop %v749
    %v760 = vrcp.pop %v752
    %v761 = vmul.f32 %v714, %v753
    %v762 = vmul.f32 %v716, %v754
    %v763 = vmul.f32 %v718, %v755
    %v764 = vmul.f32 %v720, %v756
    %v765 = vmul.f32 %v722, %v757
    %v766 = vmul.f32 %v724, %v758
    %v767 = vmul.f32 %v726, %v759
    %v768 = vmul.f32 %v728, %v760
    %v769 = vpack.c.bf16 %v762, %v761
    %v770 = vpack.c.bf16 %v764, %v763
    %v771 = vpack.c.bf16 %v766, %v765
    %v772 = vpack.c.bf16 %v768, %v767
    %773 = vrot.lane.b32.xlu0 %v531, 64
    %v774 = vpop.permute.xlu0 %773
    %775 = vrot.lane.b32.xlu0 %v532, 64
    %v776 = vpop.permute.xlu0 %775
    %v780 = vsel %vm680, %v769, 0
    %v783 = vsel %vm680, %v770, 0
    %785 = vmatprep.subr.bf16.mxu0 0
    %786 = vmatpush1.bf16.msra.mxu0 %v774
    %787 = vmatprep.subr.bf16.mxu0 0
    %788 = vmatpush1.bf16.msra.mxu0 %v776
    %789 = vmatprep.subr.bf16.mxu0 0
    %790 = vmatpush1.bf16.msra.mxu0 0
    %791 = vmatprep.subr.bf16.mxu0 0
    %792 = vmatpush1.bf16.msra.mxu0 0
    %793 = vmatprep.subr.bf16.mxu0 0
    %794 = vmatpush1.bf16.msra.mxu0 0
    %795 = vmatprep.subr.bf16.mxu0 0
    %796 = vmatpush1.bf16.msra.mxu0 0
    %797 = vmatprep.subr.bf16.mxu0 0
    %798 = vmatpush1.bf16.msra.mxu0 0
    %799 = vmatprep.subr.bf16.mxu0 0
    %800 = vmatpush1.bf16.msra.mxu0 0
    %801 = vmatprep.subr.bf16.mxu0 0
    %802 = vmatpush1.bf16.msra.mxu0 0
    %803 = vmatprep.subr.bf16.mxu0 0
    %804 = vmatpush1.bf16.msra.mxu0 0
    %805 = vmatprep.subr.bf16.mxu0 0
    %806 = vmatpush1.bf16.msra.mxu0 0
    %807 = vmatprep.subr.bf16.mxu0 0
    %808 = vmatpush1.bf16.msra.mxu0 0
    %809 = vmatprep.subr.bf16.mxu0 0
    %810 = vmatpush1.bf16.msra.mxu0 0
    %811 = vmatprep.subr.bf16.mxu0 0
    %812 = vmatpush1.bf16.msra.mxu0 0
    %813 = vmatprep.subr.bf16.mxu0 0
    %814 = vmatpush1.bf16.msra.mxu0 0
    %815 = vmatprep.subr.bf16.mxu0 0
    %816 = vmatpush1.bf16.msra.mxu0 0
    %817 = vmatprep.mubr.bf16.mxu0 0
    %818 = vmatmul.mubr.bf16.gmra.mrb[0].mxu0 %v780
    %v819 = vpop.f32.mrb[0].mxu0
    %v820 = vadd.f32 0.0, %v819
    %v821 = vpop.f32.mrb[0].mxu0
    %v822 = vpop.f32.mrb[0].mxu0
    %v823 = vadd.f32 0.0, %v822
    %v824 = vpop.f32.mrb[0].mxu0
    %825 = vmatprep.mubr.bf16.mxu0 0
    %826 = vmatmul.mubr.bf16.gmra.mrb[0].mxu0 %v783
    %v827 = vpop.f32.mrb[0].mxu0
    %v828 = vadd.f32 0.0, %v827
    %v829 = vpop.f32.mrb[0].mxu0
    %v830 = vpop.f32.mrb[0].mxu0
    %v831 = vadd.f32 0.0, %v830
    %v832 = vpop.f32.mrb[0].mxu0
    %833 = vdwg.mxu0
    %834 = vrot.lane.b32.xlu0 %v533, 64
    %v835 = vpop.permute.xlu0 %834
    %836 = vrot.lane.b32.xlu0 %v534, 64
    %v837 = vpop.permute.xlu0 %836
    %v841 = vsel %vm680, %v771, 0
    %v844 = vsel %vm680, %v772, 0
    %846 = vmatprep.subr.bf16.mxu0 0
    %847 = vmatpush1.bf16.msra.mxu0 %v835
    %848 = vmatprep.subr.bf16.mxu0 0
    %849 = vmatpush1.bf16.msra.mxu0 %v837
    %850 = vmatprep.subr.bf16.mxu0 0
    %851 = vmatpush1.bf16.msra.mxu0 0
    %852 = vmatprep.subr.bf16.mxu0 0
    %853 = vmatpush1.bf16.msra.mxu0 0
    %854 = vmatprep.subr.bf16.mxu0 0
    %855 = vmatpush1.bf16.msra.mxu0 0
    %856 = vmatprep.subr.bf16.mxu0 0
    %857 = vmatpush1.bf16.msra.mxu0 0
    %858 = vmatprep.subr.bf16.mxu0 0
    %859 = vmatpush1.bf16.msra.mxu0 0
    %860 = vmatprep.subr.bf16.mxu0 0
    %861 = vmatpush1.bf16.msra.mxu0 0
    %862 = vmatprep.subr.bf16.mxu0 0
    %863 = vmatpush1.bf16.msra.mxu0 0
    %864 = vmatprep.subr.bf16.mxu0 0
    %865 = vmatpush1.bf16.msra.mxu0 0
    %866 = vmatprep.subr.bf16.mxu0 0
    %867 = vmatpush1.bf16.msra.mxu0 0
    %868 = vmatprep.subr.bf16.mxu0 0
    %869 = vmatpush1.bf16.msra.mxu0 0
    %870 = vmatprep.subr.bf16.mxu0 0
    %871 = vmatpush1.bf16.msra.mxu0 0
    %872 = vmatprep.subr.bf16.mxu0 0
    %873 = vmatpush1.bf16.msra.mxu0 0
    %874 = vmatprep.subr.bf16.mxu0 0
    %875 = vmatpush1.bf16.msra.mxu0 0
    %876 = vmatprep.subr.bf16.mxu0 0
    %877 = vmatpush1.bf16.msra.mxu0 0
    %878 = vmatprep.mubr.bf16.mxu0 0
    %879 = vmatmul.mubr.bf16.gmra.mrb[0].mxu0 %v841
    %v880 = vpop.f32.mrb[0].mxu0
    %v881 = vadd.f32 0.0, %v880
    %v882 = vpop.f32.mrb[0].mxu0
    %v883 = vpop.f32.mrb[0].mxu0
    %v884 = vadd.f32 0.0, %v883
    %v885 = vpop.f32.mrb[0].mxu0
    %886 = vmatprep.mubr.bf16.mxu0 0
    %887 = vmatmul.mubr.bf16.gmra.mrb[0].mxu0 %v844
    %v888 = vpop.f32.mrb[0].mxu0
    %v889 = vadd.f32 0.0, %v888
    %v890 = vpop.f32.mrb[0].mxu0
    %v891 = vpop.f32.mrb[0].mxu0
    %v892 = vadd.f32 0.0, %v891
    %v893 = vpop.f32.mrb[0].mxu0
    %894 = vdwg.mxu0
    %895 = vrot.lane.b32.xlu0 %v531, 112
    %v896 = vpop.permute.xlu0 %895
    %897 = vrot.lane.b32.xlu0 %v532, 112
    %v898 = vpop.permute.xlu0 %897
    %899 = vrot.lane.b32.xlu0 %v531, 80
    %v900 = vpop.permute.xlu0 %899
    %901 = vrot.lane.b32.xlu0 %v532, 80
    %v902 = vpop.permute.xlu0 %901
    %v904 = vsel %vm541, %v896, 0
    %v907 = vsel %vm541, %v898, 0
    %v910 = vsel %vm541, %v900, 0
    %v913 = vsel %vm541, %v902, 0
    %915 = vmatprep.subr.bf16.mxu0 0
    %916 = vmatpush1.bf16.xpose.msra.mxu0 %v910
    %917 = vmatprep.subr.bf16.mxu0 0
    %918 = vmatpush1.bf16.xpose.msra.mxu0 %v913
    %919 = vmatprep.subr.bf16.mxu0 0
    %920 = vmatpush1.bf16.xpose.msra.mxu0 0
    %921 = vmatprep.subr.bf16.mxu0 0
    %922 = vmatpush1.bf16.xpose.msra.mxu0 0
    %923 = vmatprep.subr.bf16.mxu0 0
    %924 = vmatpush1.bf16.xpose.msra.mxu0 0
    %925 = vmatprep.subr.bf16.mxu0 0
    %926 = vmatpush1.bf16.xpose.msra.mxu0 0
    %927 = vmatprep.subr.bf16.mxu0 0
    %928 = vmatpush1.bf16.xpose.msra.mxu0 0
    %929 = vmatprep.subr.bf16.mxu0 0
    %930 = vmatpush1.bf16.xpose.msra.mxu0 0
    %931 = vmatprep.subr.bf16.mxu0 0
    %932 = vmatpush1.bf16.xpose.msra.mxu0 0
    %933 = vmatprep.subr.bf16.mxu0 0
    %934 = vmatpush1.bf16.xpose.msra.mxu0 0
    %935 = vmatprep.subr.bf16.mxu0 0
    %936 = vmatpush1.bf16.xpose.msra.mxu0 0
    %937 = vmatprep.subr.bf16.mxu0 0
    %938 = vmatpush1.bf16.xpose.msra.mxu0 0
    %939 = vmatprep.subr.bf16.mxu0 0
    %940 = vmatpush1.bf16.xpose.msra.mxu0 0
    %941 = vmatprep.subr.bf16.mxu0 0
    %942 = vmatpush1.bf16.xpose.msra.mxu0 0
    %943 = vmatprep.subr.bf16.mxu0 0
    %944 = vmatpush1.bf16.xpose.msra.mxu0 0
    %945 = vmatprep.subr.bf16.mxu0 0
    %946 = vmatpush1.bf16.xpose.msra.mxu0 0
    %947 = vmatprep.mubr.bf16.mxu0 0
    %948 = vmatmul.mubr.bf16.gmra.mrb[0].mxu0 %v904
    %v949 = vpop.f32.mrb[0].mxu0
    %v950 = vadd.f32 0.0, %v949
    %v951 = vpop.f32.mrb[0].mxu0
    %v952 = vpop.f32.mrb[0].mxu0
    %v953 = vadd.f32 0.0, %v952
    %v954 = vpop.f32.mrb[0].mxu0
    %955 = vmatprep.mubr.bf16.mxu0 0
    %956 = vmatmul.mubr.bf16.gmra.mrb[0].mxu0 %v907
    %v957 = vpop.f32.mrb[0].mxu0
    %v958 = vadd.f32 0.0, %v957
    %v959 = vpop.f32.mrb[0].mxu0
    %v960 = vpop.f32.mrb[0].mxu0
    %v961 = vadd.f32 0.0, %v960
    %v962 = vpop.f32.mrb[0].mxu0
    %963 = vdwg.mxu0
    %964 = vrot.lane.b32.xlu0 %v533, 112
    %v965 = vpop.permute.xlu0 %964
    %966 = vrot.lane.b32.xlu0 %v534, 112
    %v967 = vpop.permute.xlu0 %966
    %968 = vrot.lane.b32.xlu0 %v533, 80
    %v969 = vpop.permute.xlu0 %968
    %970 = vrot.lane.b32.xlu0 %v534, 80
    %v971 = vpop.permute.xlu0 %970
    %v973 = vsel %vm541, %v965, 0
    %v976 = vsel %vm541, %v967, 0
    %v979 = vsel %vm541, %v969, 0
    %v982 = vsel %vm541, %v971, 0
    %984 = vmatprep.subr.bf16.mxu0 0
    %985 = vmatpush1.bf16.xpose.msra.mxu0 %v979
    %986 = vmatprep.subr.bf16.mxu0 0
    %987 = vmatpush1.bf16.xpose.msra.mxu0 %v982
    %988 = vmatprep.subr.bf16.mxu0 0
    %989 = vmatpush1.bf16.xpose.msra.mxu0 0
    %990 = vmatprep.subr.bf16.mxu0 0
    %991 = vmatpush1.bf16.xpose.msra.mxu0 0
    %992 = vmatprep.subr.bf16.mxu0 0
    %993 = vmatpush1.bf16.xpose.msra.mxu0 0
    %994 = vmatprep.subr.bf16.mxu0 0
    %995 = vmatpush1.bf16.xpose.msra.mxu0 0
    %996 = vmatprep.subr.bf16.mxu0 0
    %997 = vmatpush1.bf16.xpose.msra.mxu0 0
    %998 = vmatprep.subr.bf16.mxu0 0
    %999 = vmatpush1.bf16.xpose.msra.mxu0 0
    %1000 = vmatprep.subr.bf16.mxu0 0
    %1001 = vmatpush1.bf16.xpose.msra.mxu0 0
    %1002 = vmatprep.subr.bf16.mxu0 0
    %1003 = vmatpush1.bf16.xpose.msra.mxu0 0
    %1004 = vmatprep.subr.bf16.mxu0 0
    %1005 = vmatpush1.bf16.xpose.msra.mxu0 0
    %1006 = vmatprep.subr.bf16.mxu0 0
    %1007 = vmatpush1.bf16.xpose.msra.mxu0 0
    %1008 = vmatprep.subr.bf16.mxu0 0
    %1009 = vmatpush1.bf16.xpose.msra.mxu0 0
    %1010 = vmatprep.subr.bf16.mxu0 0
    %1011 = vmatpush1.bf16.xpose.msra.mxu0 0
    %1012 = vmatprep.subr.bf16.mxu0 0
    %1013 = vmatpush1.bf16.xpose.msra.mxu0 0
    %1014 = vmatprep.subr.bf16.mxu0 0
    %1015 = vmatpush1.bf16.xpose.msra.mxu0 0
    %1016 = vmatprep.mubr.bf16.mxu0 0
    %1017 = vmatmul.mubr.bf16.gmra.mrb[0].mxu0 %v973
    %v1018 = vpop.f32.mrb[0].mxu0
    %v1019 = vadd.f32 0.0, %v1018
    %v1020 = vpop.f32.mrb[0].mxu0
    %v1021 = vpop.f32.mrb[0].mxu0
    %v1022 = vadd.f32 0.0, %v1021
    %v1023 = vpop.f32.mrb[0].mxu0
    %1024 = vmatprep.mubr.bf16.mxu0 0
    %1025 = vmatmul.mubr.bf16.gmra.mrb[0].mxu0 %v976
    %v1026 = vpop.f32.mrb[0].mxu0
    %v1027 = vadd.f32 0.0, %v1026
    %v1028 = vpop.f32.mrb[0].mxu0
    %v1029 = vpop.f32.mrb[0].mxu0
    %v1030 = vadd.f32 0.0, %v1029
    %v1031 = vpop.f32.mrb[0].mxu0
    %1032 = vdwg.mxu0
    %v1033 = vsel %vm671, %v950, -1e+30
    %v1034 = vsel %vm671, %v953, -1e+30
    %v1035 = vsel %vm671, %v958, -1e+30
    %v1036 = vsel %vm671, %v961, -1e+30
    %v1037 = vsel %vm671, %v1019, -1e+30
    %v1038 = vsel %vm671, %v1022, -1e+30
    %v1039 = vsel %vm671, %v1027, -1e+30
    %v1040 = vsel %vm671, %v1030, -1e+30
    %v1041 = vsel %vm680, %v1033, -inf
    %1042 = vmax.xlane.f32.xlu0 %v1041
    %v1043 = vpop.xlane.xlu0 %1042
    %v1044 = vsel %vm680, %v1034, -inf
    %1045 = vmax.xlane.f32.xlu0 %v1044
    %v1046 = vpop.xlane.xlu0 %1045
    %v1047 = vsel %vm680, %v1035, -inf
    %1048 = vmax.xlane.f32.xlu0 %v1047
    %v1049 = vpop.xlane.xlu0 %1048
    %v1050 = vsel %vm680, %v1036, -inf
    %1051 = vmax.xlane.f32.xlu0 %v1050
    %v1052 = vpop.xlane.xlu0 %1051
    %v1053 = vsel %vm680, %v1037, -inf
    %1054 = vmax.xlane.f32.xlu0 %v1053
    %v1055 = vpop.xlane.xlu0 %1054
    %v1056 = vsel %vm680, %v1038, -inf
    %1057 = vmax.xlane.f32.xlu0 %v1056
    %v1058 = vpop.xlane.xlu0 %1057
    %v1059 = vsel %vm680, %v1039, -inf
    %1060 = vmax.xlane.f32.xlu0 %v1059
    %v1061 = vpop.xlane.xlu0 %1060
    %v1062 = vsel %vm680, %v1040, -inf
    %1063 = vmax.xlane.f32.xlu0 %v1062
    %v1064 = vpop.xlane.xlu0 %1063
    %v1065 = vsub.f32 %v1033, %v1043
    %v1066 = vsub.f32 %v1034, %v1046
    %v1067 = vsub.f32 %v1035, %v1049
    %v1068 = vsub.f32 %v1036, %v1052
    %v1069 = vsub.f32 %v1037, %v1055
    %v1070 = vsub.f32 %v1038, %v1058
    %v1071 = vsub.f32 %v1039, %v1061
    %v1072 = vsub.f32 %v1040, %v1064
    %v1073 = vmul.f32 %v1065, 1.442695
    %v1074 = vpow.pop %v1073
    %v1075 = vmul.f32 %v1066, 1.442695
    %v1076 = vpow.pop %v1075
    %v1077 = vmul.f32 %v1067, 1.442695
    %v1078 = vpow.pop %v1077
    %v1079 = vmul.f32 %v1068, 1.442695
    %v1080 = vpow.pop %v1079
    %v1081 = vmul.f32 %v1069, 1.442695
    %v1082 = vpow.pop %v1081
    %v1083 = vmul.f32 %v1070, 1.442695
    %v1084 = vpow.pop %v1083
    %v1085 = vmul.f32 %v1071, 1.442695
    %v1086 = vpow.pop %v1085
    %v1087 = vmul.f32 %v1072, 1.442695
    %v1088 = vpow.pop %v1087
    %v1089 = vsel %vm680, %v1074, 0.0
    %1090 = vadd.xlane.f32.xlu0 %v1089
    %v1091 = vpop.xlane.xlu0 %1090
    %v1092 = vsel %vm680, %v1076, 0.0
    %1093 = vadd.xlane.f32.xlu0 %v1092
    %v1094 = vpop.xlane.xlu0 %1093
    %v1095 = vsel %vm680, %v1078, 0.0
    %1096 = vadd.xlane.f32.xlu0 %v1095
    %v1097 = vpop.xlane.xlu0 %1096
    %v1098 = vsel %vm680, %v1080, 0.0
    %1099 = vadd.xlane.f32.xlu0 %v1098
    %v1100 = vpop.xlane.xlu0 %1099
    %v1101 = vsel %vm680, %v1082, 0.0
    %1102 = vadd.xlane.f32.xlu0 %v1101
    %v1103 = vpop.xlane.xlu0 %1102
    %v1104 = vsel %vm680, %v1084, 0.0
    %1105 = vadd.xlane.f32.xlu0 %v1104
    %v1106 = vpop.xlane.xlu0 %1105
    %v1107 = vsel %vm680, %v1086, 0.0
    %1108 = vadd.xlane.f32.xlu0 %v1107
    %v1109 = vpop.xlane.xlu0 %1108
    %v1110 = vsel %vm680, %v1088, 0.0
    %1111 = vadd.xlane.f32.xlu0 %v1110
    %v1112 = vpop.xlane.xlu0 %1111
    %v1113 = vrcp.pop %v1091
    %v1114 = vrcp.pop %v1094
    %v1115 = vrcp.pop %v1097
    %v1116 = vrcp.pop %v1100
    %v1117 = vrcp.pop %v1103
    %v1118 = vrcp.pop %v1106
    %v1119 = vrcp.pop %v1109
    %v1120 = vrcp.pop %v1112
    %v1121 = vmul.f32 %v1074, %v1113
    %v1122 = vmul.f32 %v1076, %v1114
    %v1123 = vmul.f32 %v1078, %v1115
    %v1124 = vmul.f32 %v1080, %v1116
    %v1125 = vmul.f32 %v1082, %v1117
    %v1126 = vmul.f32 %v1084, %v1118
    %v1127 = vmul.f32 %v1086, %v1119
    %v1128 = vmul.f32 %v1088, %v1120
    %v1129 = vpack.c.bf16 %v1122, %v1121
    %v1130 = vpack.c.bf16 %v1124, %v1123
    %v1131 = vpack.c.bf16 %v1126, %v1125
    %v1132 = vpack.c.bf16 %v1128, %v1127
    %1133 = vrot.lane.b32.xlu0 %v531, 48
    %v1134 = vpop.permute.xlu0 %1133
    %1135 = vrot.lane.b32.xlu0 %v532, 48
    %v1136 = vpop.permute.xlu0 %1135
    %v1140 = vsel %vm680, %v1129, 0
    %v1143 = vsel %vm680, %v1130, 0
    %1145 = vmatprep.subr.bf16.mxu0 0
    %1146 = vmatpush1.bf16.msra.mxu0 %v1134
    %1147 = vmatprep.subr.bf16.mxu0 0
    %1148 = vmatpush1.bf16.msra.mxu0 %v1136
    %1149 = vmatprep.subr.bf16.mxu0 0
    %1150 = vmatpush1.bf16.msra.mxu0 0
    %1151 = vmatprep.subr.bf16.mxu0 0
    %1152 = vmatpush1.bf16.msra.mxu0 0
    %1153 = vmatprep.subr.bf16.mxu0 0
    %1154 = vmatpush1.bf16.msra.mxu0 0
    %1155 = vmatprep.subr.bf16.mxu0 0
    %1156 = vmatpush1.bf16.msra.mxu0 0
    %1157 = vmatprep.subr.bf16.mxu0 0
    %1158 = vmatpush1.bf16.msra.mxu0 0
    %1159 = vmatprep.subr.bf16.mxu0 0
    %1160 = vmatpush1.bf16.msra.mxu0 0
    %1161 = vmatprep.subr.bf16.mxu0 0
    %1162 = vmatpush1.bf16.msra.mxu0 0
    %1163 = vmatprep.subr.bf16.mxu0 0
    %1164 = vmatpush1.bf16.msra.mxu0 0
    %1165 = vmatprep.subr.bf16.mxu0 0
    %1166 = vmatpush1.bf16.msra.mxu0 0
    %1167 = vmatprep.subr.bf16.mxu0 0
    %1168 = vmatpush1.bf16.msra.mxu0 0
    %1169 = vmatprep.subr.bf16.mxu0 0
    %1170 = vmatpush1.bf16.msra.mxu0 0
    %1171 = vmatprep.subr.bf16.mxu0 0
    %1172 = vmatpush1.bf16.msra.mxu0 0
    %1173 = vmatprep.subr.bf16.mxu0 0
    %1174 = vmatpush1.bf16.msra.mxu0 0
    %1175 = vmatprep.subr.bf16.mxu0 0
    %1176 = vmatpush1.bf16.msra.mxu0 0
    %1177 = vmatprep.mubr.bf16.mxu0 0
    %1178 = vmatmul.mubr.bf16.gmra.mrb[0].mxu0 %v1140
    %v1179 = vpop.f32.mrb[0].mxu0
    %v1180 = vadd.f32 0.0, %v1179
    %v1181 = vpop.f32.mrb[0].mxu0
    %v1182 = vpop.f32.mrb[0].mxu0
    %v1183 = vadd.f32 0.0, %v1182
    %v1184 = vpop.f32.mrb[0].mxu0
    %1185 = vmatprep.mubr.bf16.mxu0 0
    %1186 = vmatmul.mubr.bf16.gmra.mrb[0].mxu0 %v1143
    %v1187 = vpop.f32.mrb[0].mxu0
    %v1188 = vadd.f32 0.0, %v1187
    %v1189 = vpop.f32.mrb[0].mxu0
    %v1190 = vpop.f32.mrb[0].mxu0
    %v1191 = vadd.f32 0.0, %v1190
    %v1192 = vpop.f32.mrb[0].mxu0
    %1193 = vdwg.mxu0
    %1194 = vrot.lane.b32.xlu0 %v533, 48
    %v1195 = vpop.permute.xlu0 %1194
    %1196 = vrot.lane.b32.xlu0 %v534, 48
    %v1197 = vpop.permute.xlu0 %1196
    %v1201 = vsel %vm680, %v1131, 0
    %v1204 = vsel %vm680, %v1132, 0
    %1206 = vmatprep.subr.bf16.mxu0 0
    %1207 = vmatpush1.bf16.msra.mxu0 %v1195
    %1208 = vmatprep.subr.bf16.mxu0 0
    %1209 = vmatpush1.bf16.msra.mxu0 %v1197
    %1210 = vmatprep.subr.bf16.mxu0 0
    %1211 = vmatpush1.bf16.msra.mxu0 0
    %1212 = vmatprep.subr.bf16.mxu0 0
    %1213 = vmatpush1.bf16.msra.mxu0 0
    %1214 = vmatprep.subr.bf16.mxu0 0
    %1215 = vmatpush1.bf16.msra.mxu0 0
    %1216 = vmatprep.subr.bf16.mxu0 0
    %1217 = vmatpush1.bf16.msra.mxu0 0
    %1218 = vmatprep.subr.bf16.mxu0 0
    %1219 = vmatpush1.bf16.msra.mxu0 0
    %1220 = vmatprep.subr.bf16.mxu0 0
    %1221 = vmatpush1.bf16.msra.mxu0 0
    %1222 = vmatprep.subr.bf16.mxu0 0
    %1223 = vmatpush1.bf16.msra.mxu0 0
    %1224 = vmatprep.subr.bf16.mxu0 0
    %1225 = vmatpush1.bf16.msra.mxu0 0
    %1226 = vmatprep.subr.bf16.mxu0 0
    %1227 = vmatpush1.bf16.msra.mxu0 0
    %1228 = vmatprep.subr.bf16.mxu0 0
    %1229 = vmatpush1.bf16.msra.mxu0 0
    %1230 = vmatprep.subr.bf16.mxu0 0
    %1231 = vmatpush1.bf16.msra.mxu0 0
    %1232 = vmatprep.subr.bf16.mxu0 0
    %1233 = vmatpush1.bf16.msra.mxu0 0
    %1234 = vmatprep.subr.bf16.mxu0 0
    %1235 = vmatpush1.bf16.msra.mxu0 0
    %1236 = vmatprep.subr.bf16.mxu0 0
    %1237 = vmatpush1.bf16.msra.mxu0 0
    %1238 = vmatprep.mubr.bf16.mxu0 0
    %1239 = vmatmul.mubr.bf16.gmra.mrb[0].mxu0 %v1201
    %v1240 = vpop.f32.mrb[0].mxu0
    %v1241 = vadd.f32 0.0, %v1240
    %v1242 = vpop.f32.mrb[0].mxu0
    %v1243 = vpop.f32.mrb[0].mxu0
    %v1244 = vadd.f32 0.0, %v1243
    %v1245 = vpop.f32.mrb[0].mxu0
    %1246 = vmatprep.mubr.bf16.mxu0 0
    %1247 = vmatmul.mubr.bf16.gmra.mrb[0].mxu0 %v1204
    %v1248 = vpop.f32.mrb[0].mxu0
    %v1249 = vadd.f32 0.0, %v1248
    %v1250 = vpop.f32.mrb[0].mxu0
    %v1251 = vpop.f32.mrb[0].mxu0
    %v1252 = vadd.f32 0.0, %v1251
    %v1253 = vpop.f32.mrb[0].mxu0
    %1254 = vdwg.mxu0
    %1263 = vrot.lane.b32.xlu0 %v1180, 16
    %v1264 = vpop.permute.xlu0 %1263
    %1265 = vrot.lane.b32.xlu0 %v1183, 16
    %v1266 = vpop.permute.xlu0 %1265
    %1267 = vrot.lane.b32.xlu0 %v1188, 16
    %v1268 = vpop.permute.xlu0 %1267
    %1269 = vrot.lane.b32.xlu0 %v1191, 16
    %v1270 = vpop.permute.xlu0 %1269
    %1271 = vrot.lane.b32.xlu0 %v1241, 16
    %v1272 = vpop.permute.xlu0 %1271
    %1273 = vrot.lane.b32.xlu0 %v1244, 16
    %v1274 = vpop.permute.xlu0 %1273
    %1275 = vrot.lane.b32.xlu0 %v1249, 16
    %v1276 = vpop.permute.xlu0 %1275
    %1277 = vrot.lane.b32.xlu0 %v1252, 16
    %v1278 = vpop.permute.xlu0 %1277
    %v1287 = vsel %vm541, %v820, %v1264
    %v1288 = vsel %vm541, %v823, %v1266
    %v1289 = vsel %vm541, %v828, %v1268
    %v1290 = vsel %vm541, %v831, %v1270
    %v1291 = vsel %vm541, %v881, %v1272
    %v1292 = vsel %vm541, %v884, %v1274
    %v1293 = vsel %vm541, %v889, %v1276
    %v1294 = vsel %vm541, %v892, %v1278
    %v1295 = vld [vmem:[%s7] sm:$0xf]
    %v1296 = vld [vmem:[%s7 + $0x4] sm:$0xf]
    %v1297 = vld [vmem:[%s7 + $0x8] sm:$0xf]
    %v1298 = vld [vmem:[%s7 + $0xc] sm:$0xf]
    %v1299 = vpack.c.bf16 %v1288, %v1287
    %v1300 = vpack.c.bf16 %v1290, %v1289
    %v1301 = vpack.c.bf16 %v1292, %v1291
    %v1302 = vpack.c.bf16 %v1294, %v1293
    %v1307 = vunpack.c.l.b16 %v1295
    %v1308 = vunpack.c.l.b16 %v1296
    %v1309 = vunpack.c.l.b16 %v1297
    %v1310 = vunpack.c.l.b16 %v1298
    %v1311 = vpack.c.b16 %v1308, %v1307
    %v1312 = vpack.c.b16 %v1310, %v1309
    %v1316 = vsel %vm680, %v1299, 0
    %v1319 = vsel %vm680, %v1300, 0
    %v1322 = vsel %vm680, %v1301, 0
    %v1325 = vsel %vm680, %v1302, 0
    %1327 = vmatprep.subr.bf16.mxu0 0
    %1328 = vmatpush1.bf16.msra.mxu0 %v1311
    %1329 = vmatprep.subr.bf16.mxu0 0
    %1330 = vmatpush1.bf16.msra.mxu0 %v1312
    %1331 = vmatprep.subr.bf16.mxu0 0
    %1332 = vmatpush1.bf16.msra.mxu0 0
    %1333 = vmatprep.subr.bf16.mxu0 0
    %1334 = vmatpush1.bf16.msra.mxu0 0
    %1335 = vmatprep.subr.bf16.mxu0 0
    %1336 = vmatpush1.bf16.msra.mxu0 0
    %1337 = vmatprep.subr.bf16.mxu0 0
    %1338 = vmatpush1.bf16.msra.mxu0 0
    %1339 = vmatprep.subr.bf16.mxu0 0
    %1340 = vmatpush1.bf16.msra.mxu0 0
    %1341 = vmatprep.subr.bf16.mxu0 0
    %1342 = vmatpush1.bf16.msra.mxu0 0
    %1343 = vmatprep.subr.bf16.mxu0 0
    %1344 = vmatpush1.bf16.msra.mxu0 0
    %1345 = vmatprep.subr.bf16.mxu0 0
    %1346 = vmatpush1.bf16.msra.mxu0 0
    %1347 = vmatprep.subr.bf16.mxu0 0
    %1348 = vmatpush1.bf16.msra.mxu0 0
    %1349 = vmatprep.subr.bf16.mxu0 0
    %1350 = vmatpush1.bf16.msra.mxu0 0
    %1351 = vmatprep.subr.bf16.mxu0 0
    %1352 = vmatpush1.bf16.msra.mxu0 0
    %1353 = vmatprep.subr.bf16.mxu0 0
    %1354 = vmatpush1.bf16.msra.mxu0 0
    %1355 = vmatprep.subr.bf16.mxu0 0
    %1356 = vmatpush1.bf16.msra.mxu0 0
    %1357 = vmatprep.subr.bf16.mxu0 0
    %1358 = vmatpush1.bf16.msra.mxu0 0
    %1359 = vmatprep.mubr.bf16.mxu0 0
    %1360 = vmatmul.mubr.bf16.gmra.mrb[0].mxu0 %v1316
    %v1361 = vpop.f32.mrb[0].mxu0
    %v1362 = vadd.f32 0.0, %v1361
    %v1363 = vpop.f32.mrb[0].mxu0
    %v1364 = vpop.f32.mrb[0].mxu0
    %v1365 = vadd.f32 0.0, %v1364
    %v1366 = vpop.f32.mrb[0].mxu0
    %1367 = vmatprep.mubr.bf16.mxu0 0
    %1368 = vmatmul.mubr.bf16.gmra.mrb[0].mxu0 %v1319
    %v1369 = vpop.f32.mrb[0].mxu0
    %v1370 = vadd.f32 0.0, %v1369
    %v1371 = vpop.f32.mrb[0].mxu0
    %v1372 = vpop.f32.mrb[0].mxu0
    %v1373 = vadd.f32 0.0, %v1372
    %v1374 = vpop.f32.mrb[0].mxu0
    %1375 = vmatprep.mubr.bf16.mxu0 0
    %1376 = vmatmul.mubr.bf16.gmra.mrb[0].mxu0 %v1322
    %v1377 = vpop.f32.mrb[0].mxu0
    %v1378 = vadd.f32 0.0, %v1377
    %v1379 = vpop.f32.mrb[0].mxu0
    %v1380 = vpop.f32.mrb[0].mxu0
    %v1381 = vadd.f32 0.0, %v1380
    %v1382 = vpop.f32.mrb[0].mxu0
    %1383 = vmatprep.mubr.bf16.mxu0 0
    %1384 = vmatmul.mubr.bf16.gmra.mrb[0].mxu0 %v1325
    %v1385 = vpop.f32.mrb[0].mxu0
    %v1386 = vadd.f32 0.0, %v1385
    %v1387 = vpop.f32.mrb[0].mxu0
    %v1388 = vpop.f32.mrb[0].mxu0
    %v1389 = vadd.f32 0.0, %v1388
    %v1390 = vpop.f32.mrb[0].mxu0
    %1391 = vdwg.mxu0
    %v1392 = vadd.f32 %v249, %v1362
    %v1393 = vadd.f32 %v250, %v1365
    %v1394 = vadd.f32 %v251, %v1370
    %v1395 = vadd.f32 %v252, %v1373
    %v1396 = vadd.f32 %v253, %v1378
    %v1397 = vadd.f32 %v254, %v1381
    %v1398 = vadd.f32 %v255, %v1386
    %v1399 = vadd.f32 %v256, %v1389
    %v1400 = vld [vmem:[%s8] sm:$0x1]
    %v1402 = vlaneseq
    %v1403 = vshrl.u32 %v1402, 7
    %v1404 = vsub.s32 0, %v1403
    %v1405 = vrot.slane %v1400, %v1404
    %v1407 = vadd.f32 %v1392, %v1405
    %v1408 = vadd.f32 %v1393, %v1405
    %v1409 = vadd.f32 %v1394, %v1405
    %v1410 = vadd.f32 %v1395, %v1405
    %v1411 = vadd.f32 %v1396, %v1405
    %v1412 = vadd.f32 %v1397, %v1405
    %v1413 = vadd.f32 %v1398, %v1405
    %v1414 = vadd.f32 %v1399, %v1405
    %v1415 = vld [vmem:[%s9] sm:$0x1]
    %v1416 = vld [vmem:[%s10] sm:$0x1]
    %1417 = vadd.xlane.f32.xlu0 %v1407
    %v1418 = vpop.xlane.xlu0 %1417
    %1419 = vadd.xlane.f32.xlu0 %v1408
    %v1420 = vpop.xlane.xlu0 %1419
    %1421 = vadd.xlane.f32.xlu0 %v1409
    %v1422 = vpop.xlane.xlu0 %1421
    %1423 = vadd.xlane.f32.xlu0 %v1410
    %v1424 = vpop.xlane.xlu0 %1423
    %1425 = vadd.xlane.f32.xlu0 %v1411
    %v1426 = vpop.xlane.xlu0 %1425
    %1427 = vadd.xlane.f32.xlu0 %v1412
    %v1428 = vpop.xlane.xlu0 %1427
    %1429 = vadd.xlane.f32.xlu0 %v1413
    %v1430 = vpop.xlane.xlu0 %1429
    %1431 = vadd.xlane.f32.xlu0 %v1414
    %v1432 = vpop.xlane.xlu0 %1431
    %v1433 = vmul.f32 %v1418, 0.03125
    %v1434 = vmul.f32 %v1420, 0.03125
    %v1435 = vmul.f32 %v1422, 0.03125
    %v1436 = vmul.f32 %v1424, 0.03125
    %v1437 = vmul.f32 %v1426, 0.03125
    %v1438 = vmul.f32 %v1428, 0.03125
    %v1439 = vmul.f32 %v1430, 0.03125
    %v1440 = vmul.f32 %v1432, 0.03125
    %v1441 = vmul.f32 %v1407, %v1407
    %v1442 = vmul.f32 %v1408, %v1408
    %v1443 = vmul.f32 %v1409, %v1409
    %v1444 = vmul.f32 %v1410, %v1410
    %v1445 = vmul.f32 %v1411, %v1411
    %v1446 = vmul.f32 %v1412, %v1412
    %v1447 = vmul.f32 %v1413, %v1413
    %v1448 = vmul.f32 %v1414, %v1414
    %1449 = vadd.xlane.f32.xlu0 %v1441
    %v1450 = vpop.xlane.xlu0 %1449
    %1451 = vadd.xlane.f32.xlu0 %v1442
    %v1452 = vpop.xlane.xlu0 %1451
    %1453 = vadd.xlane.f32.xlu0 %v1443
    %v1454 = vpop.xlane.xlu0 %1453
    %1455 = vadd.xlane.f32.xlu0 %v1444
    %v1456 = vpop.xlane.xlu0 %1455
    %1457 = vadd.xlane.f32.xlu0 %v1445
    %v1458 = vpop.xlane.xlu0 %1457
    %1459 = vadd.xlane.f32.xlu0 %v1446
    %v1460 = vpop.xlane.xlu0 %1459
    %1461 = vadd.xlane.f32.xlu0 %v1447
    %v1462 = vpop.xlane.xlu0 %1461
    %1463 = vadd.xlane.f32.xlu0 %v1448
    %v1464 = vpop.xlane.xlu0 %1463
    %v1465 = vmul.f32 %v1450, 0.03125
    %v1466 = vmul.f32 %v1452, 0.03125
    %v1467 = vmul.f32 %v1454, 0.03125
    %v1468 = vmul.f32 %v1456, 0.03125
    %v1469 = vmul.f32 %v1458, 0.03125
    %v1470 = vmul.f32 %v1460, 0.03125
    %v1471 = vmul.f32 %v1462, 0.03125
    %v1472 = vmul.f32 %v1464, 0.03125
    %v1473 = vmul.f32 %v1433, %v1433
    %v1474 = vmul.f32 %v1434, %v1434
    %v1475 = vmul.f32 %v1435, %v1435
    %v1476 = vmul.f32 %v1436, %v1436
    %v1477 = vmul.f32 %v1437, %v1437
    %v1478 = vmul.f32 %v1438, %v1438
    %v1479 = vmul.f32 %v1439, %v1439
    %v1480 = vmul.f32 %v1440, %v1440
    %v1481 = vsub.f32 %v1465, %v1473
    %v1482 = vsub.f32 %v1466, %v1474
    %v1483 = vsub.f32 %v1467, %v1475
    %v1484 = vsub.f32 %v1468, %v1476
    %v1485 = vsub.f32 %v1469, %v1477
    %v1486 = vsub.f32 %v1470, %v1478
    %v1487 = vsub.f32 %v1471, %v1479
    %v1488 = vsub.f32 %v1472, %v1480
    %v1489 = vadd.f32 %v1481, 1e-05
    %v1490 = vadd.f32 %v1482, 1e-05
    %v1491 = vadd.f32 %v1483, 1e-05
    %v1492 = vadd.f32 %v1484, 1e-05
    %v1493 = vadd.f32 %v1485, 1e-05
    %v1494 = vadd.f32 %v1486, 1e-05
    %v1495 = vadd.f32 %v1487, 1e-05
    %v1496 = vadd.f32 %v1488, 1e-05
    %v1497 = vrsqrt.pop %v1489
    %v1498 = vrsqrt.pop %v1490
    %v1499 = vrsqrt.pop %v1491
    %v1500 = vrsqrt.pop %v1492
    %v1501 = vrsqrt.pop %v1493
    %v1502 = vrsqrt.pop %v1494
    %v1503 = vrsqrt.pop %v1495
    %v1504 = vrsqrt.pop %v1496
    %v1505 = vsub.f32 %v1407, %v1433
    %v1506 = vsub.f32 %v1408, %v1434
    %v1507 = vsub.f32 %v1409, %v1435
    %v1508 = vsub.f32 %v1410, %v1436
    %v1509 = vsub.f32 %v1411, %v1437
    %v1510 = vsub.f32 %v1412, %v1438
    %v1511 = vsub.f32 %v1413, %v1439
    %v1512 = vsub.f32 %v1414, %v1440
    %v1513 = vmul.f32 %v1505, %v1497
    %v1514 = vmul.f32 %v1506, %v1498
    %v1515 = vmul.f32 %v1507, %v1499
    %v1516 = vmul.f32 %v1508, %v1500
    %v1517 = vmul.f32 %v1509, %v1501
    %v1518 = vmul.f32 %v1510, %v1502
    %v1519 = vmul.f32 %v1511, %v1503
    %v1520 = vmul.f32 %v1512, %v1504
    %v1522 = vlaneseq
    %v1523 = vshrl.u32 %v1522, 7
    %v1524 = vsub.s32 0, %v1523
    %v1525 = vrot.slane %v1415, %v1524
    %v1527 = vmul.f32 %v1513, %v1525
    %v1528 = vmul.f32 %v1514, %v1525
    %v1529 = vmul.f32 %v1515, %v1525
    %v1530 = vmul.f32 %v1516, %v1525
    %v1531 = vmul.f32 %v1517, %v1525
    %v1532 = vmul.f32 %v1518, %v1525
    %v1533 = vmul.f32 %v1519, %v1525
    %v1534 = vmul.f32 %v1520, %v1525
    %v1536 = vlaneseq
    %v1537 = vshrl.u32 %v1536, 7
    %v1538 = vsub.s32 0, %v1537
    %v1539 = vrot.slane %v1416, %v1538
    %v1541 = vadd.f32 %v1527, %v1539
    %v1542 = vadd.f32 %v1528, %v1539
    %v1543 = vadd.f32 %v1529, %v1539
    %v1544 = vadd.f32 %v1530, %v1539
    %v1545 = vadd.f32 %v1531, %v1539
    %v1546 = vadd.f32 %v1532, %v1539
    %v1547 = vadd.f32 %v1533, %v1539
    %v1548 = vadd.f32 %v1534, %v1539
    %v1549 = vld [vmem:[%s11] sm:$0xf]
    %v1550 = vld [vmem:[%s11 + $0x4] sm:$0xf]
    %v1551 = vld [vmem:[%s11 + $0x8] sm:$0xf]
    %v1552 = vld [vmem:[%s11 + $0xc] sm:$0xf]
    %v1553 = vld [vmem:[%s11 + $0x10] sm:$0xf]
    %v1554 = vld [vmem:[%s11 + $0x14] sm:$0xf]
    %v1555 = vld [vmem:[%s11 + $0x18] sm:$0xf]
    %v1556 = vld [vmem:[%s11 + $0x1c] sm:$0xf]
    %v1557 = vld [vmem:[%s11 + $0x20] sm:$0xf]
    %v1558 = vld [vmem:[%s11 + $0x24] sm:$0xf]
    %v1559 = vld [vmem:[%s11 + $0x28] sm:$0xf]
    %v1560 = vld [vmem:[%s11 + $0x2c] sm:$0xf]
    %v1561 = vld [vmem:[%s11 + $0x30] sm:$0xf]
    %v1562 = vld [vmem:[%s11 + $0x34] sm:$0xf]
    %v1563 = vld [vmem:[%s11 + $0x38] sm:$0xf]
    %v1564 = vld [vmem:[%s11 + $0x3c] sm:$0xf]
    %v1565 = vpack.c.bf16 %v1542, %v1541
    %v1566 = vpack.c.bf16 %v1544, %v1543
    %v1567 = vpack.c.bf16 %v1546, %v1545
    %v1568 = vpack.c.bf16 %v1548, %v1547
    %v1569 = vld [vmem:[%s12] sm:$0x1]
    %v1571 = vlaneseq
    %v1572 = vshrl.u32 %v1571, 7
    %v1573 = vsub.s32 0, %v1572
    %v1574 = vrot.slane %v1569, %v1573
    %v1592 = vunpack.c.l.b16 %v1549
    %v1593 = vunpack.c.l.b16 %v1550
    %v1594 = vunpack.c.l.b16 %v1551
    %v1595 = vunpack.c.l.b16 %v1552
    %v1596 = vunpack.c.l.b16 %v1553
    %v1597 = vunpack.c.l.b16 %v1554
    %v1598 = vunpack.c.l.b16 %v1555
    %v1599 = vunpack.c.l.b16 %v1556
    %v1600 = vunpack.c.l.b16 %v1557
    %v1601 = vunpack.c.l.b16 %v1558
    %v1602 = vunpack.c.l.b16 %v1559
    %v1603 = vunpack.c.l.b16 %v1560
    %v1604 = vunpack.c.l.b16 %v1561
    %v1605 = vunpack.c.l.b16 %v1562
    %v1606 = vunpack.c.l.b16 %v1563
    %v1607 = vunpack.c.l.b16 %v1564
    %v1608 = vpack.c.b16 %v1593, %v1592
    %v1609 = vpack.c.b16 %v1595, %v1594
    %v1610 = vpack.c.b16 %v1597, %v1596
    %v1611 = vpack.c.b16 %v1599, %v1598
    %v1612 = vpack.c.b16 %v1601, %v1600
    %v1613 = vpack.c.b16 %v1603, %v1602
    %v1614 = vpack.c.b16 %v1605, %v1604
    %v1615 = vpack.c.b16 %v1607, %v1606
    %1624 = vmatprep.subr.bf16.mxu0 0
    %1625 = vmatpush1.bf16.msra.mxu0 %v1608
    %1626 = vmatprep.subr.bf16.mxu0 0
    %1627 = vmatpush1.bf16.msra.mxu0 %v1609
    %1628 = vmatprep.subr.bf16.mxu0 0
    %1629 = vmatpush1.bf16.msra.mxu0 %v1610
    %1630 = vmatprep.subr.bf16.mxu0 0
    %1631 = vmatpush1.bf16.msra.mxu0 %v1611
    %1632 = vmatprep.subr.bf16.mxu0 0
    %1633 = vmatpush1.bf16.msra.mxu0 %v1612
    %1634 = vmatprep.subr.bf16.mxu0 0
    %1635 = vmatpush1.bf16.msra.mxu0 %v1613
    %1636 = vmatprep.subr.bf16.mxu0 0
    %1637 = vmatpush1.bf16.msra.mxu0 %v1614
    %1638 = vmatprep.subr.bf16.mxu0 0
    %1639 = vmatpush1.bf16.msra.mxu0 %v1615
    %1640 = vmatprep.subr.bf16.mxu0 0
    %1641 = vmatpush1.bf16.msra.mxu0 0
    %1642 = vmatprep.subr.bf16.mxu0 0
    %1643 = vmatpush1.bf16.msra.mxu0 0
    %1644 = vmatprep.subr.bf16.mxu0 0
    %1645 = vmatpush1.bf16.msra.mxu0 0
    %1646 = vmatprep.subr.bf16.mxu0 0
    %1647 = vmatpush1.bf16.msra.mxu0 0
    %1648 = vmatprep.subr.bf16.mxu0 0
    %1649 = vmatpush1.bf16.msra.mxu0 0
    %1650 = vmatprep.subr.bf16.mxu0 0
    %1651 = vmatpush1.bf16.msra.mxu0 0
    %1652 = vmatprep.subr.bf16.mxu0 0
    %1653 = vmatpush1.bf16.msra.mxu0 0
    %1654 = vmatprep.subr.bf16.mxu0 0
    %1655 = vmatpush1.bf16.msra.mxu0 0
    %1656 = vmatprep.mubr.bf16.mxu0 0
    %1657 = vmatmul.mubr.bf16.gmra.mrb[0].mxu0 %v1565
    %v1658 = vpop.f32.mrb[0].mxu0
    %v1659 = vadd.f32 %v1574, %v1658
    %v1660 = vpop.f32.mrb[0].mxu0
    %v1661 = vpop.f32.mrb[0].mxu0
    %v1662 = vadd.f32 %v1574, %v1661
    %v1663 = vpop.f32.mrb[0].mxu0
    %1664 = vmatprep.mubr.bf16.mxu0 0
    %1665 = vmatmul.mubr.bf16.gmra.mrb[0].mxu0 %v1566
    %v1666 = vpop.f32.mrb[0].mxu0
    %v1667 = vadd.f32 %v1574, %v1666
    %v1668 = vpop.f32.mrb[0].mxu0
    %v1669 = vpop.f32.mrb[0].mxu0
    %v1670 = vadd.f32 %v1574, %v1669
    %v1671 = vpop.f32.mrb[0].mxu0
    %1672 = vmatprep.mubr.bf16.mxu0 0
    %1673 = vmatmul.mubr.bf16.gmra.mrb[0].mxu0 %v1567
    %v1674 = vpop.f32.mrb[0].mxu0
    %v1675 = vadd.f32 %v1574, %v1674
    %v1676 = vpop.f32.mrb[0].mxu0
    %v1677 = vpop.f32.mrb[0].mxu0
    %v1678 = vadd.f32 %v1574, %v1677
    %v1679 = vpop.f32.mrb[0].mxu0
    %1680 = vmatprep.mubr.bf16.mxu0 0
    %1681 = vmatmul.mubr.bf16.gmra.mrb[0].mxu0 %v1568
    %v1682 = vpop.f32.mrb[0].mxu0
    %v1683 = vadd.f32 %v1574, %v1682
    %v1684 = vpop.f32.mrb[0].mxu0
    %v1685 = vpop.f32.mrb[0].mxu0
    %v1686 = vadd.f32 %v1574, %v1685
    %v1687 = vpop.f32.mrb[0].mxu0
    %1688 = vdwg.mxu0
    %v1689 = vmul.f32 %v1659, 0.5
    %v1690 = vmul.f32 %v1662, 0.5
    %v1691 = vmul.f32 %v1667, 0.5
    %v1692 = vmul.f32 %v1670, 0.5
    %v1693 = vmul.f32 %v1675, 0.5
    %v1694 = vmul.f32 %v1678, 0.5
    %v1695 = vmul.f32 %v1683, 0.5
    %v1696 = vmul.f32 %v1686, 0.5
    %v1697 = vmul.f32 %v1659, 0.70710677
    %v1698 = vmul.f32 %v1662, 0.70710677
    %v1699 = vmul.f32 %v1667, 0.70710677
    %v1700 = vmul.f32 %v1670, 0.70710677
    %v1701 = vmul.f32 %v1675, 0.70710677
    %v1702 = vmul.f32 %v1678, 0.70710677
    %v1703 = vmul.f32 %v1683, 0.70710677
    %v1704 = vmul.f32 %v1686, 0.70710677
    %v1705 = verf.f32.pop %v1697
    %v1706 = verf.f32.pop %v1698
    %v1707 = verf.f32.pop %v1699
    %v1708 = verf.f32.pop %v1700
    %v1709 = verf.f32.pop %v1701
    %v1710 = verf.f32.pop %v1702
    %v1711 = verf.f32.pop %v1703
    %v1712 = verf.f32.pop %v1704
    %v1713 = vadd.f32 %v1705, 1.0
    %v1714 = vadd.f32 %v1706, 1.0
    %v1715 = vadd.f32 %v1707, 1.0
    %v1716 = vadd.f32 %v1708, 1.0
    %v1717 = vadd.f32 %v1709, 1.0
    %v1718 = vadd.f32 %v1710, 1.0
    %v1719 = vadd.f32 %v1711, 1.0
    %v1720 = vadd.f32 %v1712, 1.0
    %v1721 = vmul.f32 %v1689, %v1713
    %v1722 = vmul.f32 %v1690, %v1714
    %v1723 = vmul.f32 %v1691, %v1715
    %v1724 = vmul.f32 %v1692, %v1716
    %v1725 = vmul.f32 %v1693, %v1717
    %v1726 = vmul.f32 %v1694, %v1718
    %v1727 = vmul.f32 %v1695, %v1719
    %v1728 = vmul.f32 %v1696, %v1720
    %v1729 = vld [vmem:[%s13] sm:$0xf]
    %v1730 = vld [vmem:[%s13 + $0x4] sm:$0xf]
    %v1731 = vld [vmem:[%s13 + $0x8] sm:$0xf]
    %v1732 = vld [vmem:[%s13 + $0xc] sm:$0xf]
    %v1733 = vld [vmem:[%s13 + $0x10] sm:$0xf]
    %v1734 = vld [vmem:[%s13 + $0x14] sm:$0xf]
    %v1735 = vld [vmem:[%s13 + $0x18] sm:$0xf]
    %v1736 = vld [vmem:[%s13 + $0x1c] sm:$0xf]
    %v1737 = vld [vmem:[%s13 + $0x20] sm:$0xf]
    %v1738 = vld [vmem:[%s13 + $0x24] sm:$0xf]
    %v1739 = vld [vmem:[%s13 + $0x28] sm:$0xf]
    %v1740 = vld [vmem:[%s13 + $0x2c] sm:$0xf]
    %v1741 = vld [vmem:[%s13 + $0x30] sm:$0xf]
    %v1742 = vld [vmem:[%s13 + $0x34] sm:$0xf]
    %v1743 = vld [vmem:[%s13 + $0x38] sm:$0xf]
    %v1744 = vld [vmem:[%s13 + $0x3c] sm:$0xf]
    %v1745 = vpack.c.bf16 %v1722, %v1721
    %v1746 = vpack.c.bf16 %v1724, %v1723
    %v1747 = vpack.c.bf16 %v1726, %v1725
    %v1748 = vpack.c.bf16 %v1728, %v1727
    %v1765 = vunpack.c.l.b16 %v1729
    %v1766 = vunpack.c.l.b16 %v1730
    %v1767 = vunpack.c.l.b16 %v1731
    %v1768 = vunpack.c.l.b16 %v1732
    %v1769 = vunpack.c.l.b16 %v1733
    %v1770 = vunpack.c.l.b16 %v1734
    %v1771 = vunpack.c.l.b16 %v1735
    %v1772 = vunpack.c.l.b16 %v1736
    %v1773 = vunpack.c.l.b16 %v1737
    %v1774 = vunpack.c.l.b16 %v1738
    %v1775 = vunpack.c.l.b16 %v1739
    %v1776 = vunpack.c.l.b16 %v1740
    %v1777 = vunpack.c.l.b16 %v1741
    %v1778 = vunpack.c.l.b16 %v1742
    %v1779 = vunpack.c.l.b16 %v1743
    %v1780 = vunpack.c.l.b16 %v1744
    %v1781 = vpack.c.b16 %v1766, %v1765
    %v1782 = vpack.c.b16 %v1768, %v1767
    %v1783 = vpack.c.b16 %v1770, %v1769
    %v1784 = vpack.c.b16 %v1772, %v1771
    %v1785 = vpack.c.b16 %v1774, %v1773
    %v1786 = vpack.c.b16 %v1776, %v1775
    %v1787 = vpack.c.b16 %v1778, %v1777
    %v1788 = vpack.c.b16 %v1780, %v1779
    %1797 = vmatprep.subr.bf16.mxu0 0
    %1798 = vmatpush1.bf16.msra.mxu0 %v1781
    %1799 = vmatprep.subr.bf16.mxu0 0
    %1800 = vmatpush1.bf16.msra.mxu0 %v1782
    %1801 = vmatprep.subr.bf16.mxu0 0
    %1802 = vmatpush1.bf16.msra.mxu0 %v1783
    %1803 = vmatprep.subr.bf16.mxu0 0
    %1804 = vmatpush1.bf16.msra.mxu0 %v1784
    %1805 = vmatprep.subr.bf16.mxu0 0
    %1806 = vmatpush1.bf16.msra.mxu0 %v1785
    %1807 = vmatprep.subr.bf16.mxu0 0
    %1808 = vmatpush1.bf16.msra.mxu0 %v1786
    %1809 = vmatprep.subr.bf16.mxu0 0
    %1810 = vmatpush1.bf16.msra.mxu0 %v1787
    %1811 = vmatprep.subr.bf16.mxu0 0
    %1812 = vmatpush1.bf16.msra.mxu0 %v1788
    %1813 = vmatprep.subr.bf16.mxu0 0
    %1814 = vmatpush1.bf16.msra.mxu0 0
    %1815 = vmatprep.subr.bf16.mxu0 0
    %1816 = vmatpush1.bf16.msra.mxu0 0
    %1817 = vmatprep.subr.bf16.mxu0 0
    %1818 = vmatpush1.bf16.msra.mxu0 0
    %1819 = vmatprep.subr.bf16.mxu0 0
    %1820 = vmatpush1.bf16.msra.mxu0 0
    %1821 = vmatprep.subr.bf16.mxu0 0
    %1822 = vmatpush1.bf16.msra.mxu0 0
    %1823 = vmatprep.subr.bf16.mxu0 0
    %1824 = vmatpush1.bf16.msra.mxu0 0
    %1825 = vmatprep.subr.bf16.mxu0 0
    %1826 = vmatpush1.bf16.msra.mxu0 0
    %1827 = vmatprep.subr.bf16.mxu0 0
    %1828 = vmatpush1.bf16.msra.mxu0 0
    %1829 = vmatprep.mubr.bf16.mxu0 0
    %1830 = vmatmul.mubr.bf16.gmra.mrb[0].mxu0 %v1745
    %v1831 = vpop.f32.mrb[0].mxu0
    %v1832 = vadd.f32 0.0, %v1831
    %v1833 = vpop.f32.mrb[0].mxu0
    %v1834 = vpop.f32.mrb[0].mxu0
    %v1835 = vadd.f32 0.0, %v1834
    %v1836 = vpop.f32.mrb[0].mxu0
    %1837 = vmatprep.mubr.bf16.mxu0 0
    %1838 = vmatmul.mubr.bf16.gmra.mrb[0].mxu0 %v1746
    %v1839 = vpop.f32.mrb[0].mxu0
    %v1840 = vadd.f32 0.0, %v1839
    %v1841 = vpop.f32.mrb[0].mxu0
    %v1842 = vpop.f32.mrb[0].mxu0
    %v1843 = vadd.f32 0.0, %v1842
    %v1844 = vpop.f32.mrb[0].mxu0
    %1845 = vmatprep.mubr.bf16.mxu0 0
    %1846 = vmatmul.mubr.bf16.gmra.mrb[0].mxu0 %v1747
    %v1847 = vpop.f32.mrb[0].mxu0
    %v1848 = vadd.f32 0.0, %v1847
    %v1849 = vpop.f32.mrb[0].mxu0
    %v1850 = vpop.f32.mrb[0].mxu0
    %v1851 = vadd.f32 0.0, %v1850
    %v1852 = vpop.f32.mrb[0].mxu0
    %1853 = vmatprep.mubr.bf16.mxu0 0
    %1854 = vmatmul.mubr.bf16.gmra.mrb[0].mxu0 %v1748
    %v1855 = vpop.f32.mrb[0].mxu0
    %v1856 = vadd.f32 0.0, %v1855
    %v1857 = vpop.f32.mrb[0].mxu0
    %v1858 = vpop.f32.mrb[0].mxu0
    %v1859 = vadd.f32 0.0, %v1858
    %v1860 = vpop.f32.mrb[0].mxu0
    %1861 = vdwg.mxu0
    %v1862 = vadd.f32 %v1407, %v1832
    %v1863 = vadd.f32 %v1408, %v1835
    %v1864 = vadd.f32 %v1409, %v1840
    %v1865 = vadd.f32 %v1410, %v1843
    %v1866 = vadd.f32 %v1411, %v1848
    %v1867 = vadd.f32 %v1412, %v1851
    %v1868 = vadd.f32 %v1413, %v1856
    %v1869 = vadd.f32 %v1414, %v1859
    %v1870 = vld [vmem:[%s14] sm:$0x1]
    %v1872 = vlaneseq
    %v1873 = vshrl.u32 %v1872, 7
    %v1874 = vsub.s32 0, %v1873
    %v1875 = vrot.slane %v1870, %v1874
    %v1877 = vadd.f32 %v1862, %v1875
    %v1878 = vadd.f32 %v1863, %v1875
    %v1879 = vadd.f32 %v1864, %v1875
    %v1880 = vadd.f32 %v1865, %v1875
    %v1881 = vadd.f32 %v1866, %v1875
    %v1882 = vadd.f32 %v1867, %v1875
    %v1883 = vadd.f32 %v1868, %v1875
    %v1884 = vadd.f32 %v1869, %v1875
    %s1885 = scalar_lea.vmem %s3, 1
    %v1886 = vld [vmem:[%s1885] sm:$0x1]
    %s1887 = scalar_lea.vmem %s4, 1
    %v1888 = vld [vmem:[%s1887] sm:$0x1]
    %1889 = vadd.xlane.f32.xlu0 %v1877
    %v1890 = vpop.xlane.xlu0 %1889
    %1891 = vadd.xlane.f32.xlu0 %v1878
    %v1892 = vpop.xlane.xlu0 %1891
    %1893 = vadd.xlane.f32.xlu0 %v1879
    %v1894 = vpop.xlane.xlu0 %1893
    %1895 = vadd.xlane.f32.xlu0 %v1880
    %v1896 = vpop.xlane.xlu0 %1895
    %1897 = vadd.xlane.f32.xlu0 %v1881
    %v1898 = vpop.xlane.xlu0 %1897
    %1899 = vadd.xlane.f32.xlu0 %v1882
    %v1900 = vpop.xlane.xlu0 %1899
    %1901 = vadd.xlane.f32.xlu0 %v1883
    %v1902 = vpop.xlane.xlu0 %1901
    %1903 = vadd.xlane.f32.xlu0 %v1884
    %v1904 = vpop.xlane.xlu0 %1903
    %v1905 = vmul.f32 %v1890, 0.03125
    %v1906 = vmul.f32 %v1892, 0.03125
    %v1907 = vmul.f32 %v1894, 0.03125
    %v1908 = vmul.f32 %v1896, 0.03125
    %v1909 = vmul.f32 %v1898, 0.03125
    %v1910 = vmul.f32 %v1900, 0.03125
    %v1911 = vmul.f32 %v1902, 0.03125
    %v1912 = vmul.f32 %v1904, 0.03125
    %v1913 = vmul.f32 %v1877, %v1877
    %v1914 = vmul.f32 %v1878, %v1878
    %v1915 = vmul.f32 %v1879, %v1879
    %v1916 = vmul.f32 %v1880, %v1880
    %v1917 = vmul.f32 %v1881, %v1881
    %v1918 = vmul.f32 %v1882, %v1882
    %v1919 = vmul.f32 %v1883, %v1883
    %v1920 = vmul.f32 %v1884, %v1884
    %1921 = vadd.xlane.f32.xlu0 %v1913
    %v1922 = vpop.xlane.xlu0 %1921
    %1923 = vadd.xlane.f32.xlu0 %v1914
    %v1924 = vpop.xlane.xlu0 %1923
    %1925 = vadd.xlane.f32.xlu0 %v1915
    %v1926 = vpop.xlane.xlu0 %1925
    %1927 = vadd.xlane.f32.xlu0 %v1916
    %v1928 = vpop.xlane.xlu0 %1927
    %1929 = vadd.xlane.f32.xlu0 %v1917
    %v1930 = vpop.xlane.xlu0 %1929
    %1931 = vadd.xlane.f32.xlu0 %v1918
    %v1932 = vpop.xlane.xlu0 %1931
    %1933 = vadd.xlane.f32.xlu0 %v1919
    %v1934 = vpop.xlane.xlu0 %1933
    %1935 = vadd.xlane.f32.xlu0 %v1920
    %v1936 = vpop.xlane.xlu0 %1935
    %v1937 = vmul.f32 %v1922, 0.03125
    %v1938 = vmul.f32 %v1924, 0.03125
    %v1939 = vmul.f32 %v1926, 0.03125
    %v1940 = vmul.f32 %v1928, 0.03125
    %v1941 = vmul.f32 %v1930, 0.03125
    %v1942 = vmul.f32 %v1932, 0.03125
    %v1943 = vmul.f32 %v1934, 0.03125
    %v1944 = vmul.f32 %v1936, 0.03125
    %v1945 = vmul.f32 %v1905, %v1905
    %v1946 = vmul.f32 %v1906, %v1906
    %v1947 = vmul.f32 %v1907, %v1907
    %v1948 = vmul.f32 %v1908, %v1908
    %v1949 = vmul.f32 %v1909, %v1909
    %v1950 = vmul.f32 %v1910, %v1910
    %v1951 = vmul.f32 %v1911, %v1911
    %v1952 = vmul.f32 %v1912, %v1912
    %v1953 = vsub.f32 %v1937, %v1945
    %v1954 = vsub.f32 %v1938, %v1946
    %v1955 = vsub.f32 %v1939, %v1947
    %v1956 = vsub.f32 %v1940, %v1948
    %v1957 = vsub.f32 %v1941, %v1949
    %v1958 = vsub.f32 %v1942, %v1950
    %v1959 = vsub.f32 %v1943, %v1951
    %v1960 = vsub.f32 %v1944, %v1952
    %v1961 = vadd.f32 %v1953, 1e-05
    %v1962 = vadd.f32 %v1954, 1e-05
    %v1963 = vadd.f32 %v1955, 1e-05
    %v1964 = vadd.f32 %v1956, 1e-05
    %v1965 = vadd.f32 %v1957, 1e-05
    %v1966 = vadd.f32 %v1958, 1e-05
    %v1967 = vadd.f32 %v1959, 1e-05
    %v1968 = vadd.f32 %v1960, 1e-05
    %v1969 = vrsqrt.pop %v1961
    %v1970 = vrsqrt.pop %v1962
    %v1971 = vrsqrt.pop %v1963
    %v1972 = vrsqrt.pop %v1964
    %v1973 = vrsqrt.pop %v1965
    %v1974 = vrsqrt.pop %v1966
    %v1975 = vrsqrt.pop %v1967
    %v1976 = vrsqrt.pop %v1968
    %v1977 = vsub.f32 %v1877, %v1905
    %v1978 = vsub.f32 %v1878, %v1906
    %v1979 = vsub.f32 %v1879, %v1907
    %v1980 = vsub.f32 %v1880, %v1908
    %v1981 = vsub.f32 %v1881, %v1909
    %v1982 = vsub.f32 %v1882, %v1910
    %v1983 = vsub.f32 %v1883, %v1911
    %v1984 = vsub.f32 %v1884, %v1912
    %v1985 = vmul.f32 %v1977, %v1969
    %v1986 = vmul.f32 %v1978, %v1970
    %v1987 = vmul.f32 %v1979, %v1971
    %v1988 = vmul.f32 %v1980, %v1972
    %v1989 = vmul.f32 %v1981, %v1973
    %v1990 = vmul.f32 %v1982, %v1974
    %v1991 = vmul.f32 %v1983, %v1975
    %v1992 = vmul.f32 %v1984, %v1976
    %v1994 = vlaneseq
    %v1995 = vshrl.u32 %v1994, 7
    %v1996 = vsub.s32 0, %v1995
    %v1997 = vrot.slane %v1886, %v1996
    %v1999 = vmul.f32 %v1985, %v1997
    %v2000 = vmul.f32 %v1986, %v1997
    %v2001 = vmul.f32 %v1987, %v1997
    %v2002 = vmul.f32 %v1988, %v1997
    %v2003 = vmul.f32 %v1989, %v1997
    %v2004 = vmul.f32 %v1990, %v1997
    %v2005 = vmul.f32 %v1991, %v1997
    %v2006 = vmul.f32 %v1992, %v1997
    %v2008 = vlaneseq
    %v2009 = vshrl.u32 %v2008, 7
    %v2010 = vsub.s32 0, %v2009
    %v2011 = vrot.slane %v1888, %v2010
    %v2013 = vadd.f32 %v1999, %v2011
    %v2014 = vadd.f32 %v2000, %v2011
    %v2015 = vadd.f32 %v2001, %v2011
    %v2016 = vadd.f32 %v2002, %v2011
    %v2017 = vadd.f32 %v2003, %v2011
    %v2018 = vadd.f32 %v2004, %v2011
    %v2019 = vadd.f32 %v2005, %v2011
    %v2020 = vadd.f32 %v2006, %v2011
    %s2021 = scalar_lea.vmem %s5, 64
    %v2022 = vld [vmem:[%s2021] sm:$0xf]
    %v2023 = vld [vmem:[%s2021 + $0x4] sm:$0xf]
    %v2024 = vld [vmem:[%s2021 + $0x8] sm:$0xf]
    %v2025 = vld [vmem:[%s2021 + $0xc] sm:$0xf]
    %v2026 = vld [vmem:[%s2021 + $0x10] sm:$0xf]
    %v2027 = vld [vmem:[%s2021 + $0x14] sm:$0xf]
    %v2028 = vld [vmem:[%s2021 + $0x18] sm:$0xf]
    %v2029 = vld [vmem:[%s2021 + $0x1c] sm:$0xf]
    %v2030 = vld [vmem:[%s2021 + $0x20] sm:$0xf]
    %v2031 = vld [vmem:[%s2021 + $0x24] sm:$0xf]
    %v2032 = vld [vmem:[%s2021 + $0x28] sm:$0xf]
    %v2033 = vld [vmem:[%s2021 + $0x2c] sm:$0xf]
    %v2034 = vld [vmem:[%s2021 + $0x30] sm:$0xf]
    %v2035 = vld [vmem:[%s2021 + $0x34] sm:$0xf]
    %v2036 = vld [vmem:[%s2021 + $0x38] sm:$0xf]
    %v2037 = vld [vmem:[%s2021 + $0x3c] sm:$0xf]
    %v2038 = vpack.c.bf16 %v2014, %v2013
    %v2039 = vpack.c.bf16 %v2016, %v2015
    %v2040 = vpack.c.bf16 %v2018, %v2017
    %v2041 = vpack.c.bf16 %v2020, %v2019
    %s2042 = scalar_lea.vmem %s6, 1
    %v2043 = vld [vmem:[%s2042] sm:$0x1]
    %v2045 = vlaneseq
    %v2046 = vshrl.u32 %v2045, 7
    %v2047 = vsub.s32 0, %v2046
    %v2048 = vrot.slane %v2043, %v2047
    %v2066 = vunpack.c.l.b16 %v2022
    %v2067 = vunpack.c.l.b16 %v2023
    %v2068 = vunpack.c.l.b16 %v2024
    %v2069 = vunpack.c.l.b16 %v2025
    %v2070 = vunpack.c.l.b16 %v2026
    %v2071 = vunpack.c.l.b16 %v2027
    %v2072 = vunpack.c.l.b16 %v2028
    %v2073 = vunpack.c.l.b16 %v2029
    %v2074 = vunpack.c.l.b16 %v2030
    %v2075 = vunpack.c.l.b16 %v2031
    %v2076 = vunpack.c.l.b16 %v2032
    %v2077 = vunpack.c.l.b16 %v2033
    %v2078 = vunpack.c.l.b16 %v2034
    %v2079 = vunpack.c.l.b16 %v2035
    %v2080 = vunpack.c.l.b16 %v2036
    %v2081 = vunpack.c.l.b16 %v2037
    %v2082 = vpack.c.b16 %v2067, %v2066
    %v2083 = vpack.c.b16 %v2069, %v2068
    %v2084 = vpack.c.b16 %v2071, %v2070
    %v2085 = vpack.c.b16 %v2073, %v2072
    %v2086 = vpack.c.b16 %v2075, %v2074
    %v2087 = vpack.c.b16 %v2077, %v2076
    %v2088 = vpack.c.b16 %v2079, %v2078
    %v2089 = vpack.c.b16 %v2081, %v2080
    %2098 = vmatprep.subr.bf16.mxu0 0
    %2099 = vmatpush1.bf16.msra.mxu0 %v2082
    %2100 = vmatprep.subr.bf16.mxu0 0
    %2101 = vmatpush1.bf16.msra.mxu0 %v2083
    %2102 = vmatprep.subr.bf16.mxu0 0
    %2103 = vmatpush1.bf16.msra.mxu0 %v2084
    %2104 = vmatprep.subr.bf16.mxu0 0
    %2105 = vmatpush1.bf16.msra.mxu0 %v2085
    %2106 = vmatprep.subr.bf16.mxu0 0
    %2107 = vmatpush1.bf16.msra.mxu0 %v2086
    %2108 = vmatprep.subr.bf16.mxu0 0
    %2109 = vmatpush1.bf16.msra.mxu0 %v2087
    %2110 = vmatprep.subr.bf16.mxu0 0
    %2111 = vmatpush1.bf16.msra.mxu0 %v2088
    %2112 = vmatprep.subr.bf16.mxu0 0
    %2113 = vmatpush1.bf16.msra.mxu0 %v2089
    %2114 = vmatprep.subr.bf16.mxu0 0
    %2115 = vmatpush1.bf16.msra.mxu0 0
    %2116 = vmatprep.subr.bf16.mxu0 0
    %2117 = vmatpush1.bf16.msra.mxu0 0
    %2118 = vmatprep.subr.bf16.mxu0 0
    %2119 = vmatpush1.bf16.msra.mxu0 0
    %2120 = vmatprep.subr.bf16.mxu0 0
    %2121 = vmatpush1.bf16.msra.mxu0 0
    %2122 = vmatprep.subr.bf16.mxu0 0
    %2123 = vmatpush1.bf16.msra.mxu0 0
    %2124 = vmatprep.subr.bf16.mxu0 0
    %2125 = vmatpush1.bf16.msra.mxu0 0
    %2126 = vmatprep.subr.bf16.mxu0 0
    %2127 = vmatpush1.bf16.msra.mxu0 0
    %2128 = vmatprep.subr.bf16.mxu0 0
    %2129 = vmatpush1.bf16.msra.mxu0 0
    %2130 = vmatprep.mubr.bf16.mxu0 0
    %2131 = vmatmul.mubr.bf16.gmra.mrb[0].mxu0 %v2038
    %v2132 = vpop.f32.mrb[0].mxu0
    %v2133 = vadd.f32 %v2048, %v2132
    %v2134 = vpop.f32.mrb[0].mxu0
    %v2135 = vpop.f32.mrb[0].mxu0
    %v2136 = vadd.f32 %v2048, %v2135
    %v2137 = vpop.f32.mrb[0].mxu0
    %2138 = vmatprep.mubr.bf16.mxu0 0
    %2139 = vmatmul.mubr.bf16.gmra.mrb[0].mxu0 %v2039
    %v2140 = vpop.f32.mrb[0].mxu0
    %v2141 = vadd.f32 %v2048, %v2140
    %v2142 = vpop.f32.mrb[0].mxu0
    %v2143 = vpop.f32.mrb[0].mxu0
    %v2144 = vadd.f32 %v2048, %v2143
    %v2145 = vpop.f32.mrb[0].mxu0
    %2146 = vmatprep.mubr.bf16.mxu0 0
    %2147 = vmatmul.mubr.bf16.gmra.mrb[0].mxu0 %v2040
    %v2148 = vpop.f32.mrb[0].mxu0
    %v2149 = vadd.f32 %v2048, %v2148
    %v2150 = vpop.f32.mrb[0].mxu0
    %v2151 = vpop.f32.mrb[0].mxu0
    %v2152 = vadd.f32 %v2048, %v2151
    %v2153 = vpop.f32.mrb[0].mxu0
    %2154 = vmatprep.mubr.bf16.mxu0 0
    %2155 = vmatmul.mubr.bf16.gmra.mrb[0].mxu0 %v2041
    %v2156 = vpop.f32.mrb[0].mxu0
    %v2157 = vadd.f32 %v2048, %v2156
    %v2158 = vpop.f32.mrb[0].mxu0
    %v2159 = vpop.f32.mrb[0].mxu0
    %v2160 = vadd.f32 %v2048, %v2159
    %v2161 = vpop.f32.mrb[0].mxu0
    %2162 = vdwg.mxu0
    %v2163 = vpack.c.bf16 %v2136, %v2133
    %v2164 = vpack.c.bf16 %v2144, %v2141
    %v2165 = vpack.c.bf16 %v2152, %v2149
    %v2166 = vpack.c.bf16 %v2160, %v2157
    %2169 = vrot.lane.b32.xlu0 %v2163, 96
    %v2170 = vpop.permute.xlu0 %2169
    %2171 = vrot.lane.b32.xlu0 %v2164, 96
    %v2172 = vpop.permute.xlu0 %2171
    %v2174 = vsel %vm541, %v2163, 0
    %v2177 = vsel %vm541, %v2164, 0
    %v2180 = vsel %vm541, %v2170, 0
    %v2183 = vsel %vm541, %v2172, 0
    %2185 = vmatprep.subr.bf16.mxu0 0
    %2186 = vmatpush1.bf16.xpose.msra.mxu0 %v2180
    %2187 = vmatprep.subr.bf16.mxu0 0
    %2188 = vmatpush1.bf16.xpose.msra.mxu0 %v2183
    %2189 = vmatprep.subr.bf16.mxu0 0
    %2190 = vmatpush1.bf16.xpose.msra.mxu0 0
    %2191 = vmatprep.subr.bf16.mxu0 0
    %2192 = vmatpush1.bf16.xpose.msra.mxu0 0
    %2193 = vmatprep.subr.bf16.mxu0 0
    %2194 = vmatpush1.bf16.xpose.msra.mxu0 0
    %2195 = vmatprep.subr.bf16.mxu0 0
    %2196 = vmatpush1.bf16.xpose.msra.mxu0 0
    %2197 = vmatprep.subr.bf16.mxu0 0
    %2198 = vmatpush1.bf16.xpose.msra.mxu0 0
    %2199 = vmatprep.subr.bf16.mxu0 0
    %2200 = vmatpush1.bf16.xpose.msra.mxu0 0
    %2201 = vmatprep.subr.bf16.mxu0 0
    %2202 = vmatpush1.bf16.xpose.msra.mxu0 0
    %2203 = vmatprep.subr.bf16.mxu0 0
    %2204 = vmatpush1.bf16.xpose.msra.mxu0 0
    %2205 = vmatprep.subr.bf16.mxu0 0
    %2206 = vmatpush1.bf16.xpose.msra.mxu0 0
    %2207 = vmatprep.subr.bf16.mxu0 0
    %2208 = vmatpush1.bf16.xpose.msra.mxu0 0
    %2209 = vmatprep.subr.bf16.mxu0 0
    %2210 = vmatpush1.bf16.xpose.msra.mxu0 0
    %2211 = vmatprep.subr.bf16.mxu0 0
    %2212 = vmatpush1.bf16.xpose.msra.mxu0 0
    %2213 = vmatprep.subr.bf16.mxu0 0
    %2214 = vmatpush1.bf16.xpose.msra.mxu0 0
    %2215 = vmatprep.subr.bf16.mxu0 0
    %2216 = vmatpush1.bf16.xpose.msra.mxu0 0
    %2217 = vmatprep.mubr.bf16.mxu0 0
    %2218 = vmatmul.mubr.bf16.gmra.mrb[0].mxu0 %v2174
    %v2219 = vpop.f32.mrb[0].mxu0
    %v2220 = vadd.f32 0.0, %v2219
    %v2221 = vpop.f32.mrb[0].mxu0
    %v2222 = vpop.f32.mrb[0].mxu0
    %v2223 = vadd.f32 0.0, %v2222
    %v2224 = vpop.f32.mrb[0].mxu0
    %2225 = vmatprep.mubr.bf16.mxu0 0
    %2226 = vmatmul.mubr.bf16.gmra.mrb[0].mxu0 %v2177
    %v2227 = vpop.f32.mrb[0].mxu0
    %v2228 = vadd.f32 0.0, %v2227
    %v2229 = vpop.f32.mrb[0].mxu0
    %v2230 = vpop.f32.mrb[0].mxu0
    %v2231 = vadd.f32 0.0, %v2230
    %v2232 = vpop.f32.mrb[0].mxu0
    %2233 = vdwg.mxu0
    %2236 = vrot.lane.b32.xlu0 %v2165, 96
    %v2237 = vpop.permute.xlu0 %2236
    %2238 = vrot.lane.b32.xlu0 %v2166, 96
    %v2239 = vpop.permute.xlu0 %2238
    %v2241 = vsel %vm541, %v2165, 0
    %v2244 = vsel %vm541, %v2166, 0
    %v2247 = vsel %vm541, %v2237, 0
    %v2250 = vsel %vm541, %v2239, 0
    %2252 = vmatprep.subr.bf16.mxu0 0
    %2253 = vmatpush1.bf16.xpose.msra.mxu0 %v2247
    %2254 = vmatprep.subr.bf16.mxu0 0
    %2255 = vmatpush1.bf16.xpose.msra.mxu0 %v2250
    %2256 = vmatprep.subr.bf16.mxu0 0
    %2257 = vmatpush1.bf16.xpose.msra.mxu0 0
    %2258 = vmatprep.subr.bf16.mxu0 0
    %2259 = vmatpush1.bf16.xpose.msra.mxu0 0
    %2260 = vmatprep.subr.bf16.mxu0 0
    %2261 = vmatpush1.bf16.xpose.msra.mxu0 0
    %2262 = vmatprep.subr.bf16.mxu0 0
    %2263 = vmatpush1.bf16.xpose.msra.mxu0 0
    %2264 = vmatprep.subr.bf16.mxu0 0
    %2265 = vmatpush1.bf16.xpose.msra.mxu0 0
    %2266 = vmatprep.subr.bf16.mxu0 0
    %2267 = vmatpush1.bf16.xpose.msra.mxu0 0
    %2268 = vmatprep.subr.bf16.mxu0 0
    %2269 = vmatpush1.bf16.xpose.msra.mxu0 0
    %2270 = vmatprep.subr.bf16.mxu0 0
    %2271 = vmatpush1.bf16.xpose.msra.mxu0 0
    %2272 = vmatprep.subr.bf16.mxu0 0
    %2273 = vmatpush1.bf16.xpose.msra.mxu0 0
    %2274 = vmatprep.subr.bf16.mxu0 0
    %2275 = vmatpush1.bf16.xpose.msra.mxu0 0
    %2276 = vmatprep.subr.bf16.mxu0 0
    %2277 = vmatpush1.bf16.xpose.msra.mxu0 0
    %2278 = vmatprep.subr.bf16.mxu0 0
    %2279 = vmatpush1.bf16.xpose.msra.mxu0 0
    %2280 = vmatprep.subr.bf16.mxu0 0
    %2281 = vmatpush1.bf16.xpose.msra.mxu0 0
    %2282 = vmatprep.subr.bf16.mxu0 0
    %2283 = vmatpush1.bf16.xpose.msra.mxu0 0
    %2284 = vmatprep.mubr.bf16.mxu0 0
    %2285 = vmatmul.mubr.bf16.gmra.mrb[0].mxu0 %v2241
    %v2286 = vpop.f32.mrb[0].mxu0
    %v2287 = vadd.f32 0.0, %v2286
    %v2288 = vpop.f32.mrb[0].mxu0
    %v2289 = vpop.f32.mrb[0].mxu0
    %v2290 = vadd.f32 0.0, %v2289
    %v2291 = vpop.f32.mrb[0].mxu0
    %2292 = vmatprep.mubr.bf16.mxu0 0
    %2293 = vmatmul.mubr.bf16.gmra.mrb[0].mxu0 %v2244
    %v2294 = vpop.f32.mrb[0].mxu0
    %v2295 = vadd.f32 0.0, %v2294
    %v2296 = vpop.f32.mrb[0].mxu0
    %v2297 = vpop.f32.mrb[0].mxu0
    %v2298 = vadd.f32 0.0, %v2297
    %v2299 = vpop.f32.mrb[0].mxu0
    %2300 = vdwg.mxu0
    %v2301 = vsel %vm671, %v2220, -1e+30
    %v2302 = vsel %vm671, %v2223, -1e+30
    %v2303 = vsel %vm671, %v2228, -1e+30
    %v2304 = vsel %vm671, %v2231, -1e+30
    %v2305 = vsel %vm671, %v2287, -1e+30
    %v2306 = vsel %vm671, %v2290, -1e+30
    %v2307 = vsel %vm671, %v2295, -1e+30
    %v2308 = vsel %vm671, %v2298, -1e+30
    %v2309 = vsel %vm680, %v2301, -inf
    %2310 = vmax.xlane.f32.xlu0 %v2309
    %v2311 = vpop.xlane.xlu0 %2310
    %v2312 = vsel %vm680, %v2302, -inf
    %2313 = vmax.xlane.f32.xlu0 %v2312
    %v2314 = vpop.xlane.xlu0 %2313
    %v2315 = vsel %vm680, %v2303, -inf
    %2316 = vmax.xlane.f32.xlu0 %v2315
    %v2317 = vpop.xlane.xlu0 %2316
    %v2318 = vsel %vm680, %v2304, -inf
    %2319 = vmax.xlane.f32.xlu0 %v2318
    %v2320 = vpop.xlane.xlu0 %2319
    %v2321 = vsel %vm680, %v2305, -inf
    %2322 = vmax.xlane.f32.xlu0 %v2321
    %v2323 = vpop.xlane.xlu0 %2322
    %v2324 = vsel %vm680, %v2306, -inf
    %2325 = vmax.xlane.f32.xlu0 %v2324
    %v2326 = vpop.xlane.xlu0 %2325
    %v2327 = vsel %vm680, %v2307, -inf
    %2328 = vmax.xlane.f32.xlu0 %v2327
    %v2329 = vpop.xlane.xlu0 %2328
    %v2330 = vsel %vm680, %v2308, -inf
    %2331 = vmax.xlane.f32.xlu0 %v2330
    %v2332 = vpop.xlane.xlu0 %2331
    %v2333 = vsub.f32 %v2301, %v2311
    %v2334 = vsub.f32 %v2302, %v2314
    %v2335 = vsub.f32 %v2303, %v2317
    %v2336 = vsub.f32 %v2304, %v2320
    %v2337 = vsub.f32 %v2305, %v2323
    %v2338 = vsub.f32 %v2306, %v2326
    %v2339 = vsub.f32 %v2307, %v2329
    %v2340 = vsub.f32 %v2308, %v2332
    %v2341 = vmul.f32 %v2333, 1.442695
    %v2342 = vpow.pop %v2341
    %v2343 = vmul.f32 %v2334, 1.442695
    %v2344 = vpow.pop %v2343
    %v2345 = vmul.f32 %v2335, 1.442695
    %v2346 = vpow.pop %v2345
    %v2347 = vmul.f32 %v2336, 1.442695
    %v2348 = vpow.pop %v2347
    %v2349 = vmul.f32 %v2337, 1.442695
    %v2350 = vpow.pop %v2349
    %v2351 = vmul.f32 %v2338, 1.442695
    %v2352 = vpow.pop %v2351
    %v2353 = vmul.f32 %v2339, 1.442695
    %v2354 = vpow.pop %v2353
    %v2355 = vmul.f32 %v2340, 1.442695
    %v2356 = vpow.pop %v2355
    %v2357 = vsel %vm680, %v2342, 0.0
    %2358 = vadd.xlane.f32.xlu0 %v2357
    %v2359 = vpop.xlane.xlu0 %2358
    %v2360 = vsel %vm680, %v2344, 0.0
    %2361 = vadd.xlane.f32.xlu0 %v2360
    %v2362 = vpop.xlane.xlu0 %2361
    %v2363 = vsel %vm680, %v2346, 0.0
    %2364 = vadd.xlane.f32.xlu0 %v2363
    %v2365 = vpop.xlane.xlu0 %2364
    %v2366 = vsel %vm680, %v2348, 0.0
    %2367 = vadd.xlane.f32.xlu0 %v2366
    %v2368 = vpop.xlane.xlu0 %2367
    %v2369 = vsel %vm680, %v2350, 0.0
    %2370 = vadd.xlane.f32.xlu0 %v2369
    %v2371 = vpop.xlane.xlu0 %2370
    %v2372 = vsel %vm680, %v2352, 0.0
    %2373 = vadd.xlane.f32.xlu0 %v2372
    %v2374 = vpop.xlane.xlu0 %2373
    %v2375 = vsel %vm680, %v2354, 0.0
    %2376 = vadd.xlane.f32.xlu0 %v2375
    %v2377 = vpop.xlane.xlu0 %2376
    %v2378 = vsel %vm680, %v2356, 0.0
    %2379 = vadd.xlane.f32.xlu0 %v2378
    %v2380 = vpop.xlane.xlu0 %2379
    %v2381 = vrcp.pop %v2359
    %v2382 = vrcp.pop %v2362
    %v2383 = vrcp.pop %v2365
    %v2384 = vrcp.pop %v2368
    %v2385 = vrcp.pop %v2371
    %v2386 = vrcp.pop %v2374
    %v2387 = vrcp.pop %v2377
    %v2388 = vrcp.pop %v2380
    %v2389 = vmul.f32 %v2342, %v2381
    %v2390 = vmul.f32 %v2344, %v2382
    %v2391 = vmul.f32 %v2346, %v2383
    %v2392 = vmul.f32 %v2348, %v2384
    %v2393 = vmul.f32 %v2350, %v2385
    %v2394 = vmul.f32 %v2352, %v2386
    %v2395 = vmul.f32 %v2354, %v2387
    %v2396 = vmul.f32 %v2356, %v2388
    %v2397 = vpack.c.bf16 %v2390, %v2389
    %v2398 = vpack.c.bf16 %v2392, %v2391
    %v2399 = vpack.c.bf16 %v2394, %v2393
    %v2400 = vpack.c.bf16 %v2396, %v2395
    %2401 = vrot.lane.b32.xlu0 %v2163, 64
    %v2402 = vpop.permute.xlu0 %2401
    %2403 = vrot.lane.b32.xlu0 %v2164, 64
    %v2404 = vpop.permute.xlu0 %2403
    %v2408 = vsel %vm680, %v2397, 0
    %v2411 = vsel %vm680, %v2398, 0
    %2413 = vmatprep.subr.bf16.mxu0 0
    %2414 = vmatpush1.bf16.msra.mxu0 %v2402
    %2415 = vmatprep.subr.bf16.mxu0 0
    %2416 = vmatpush1.bf16.msra.mxu0 %v2404
    %2417 = vmatprep.subr.bf16.mxu0 0
    %2418 = vmatpush1.bf16.msra.mxu0 0
    %2419 = vmatprep.subr.bf16.mxu0 0
    %2420 = vmatpush1.bf16.msra.mxu0 0
    %2421 = vmatprep.subr.bf16.mxu0 0
    %2422 = vmatpush1.bf16.msra.mxu0 0
    %2423 = vmatprep.subr.bf16.mxu0 0
    %2424 = vmatpush1.bf16.msra.mxu0 0
    %2425 = vmatprep.subr.bf16.mxu0 0
    %2426 = vmatpush1.bf16.msra.mxu0 0
    %2427 = vmatprep.subr.bf16.mxu0 0
    %2428 = vmatpush1.bf16.msra.mxu0 0
    %2429 = vmatprep.subr.bf16.mxu0 0
    %2430 = vmatpush1.bf16.msra.mxu0 0
    %2431 = vmatprep.subr.bf16.mxu0 0
    %2432 = vmatpush1.bf16.msra.mxu0 0
    %2433 = vmatprep.subr.bf16.mxu0 0
    %2434 = vmatpush1.bf16.msra.mxu0 0
    %2435 = vmatprep.subr.bf16.mxu0 0
    %2436 = vmatpush1.bf16.msra.mxu0 0
    %2437 = vmatprep.subr.bf16.mxu0 0
    %2438 = vmatpush1.bf16.msra.mxu0 0
    %2439 = vmatprep.subr.bf16.mxu0 0
    %2440 = vmatpush1.bf16.msra.mxu0 0
    %2441 = vmatprep.subr.bf16.mxu0 0
    %2442 = vmatpush1.bf16.msra.mxu0 0
    %2443 = vmatprep.subr.bf16.mxu0 0
    %2444 = vmatpush1.bf16.msra.mxu0 0
    %2445 = vmatprep.mubr.bf16.mxu0 0
    %2446 = vmatmul.mubr.bf16.gmra.mrb[0].mxu0 %v2408
    %v2447 = vpop.f32.mrb[0].mxu0
    %v2448 = vadd.f32 0.0, %v2447
    %v2449 = vpop.f32.mrb[0].mxu0
    %v2450 = vpop.f32.mrb[0].mxu0
    %v2451 = vadd.f32 0.0, %v2450
    %v2452 = vpop.f32.mrb[0].mxu0
    %2453 = vmatprep.mubr.bf16.mxu0 0
    %2454 = vmatmul.mubr.bf16.gmra.mrb[0].mxu0 %v2411
    %v2455 = vpop.f32.mrb[0].mxu0
    %v2456 = vadd.f32 0.0, %v2455
    %v2457 = vpop.f32.mrb[0].mxu0
    %v2458 = vpop.f32.mrb[0].mxu0
    %v2459 = vadd.f32 0.0, %v2458
    %v2460 = vpop.f32.mrb[0].mxu0
    %2461 = vdwg.mxu0
    %2462 = vrot.lane.b32.xlu0 %v2165, 64
    %v2463 = vpop.permute.xlu0 %2462
    %2464 = vrot.lane.b32.xlu0 %v2166, 64
    %v2465 = vpop.permute.xlu0 %2464
    %v2469 = vsel %vm680, %v2399, 0
    %v2472 = vsel %vm680, %v2400, 0
    %2474 = vmatprep.subr.bf16.mxu0 0
    %2475 = vmatpush1.bf16.msra.mxu0 %v2463
    %2476 = vmatprep.subr.bf16.mxu0 0
    %2477 = vmatpush1.bf16.msra.mxu0 %v2465
    %2478 = vmatprep.subr.bf16.mxu0 0
    %2479 = vmatpush1.bf16.msra.mxu0 0
    %2480 = vmatprep.subr.bf16.mxu0 0
    %2481 = vmatpush1.bf16.msra.mxu0 0
    %2482 = vmatprep.subr.bf16.mxu0 0
    %2483 = vmatpush1.bf16.msra.mxu0 0
    %2484 = vmatprep.subr.bf16.mxu0 0
    %2485 = vmatpush1.bf16.msra.mxu0 0
    %2486 = vmatprep.subr.bf16.mxu0 0
    %2487 = vmatpush1.bf16.msra.mxu0 0
    %2488 = vmatprep.subr.bf16.mxu0 0
    %2489 = vmatpush1.bf16.msra.mxu0 0
    %2490 = vmatprep.subr.bf16.mxu0 0
    %2491 = vmatpush1.bf16.msra.mxu0 0
    %2492 = vmatprep.subr.bf16.mxu0 0
    %2493 = vmatpush1.bf16.msra.mxu0 0
    %2494 = vmatprep.subr.bf16.mxu0 0
    %2495 = vmatpush1.bf16.msra.mxu0 0
    %2496 = vmatprep.subr.bf16.mxu0 0
    %2497 = vmatpush1.bf16.msra.mxu0 0
    %2498 = vmatprep.subr.bf16.mxu0 0
    %2499 = vmatpush1.bf16.msra.mxu0 0
    %2500 = vmatprep.subr.bf16.mxu0 0
    %2501 = vmatpush1.bf16.msra.mxu0 0
    %2502 = vmatprep.subr.bf16.mxu0 0
    %2503 = vmatpush1.bf16.msra.mxu0 0
    %2504 = vmatprep.subr.bf16.mxu0 0
    %2505 = vmatpush1.bf16.msra.mxu0 0
    %2506 = vmatprep.mubr.bf16.mxu0 0
    %2507 = vmatmul.mubr.bf16.gmra.mrb[0].mxu0 %v2469
    %v2508 = vpop.f32.mrb[0].mxu0
    %v2509 = vadd.f32 0.0, %v2508
    %v2510 = vpop.f32.mrb[0].mxu0
    %v2511 = vpop.f32.mrb[0].mxu0
    %v2512 = vadd.f32 0.0, %v2511
    %v2513 = vpop.f32.mrb[0].mxu0
    %2514 = vmatprep.mubr.bf16.mxu0 0
    %2515 = vmatmul.mubr.bf16.gmra.mrb[0].mxu0 %v2472
    %v2516 = vpop.f32.mrb[0].mxu0
    %v2517 = vadd.f32 0.0, %v2516
    %v2518 = vpop.f32.mrb[0].mxu0
    %v2519 = vpop.f32.mrb[0].mxu0
    %v2520 = vadd.f32 0.0, %v2519
    %v2521 = vpop.f32.mrb[0].mxu0
    %2522 = vdwg.mxu0
    %2523 = vrot.lane.b32.xlu0 %v2163, 112
    %v2524 = vpop.permute.xlu0 %2523
    %2525 = vrot.lane.b32.xlu0 %v2164, 112
    %v2526 = vpop.permute.xlu0 %2525
    %2527 = vrot.lane.b32.xlu0 %v2163, 80
    %v2528 = vpop.permute.xlu0 %2527
    %2529 = vrot.lane.b32.xlu0 %v2164, 80
    %v2530 = vpop.permute.xlu0 %2529
    %v2532 = vsel %vm541, %v2524, 0
    %v2535 = vsel %vm541, %v2526, 0
    %v2538 = vsel %vm541, %v2528, 0
    %v2541 = vsel %vm541, %v2530, 0
    %2543 = vmatprep.subr.bf16.mxu0 0
    %2544 = vmatpush1.bf16.xpose.msra.mxu0 %v2538
    %2545 = vmatprep.subr.bf16.mxu0 0
    %2546 = vmatpush1.bf16.xpose.msra.mxu0 %v2541
    %2547 = vmatprep.subr.bf16.mxu0 0
    %2548 = vmatpush1.bf16.xpose.msra.mxu0 0
    %2549 = vmatprep.subr.bf16.mxu0 0
    %2550 = vmatpush1.bf16.xpose.msra.mxu0 0
    %2551 = vmatprep.subr.bf16.mxu0 0
    %2552 = vmatpush1.bf16.xpose.msra.mxu0 0
    %2553 = vmatprep.subr.bf16.mxu0 0
    %2554 = vmatpush1.bf16.xpose.msra.mxu0 0
    %2555 = vmatprep.subr.bf16.mxu0 0
    %2556 = vmatpush1.bf16.xpose.msra.mxu0 0
    %2557 = vmatprep.subr.bf16.mxu0 0
    %2558 = vmatpush1.bf16.xpose.msra.mxu0 0
    %2559 = vmatprep.subr.bf16.mxu0 0
    %2560 = vmatpush1.bf16.xpose.msra.mxu0 0
    %2561 = vmatprep.subr.bf16.mxu0 0
    %2562 = vmatpush1.bf16.xpose.msra.mxu0 0
    %2563 = vmatprep.subr.bf16.mxu0 0
    %2564 = vmatpush1.bf16.xpose.msra.mxu0 0
    %2565 = vmatprep.subr.bf16.mxu0 0
    %2566 = vmatpush1.bf16.xpose.msra.mxu0 0
    %2567 = vmatprep.subr.bf16.mxu0 0
    %2568 = vmatpush1.bf16.xpose.msra.mxu0 0
    %2569 = vmatprep.subr.bf16.mxu0 0
    %2570 = vmatpush1.bf16.xpose.msra.mxu0 0
    %2571 = vmatprep.subr.bf16.mxu0 0
    %2572 = vmatpush1.bf16.xpose.msra.mxu0 0
    %2573 = vmatprep.subr.bf16.mxu0 0
    %2574 = vmatpush1.bf16.xpose.msra.mxu0 0
    %2575 = vmatprep.mubr.bf16.mxu0 0
    %2576 = vmatmul.mubr.bf16.gmra.mrb[0].mxu0 %v2532
    %v2577 = vpop.f32.mrb[0].mxu0
    %v2578 = vadd.f32 0.0, %v2577
    %v2579 = vpop.f32.mrb[0].mxu0
    %v2580 = vpop.f32.mrb[0].mxu0
    %v2581 = vadd.f32 0.0, %v2580
    %v2582 = vpop.f32.mrb[0].mxu0
    %2583 = vmatprep.mubr.bf16.mxu0 0
    %2584 = vmatmul.mubr.bf16.gmra.mrb[0].mxu0 %v2535
    %v2585 = vpop.f32.mrb[0].mxu0
    %v2586 = vadd.f32 0.0, %v2585
    %v2587 = vpop.f32.mrb[0].mxu0
    %v2588 = vpop.f32.mrb[0].mxu0
    %v2589 = vadd.f32 0.0, %v2588
    %v2590 = vpop.f32.mrb[0].mxu0
    %2591 = vdwg.mxu0
    %2592 = vrot.lane.b32.xlu0 %v2165, 112
    %v2593 = vpop.permute.xlu0 %2592
    %2594 = vrot.lane.b32.xlu0 %v2166, 112
    %v2595 = vpop.permute.xlu0 %2594
    %2596 = vrot.lane.b32.xlu0 %v2165, 80
    %v2597 = vpop.permute.xlu0 %2596
    %2598 = vrot.lane.b32.xlu0 %v2166, 80
    %v2599 = vpop.permute.xlu0 %2598
    %v2601 = vsel %vm541, %v2593, 0
    %v2604 = vsel %vm541, %v2595, 0
    %v2607 = vsel %vm541, %v2597, 0
    %v2610 = vsel %vm541, %v2599, 0
    %2612 = vmatprep.subr.bf16.mxu0 0
    %2613 = vmatpush1.bf16.xpose.msra.mxu0 %v2607
    %2614 = vmatprep.subr.bf16.mxu0 0
    %2615 = vmatpush1.bf16.xpose.msra.mxu0 %v2610
    %2616 = vmatprep.subr.bf16.mxu0 0
    %2617 = vmatpush1.bf16.xpose.msra.mxu0 0
    %2618 = vmatprep.subr.bf16.mxu0 0
    %2619 = vmatpush1.bf16.xpose.msra.mxu0 0
    %2620 = vmatprep.subr.bf16.mxu0 0
    %2621 = vmatpush1.bf16.xpose.msra.mxu0 0
    %2622 = vmatprep.subr.bf16.mxu0 0
    %2623 = vmatpush1.bf16.xpose.msra.mxu0 0
    %2624 = vmatprep.subr.bf16.mxu0 0
    %2625 = vmatpush1.bf16.xpose.msra.mxu0 0
    %2626 = vmatprep.subr.bf16.mxu0 0
    %2627 = vmatpush1.bf16.xpose.msra.mxu0 0
    %2628 = vmatprep.subr.bf16.mxu0 0
    %2629 = vmatpush1.bf16.xpose.msra.mxu0 0
    %2630 = vmatprep.subr.bf16.mxu0 0
    %2631 = vmatpush1.bf16.xpose.msra.mxu0 0
    %2632 = vmatprep.subr.bf16.mxu0 0
    %2633 = vmatpush1.bf16.xpose.msra.mxu0 0
    %2634 = vmatprep.subr.bf16.mxu0 0
    %2635 = vmatpush1.bf16.xpose.msra.mxu0 0
    %2636 = vmatprep.subr.bf16.mxu0 0
    %2637 = vmatpush1.bf16.xpose.msra.mxu0 0
    %2638 = vmatprep.subr.bf16.mxu0 0
    %2639 = vmatpush1.bf16.xpose.msra.mxu0 0
    %2640 = vmatprep.subr.bf16.mxu0 0
    %2641 = vmatpush1.bf16.xpose.msra.mxu0 0
    %2642 = vmatprep.subr.bf16.mxu0 0
    %2643 = vmatpush1.bf16.xpose.msra.mxu0 0
    %2644 = vmatprep.mubr.bf16.mxu0 0
    %2645 = vmatmul.mubr.bf16.gmra.mrb[0].mxu0 %v2601
    %v2646 = vpop.f32.mrb[0].mxu0
    %v2647 = vadd.f32 0.0, %v2646
    %v2648 = vpop.f32.mrb[0].mxu0
    %v2649 = vpop.f32.mrb[0].mxu0
    %v2650 = vadd.f32 0.0, %v2649
    %v2651 = vpop.f32.mrb[0].mxu0
    %2652 = vmatprep.mubr.bf16.mxu0 0
    %2653 = vmatmul.mubr.bf16.gmra.mrb[0].mxu0 %v2604
    %v2654 = vpop.f32.mrb[0].mxu0
    %v2655 = vadd.f32 0.0, %v2654
    %v2656 = vpop.f32.mrb[0].mxu0
    %v2657 = vpop.f32.mrb[0].mxu0
    %v2658 = vadd.f32 0.0, %v2657
    %v2659 = vpop.f32.mrb[0].mxu0
    %2660 = vdwg.mxu0
    %v2661 = vsel %vm671, %v2578, -1e+30
    %v2662 = vsel %vm671, %v2581, -1e+30
    %v2663 = vsel %vm671, %v2586, -1e+30
    %v2664 = vsel %vm671, %v2589, -1e+30
    %v2665 = vsel %vm671, %v2647, -1e+30
    %v2666 = vsel %vm671, %v2650, -1e+30
    %v2667 = vsel %vm671, %v2655, -1e+30
    %v2668 = vsel %vm671, %v2658, -1e+30
    %v2669 = vsel %vm680, %v2661, -inf
    %2670 = vmax.xlane.f32.xlu0 %v2669
    %v2671 = vpop.xlane.xlu0 %2670
    %v2672 = vsel %vm680, %v2662, -inf
    %2673 = vmax.xlane.f32.xlu0 %v2672
    %v2674 = vpop.xlane.xlu0 %2673
    %v2675 = vsel %vm680, %v2663, -inf
    %2676 = vmax.xlane.f32.xlu0 %v2675
    %v2677 = vpop.xlane.xlu0 %2676
    %v2678 = vsel %vm680, %v2664, -inf
    %2679 = vmax.xlane.f32.xlu0 %v2678
    %v2680 = vpop.xlane.xlu0 %2679
    %v2681 = vsel %vm680, %v2665, -inf
    %2682 = vmax.xlane.f32.xlu0 %v2681
    %v2683 = vpop.xlane.xlu0 %2682
    %v2684 = vsel %vm680, %v2666, -inf
    %2685 = vmax.xlane.f32.xlu0 %v2684
    %v2686 = vpop.xlane.xlu0 %2685
    %v2687 = vsel %vm680, %v2667, -inf
    %2688 = vmax.xlane.f32.xlu0 %v2687
    %v2689 = vpop.xlane.xlu0 %2688
    %v2690 = vsel %vm680, %v2668, -inf
    %2691 = vmax.xlane.f32.xlu0 %v2690
    %v2692 = vpop.xlane.xlu0 %2691
    %v2693 = vsub.f32 %v2661, %v2671
    %v2694 = vsub.f32 %v2662, %v2674
    %v2695 = vsub.f32 %v2663, %v2677
    %v2696 = vsub.f32 %v2664, %v2680
    %v2697 = vsub.f32 %v2665, %v2683
    %v2698 = vsub.f32 %v2666, %v2686
    %v2699 = vsub.f32 %v2667, %v2689
    %v2700 = vsub.f32 %v2668, %v2692
    %v2701 = vmul.f32 %v2693, 1.442695
    %v2702 = vpow.pop %v2701
    %v2703 = vmul.f32 %v2694, 1.442695
    %v2704 = vpow.pop %v2703
    %v2705 = vmul.f32 %v2695, 1.442695
    %v2706 = vpow.pop %v2705
    %v2707 = vmul.f32 %v2696, 1.442695
    %v2708 = vpow.pop %v2707
    %v2709 = vmul.f32 %v2697, 1.442695
    %v2710 = vpow.pop %v2709
    %v2711 = vmul.f32 %v2698, 1.442695
    %v2712 = vpow.pop %v2711
    %v2713 = vmul.f32 %v2699, 1.442695
    %v2714 = vpow.pop %v2713
    %v2715 = vmul.f32 %v2700, 1.442695
    %v2716 = vpow.pop %v2715
    %v2717 = vsel %vm680, %v2702, 0.0
    %2718 = vadd.xlane.f32.xlu0 %v2717
    %v2719 = vpop.xlane.xlu0 %2718
    %v2720 = vsel %vm680, %v2704, 0.0
    %2721 = vadd.xlane.f32.xlu0 %v2720
    %v2722 = vpop.xlane.xlu0 %2721
    %v2723 = vsel %vm680, %v2706, 0.0
    %2724 = vadd.xlane.f32.xlu0 %v2723
    %v2725 = vpop.xlane.xlu0 %2724
    %v2726 = vsel %vm680, %v2708, 0.0
    %2727 = vadd.xlane.f32.xlu0 %v2726
    %v2728 = vpop.xlane.xlu0 %2727
    %v2729 = vsel %vm680, %v2710, 0.0
    %2730 = vadd.xlane.f32.xlu0 %v2729
    %v2731 = vpop.xlane.xlu0 %2730
    %v2732 = vsel %vm680, %v2712, 0.0
    %2733 = vadd.xlane.f32.xlu0 %v2732
    %v2734 = vpop.xlane.xlu0 %2733
    %v2735 = vsel %vm680, %v2714, 0.0
    %2736 = vadd.xlane.f32.xlu0 %v2735
    %v2737 = vpop.xlane.xlu0 %2736
    %v2738 = vsel %vm680, %v2716, 0.0
    %2739 = vadd.xlane.f32.xlu0 %v2738
    %v2740 = vpop.xlane.xlu0 %2739
    %v2741 = vrcp.pop %v2719
    %v2742 = vrcp.pop %v2722
    %v2743 = vrcp.pop %v2725
    %v2744 = vrcp.pop %v2728
    %v2745 = vrcp.pop %v2731
    %v2746 = vrcp.pop %v2734
    %v2747 = vrcp.pop %v2737
    %v2748 = vrcp.pop %v2740
    %v2749 = vmul.f32 %v2702, %v2741
    %v2750 = vmul.f32 %v2704, %v2742
    %v2751 = vmul.f32 %v2706, %v2743
    %v2752 = vmul.f32 %v2708, %v2744
    %v2753 = vmul.f32 %v2710, %v2745
    %v2754 = vmul.f32 %v2712, %v2746
    %v2755 = vmul.f32 %v2714, %v2747
    %v2756 = vmul.f32 %v2716, %v2748
    %v2757 = vpack.c.bf16 %v2750, %v2749
    %v2758 = vpack.c.bf16 %v2752, %v2751
    %v2759 = vpack.c.bf16 %v2754, %v2753
    %v2760 = vpack.c.bf16 %v2756, %v2755
    %2761 = vrot.lane.b32.xlu0 %v2163, 48
    %v2762 = vpop.permute.xlu0 %2761
    %2763 = vrot.lane.b32.xlu0 %v2164, 48
    %v2764 = vpop.permute.xlu0 %2763
    %v2768 = vsel %vm680, %v2757, 0
    %v2771 = vsel %vm680, %v2758, 0
    %2773 = vmatprep.subr.bf16.mxu0 0
    %2774 = vmatpush1.bf16.msra.mxu0 %v2762
    %2775 = vmatprep.subr.bf16.mxu0 0
    %2776 = vmatpush1.bf16.msra.mxu0 %v2764
    %2777 = vmatprep.subr.bf16.mxu0 0
    %2778 = vmatpush1.bf16.msra.mxu0 0
    %2779 = vmatprep.subr.bf16.mxu0 0
    %2780 = vmatpush1.bf16.msra.mxu0 0
    %2781 = vmatprep.subr.bf16.mxu0 0
    %2782 = vmatpush1.bf16.msra.mxu0 0
    %2783 = vmatprep.subr.bf16.mxu0 0
    %2784 = vmatpush1.bf16.msra.mxu0 0
    %2785 = vmatprep.subr.bf16.mxu0 0
    %2786 = vmatpush1.bf16.msra.mxu0 0
    %2787 = vmatprep.subr.bf16.mxu0 0
    %2788 = vmatpush1.bf16.msra.mxu0 0
    %2789 = vmatprep.subr.bf16.mxu0 0
    %2790 = vmatpush1.bf16.msra.mxu0 0
    %2791 = vmatprep.subr.bf16.mxu0 0
    %2792 = vmatpush1.bf16.msra.mxu0 0
    %2793 = vmatprep.subr.bf16.mxu0 0
    %2794 = vmatpush1.bf16.msra.mxu0 0
    %2795 = vmatprep.subr.bf16.mxu0 0
    %2796 = vmatpush1.bf16.msra.mxu0 0
    %2797 = vmatprep.subr.bf16.mxu0 0
    %2798 = vmatpush1.bf16.msra.mxu0 0
    %2799 = vmatprep.subr.bf16.mxu0 0
    %2800 = vmatpush1.bf16.msra.mxu0 0
    %2801 = vmatprep.subr.bf16.mxu0 0
    %2802 = vmatpush1.bf16.msra.mxu0 0
    %2803 = vmatprep.subr.bf16.mxu0 0
    %2804 = vmatpush1.bf16.msra.mxu0 0
    %2805 = vmatprep.mubr.bf16.mxu0 0
    %2806 = vmatmul.mubr.bf16.gmra.mrb[0].mxu0 %v2768
    %v2807 = vpop.f32.mrb[0].mxu0
    %v2808 = vadd.f32 0.0, %v2807
    %v2809 = vpop.f32.mrb[0].mxu0
    %v2810 = vpop.f32.mrb[0].mxu0
    %v2811 = vadd.f32 0.0, %v2810
    %v2812 = vpop.f32.mrb[0].mxu0
    %2813 = vmatprep.mubr.bf16.mxu0 0
    %2814 = vmatmul.mubr.bf16.gmra.mrb[0].mxu0 %v2771
    %v2815 = vpop.f32.mrb[0].mxu0
    %v2816 = vadd.f32 0.0, %v2815
    %v2817 = vpop.f32.mrb[0].mxu0
    %v2818 = vpop.f32.mrb[0].mxu0
    %v2819 = vadd.f32 0.0, %v2818
    %v2820 = vpop.f32.mrb[0].mxu0
    %2821 = vdwg.mxu0
    %2822 = vrot.lane.b32.xlu0 %v2165, 48
    %v2823 = vpop.permute.xlu0 %2822
    %2824 = vrot.lane.b32.xlu0 %v2166, 48
    %v2825 = vpop.permute.xlu0 %2824
    %v2829 = vsel %vm680, %v2759, 0
    %v2832 = vsel %vm680, %v2760, 0
    %2834 = vmatprep.subr.bf16.mxu0 0
    %2835 = vmatpush1.bf16.msra.mxu0 %v2823
    %2836 = vmatprep.subr.bf16.mxu0 0
    %2837 = vmatpush1.bf16.msra.mxu0 %v2825
    %2838 = vmatprep.subr.bf16.mxu0 0
    %2839 = vmatpush1.bf16.msra.mxu0 0
    %2840 = vmatprep.subr.bf16.mxu0 0
    %2841 = vmatpush1.bf16.msra.mxu0 0
    %2842 = vmatprep.subr.bf16.mxu0 0
    %2843 = vmatpush1.bf16.msra.mxu0 0
    %2844 = vmatprep.subr.bf16.mxu0 0
    %2845 = vmatpush1.bf16.msra.mxu0 0
    %2846 = vmatprep.subr.bf16.mxu0 0
    %2847 = vmatpush1.bf16.msra.mxu0 0
    %2848 = vmatprep.subr.bf16.mxu0 0
    %2849 = vmatpush1.bf16.msra.mxu0 0
    %2850 = vmatprep.subr.bf16.mxu0 0
    %2851 = vmatpush1.bf16.msra.mxu0 0
    %2852 = vmatprep.subr.bf16.mxu0 0
    %2853 = vmatpush1.bf16.msra.mxu0 0
    %2854 = vmatprep.subr.bf16.mxu0 0
    %2855 = vmatpush1.bf16.msra.mxu0 0
    %2856 = vmatprep.subr.bf16.mxu0 0
    %2857 = vmatpush1.bf16.msra.mxu0 0
    %2858 = vmatprep.subr.bf16.mxu0 0
    %2859 = vmatpush1.bf16.msra.mxu0 0
    %2860 = vmatprep.subr.bf16.mxu0 0
    %2861 = vmatpush1.bf16.msra.mxu0 0
    %2862 = vmatprep.subr.bf16.mxu0 0
    %2863 = vmatpush1.bf16.msra.mxu0 0
    %2864 = vmatprep.subr.bf16.mxu0 0
    %2865 = vmatpush1.bf16.msra.mxu0 0
    %2866 = vmatprep.mubr.bf16.mxu0 0
    %2867 = vmatmul.mubr.bf16.gmra.mrb[0].mxu0 %v2829
    %v2868 = vpop.f32.mrb[0].mxu0
    %v2869 = vadd.f32 0.0, %v2868
    %v2870 = vpop.f32.mrb[0].mxu0
    %v2871 = vpop.f32.mrb[0].mxu0
    %v2872 = vadd.f32 0.0, %v2871
    %v2873 = vpop.f32.mrb[0].mxu0
    %2874 = vmatprep.mubr.bf16.mxu0 0
    %2875 = vmatmul.mubr.bf16.gmra.mrb[0].mxu0 %v2832
    %v2876 = vpop.f32.mrb[0].mxu0
    %v2877 = vadd.f32 0.0, %v2876
    %v2878 = vpop.f32.mrb[0].mxu0
    %v2879 = vpop.f32.mrb[0].mxu0
    %v2880 = vadd.f32 0.0, %v2879
    %v2881 = vpop.f32.mrb[0].mxu0
    %2882 = vdwg.mxu0
    %2891 = vrot.lane.b32.xlu0 %v2808, 16
    %v2892 = vpop.permute.xlu0 %2891
    %2893 = vrot.lane.b32.xlu0 %v2811, 16
    %v2894 = vpop.permute.xlu0 %2893
    %2895 = vrot.lane.b32.xlu0 %v2816, 16
    %v2896 = vpop.permute.xlu0 %2895
    %2897 = vrot.lane.b32.xlu0 %v2819, 16
    %v2898 = vpop.permute.xlu0 %2897
    %2899 = vrot.lane.b32.xlu0 %v2869, 16
    %v2900 = vpop.permute.xlu0 %2899
    %2901 = vrot.lane.b32.xlu0 %v2872, 16
    %v2902 = vpop.permute.xlu0 %2901
    %2903 = vrot.lane.b32.xlu0 %v2877, 16
    %v2904 = vpop.permute.xlu0 %2903
    %2905 = vrot.lane.b32.xlu0 %v2880, 16
    %v2906 = vpop.permute.xlu0 %2905
    %v2915 = vsel %vm541, %v2448, %v2892
    %v2916 = vsel %vm541, %v2451, %v2894
    %v2917 = vsel %vm541, %v2456, %v2896
    %v2918 = vsel %vm541, %v2459, %v2898
    %v2919 = vsel %vm541, %v2509, %v2900
    %v2920 = vsel %vm541, %v2512, %v2902
    %v2921 = vsel %vm541, %v2517, %v2904
    %v2922 = vsel %vm541, %v2520, %v2906
    %s2923 = scalar_lea.vmem %s7, 16
    %v2924 = vld [vmem:[%s2923] sm:$0xf]
    %v2925 = vld [vmem:[%s2923 + $0x4] sm:$0xf]
    %v2926 = vld [vmem:[%s2923 + $0x8] sm:$0xf]
    %v2927 = vld [vmem:[%s2923 + $0xc] sm:$0xf]
    %v2928 = vpack.c.bf16 %v2916, %v2915
    %v2929 = vpack.c.bf16 %v2918, %v2917
    %v2930 = vpack.c.bf16 %v2920, %v2919
    %v2931 = vpack.c.bf16 %v2922, %v2921
    %v2936 = vunpack.c.l.b16 %v2924
    %v2937 = vunpack.c.l.b16 %v2925
    %v2938 = vunpack.c.l.b16 %v2926
    %v2939 = vunpack.c.l.b16 %v2927
    %v2940 = vpack.c.b16 %v2937, %v2936
    %v2941 = vpack.c.b16 %v2939, %v2938
    %v2945 = vsel %vm680, %v2928, 0
    %v2948 = vsel %vm680, %v2929, 0
    %v2951 = vsel %vm680, %v2930, 0
    %v2954 = vsel %vm680, %v2931, 0
    %2956 = vmatprep.subr.bf16.mxu0 0
    %2957 = vmatpush1.bf16.msra.mxu0 %v2940
    %2958 = vmatprep.subr.bf16.mxu0 0
    %2959 = vmatpush1.bf16.msra.mxu0 %v2941
    %2960 = vmatprep.subr.bf16.mxu0 0
    %2961 = vmatpush1.bf16.msra.mxu0 0
    %2962 = vmatprep.subr.bf16.mxu0 0
    %2963 = vmatpush1.bf16.msra.mxu0 0
    %2964 = vmatprep.subr.bf16.mxu0 0
    %2965 = vmatpush1.bf16.msra.mxu0 0
    %2966 = vmatprep.subr.bf16.mxu0 0
    %2967 = vmatpush1.bf16.msra.mxu0 0
    %2968 = vmatprep.subr.bf16.mxu0 0
    %2969 = vmatpush1.bf16.msra.mxu0 0
    %2970 = vmatprep.subr.bf16.mxu0 0
    %2971 = vmatpush1.bf16.msra.mxu0 0
    %2972 = vmatprep.subr.bf16.mxu0 0
    %2973 = vmatpush1.bf16.msra.mxu0 0
    %2974 = vmatprep.subr.bf16.mxu0 0
    %2975 = vmatpush1.bf16.msra.mxu0 0
    %2976 = vmatprep.subr.bf16.mxu0 0
    %2977 = vmatpush1.bf16.msra.mxu0 0
    %2978 = vmatprep.subr.bf16.mxu0 0
    %2979 = vmatpush1.bf16.msra.mxu0 0
    %2980 = vmatprep.subr.bf16.mxu0 0
    %2981 = vmatpush1.bf16.msra.mxu0 0
    %2982 = vmatprep.subr.bf16.mxu0 0
    %2983 = vmatpush1.bf16.msra.mxu0 0
    %2984 = vmatprep.subr.bf16.mxu0 0
    %2985 = vmatpush1.bf16.msra.mxu0 0
    %2986 = vmatprep.subr.bf16.mxu0 0
    %2987 = vmatpush1.bf16.msra.mxu0 0
    %2988 = vmatprep.mubr.bf16.mxu0 0
    %2989 = vmatmul.mubr.bf16.gmra.mrb[0].mxu0 %v2945
    %v2990 = vpop.f32.mrb[0].mxu0
    %v2991 = vadd.f32 0.0, %v2990
    %v2992 = vpop.f32.mrb[0].mxu0
    %v2993 = vpop.f32.mrb[0].mxu0
    %v2994 = vadd.f32 0.0, %v2993
    %v2995 = vpop.f32.mrb[0].mxu0
    %2996 = vmatprep.mubr.bf16.mxu0 0
    %2997 = vmatmul.mubr.bf16.gmra.mrb[0].mxu0 %v2948
    %v2998 = vpop.f32.mrb[0].mxu0
    %v2999 = vadd.f32 0.0, %v2998
    %v3000 = vpop.f32.mrb[0].mxu0
    %v3001 = vpop.f32.mrb[0].mxu0
    %v3002 = vadd.f32 0.0, %v3001
    %v3003 = vpop.f32.mrb[0].mxu0
    %3004 = vmatprep.mubr.bf16.mxu0 0
    %3005 = vmatmul.mubr.bf16.gmra.mrb[0].mxu0 %v2951
    %v3006 = vpop.f32.mrb[0].mxu0
    %v3007 = vadd.f32 0.0, %v3006
    %v3008 = vpop.f32.mrb[0].mxu0
    %v3009 = vpop.f32.mrb[0].mxu0
    %v3010 = vadd.f32 0.0, %v3009
    %v3011 = vpop.f32.mrb[0].mxu0
    %3012 = vmatprep.mubr.bf16.mxu0 0
    %3013 = vmatmul.mubr.bf16.gmra.mrb[0].mxu0 %v2954
    %v3014 = vpop.f32.mrb[0].mxu0
    %v3015 = vadd.f32 0.0, %v3014
    %v3016 = vpop.f32.mrb[0].mxu0
    %v3017 = vpop.f32.mrb[0].mxu0
    %v3018 = vadd.f32 0.0, %v3017
    %v3019 = vpop.f32.mrb[0].mxu0
    %3020 = vdwg.mxu0
    %v3021 = vadd.f32 %v1877, %v2991
    %v3022 = vadd.f32 %v1878, %v2994
    %v3023 = vadd.f32 %v1879, %v2999
    %v3024 = vadd.f32 %v1880, %v3002
    %v3025 = vadd.f32 %v1881, %v3007
    %v3026 = vadd.f32 %v1882, %v3010
    %v3027 = vadd.f32 %v1883, %v3015
    %v3028 = vadd.f32 %v1884, %v3018
    %s3029 = scalar_lea.vmem %s8, 1
    %v3030 = vld [vmem:[%s3029] sm:$0x1]
    %v3032 = vlaneseq
    %v3033 = vshrl.u32 %v3032, 7
    %v3034 = vsub.s32 0, %v3033
    %v3035 = vrot.slane %v3030, %v3034
    %v3037 = vadd.f32 %v3021, %v3035
    %v3038 = vadd.f32 %v3022, %v3035
    %v3039 = vadd.f32 %v3023, %v3035
    %v3040 = vadd.f32 %v3024, %v3035
    %v3041 = vadd.f32 %v3025, %v3035
    %v3042 = vadd.f32 %v3026, %v3035
    %v3043 = vadd.f32 %v3027, %v3035
    %v3044 = vadd.f32 %v3028, %v3035
    %s3045 = scalar_lea.vmem %s9, 1
    %v3046 = vld [vmem:[%s3045] sm:$0x1]
    %s3047 = scalar_lea.vmem %s10, 1
    %v3048 = vld [vmem:[%s3047] sm:$0x1]
    %3049 = vadd.xlane.f32.xlu0 %v3037
    %v3050 = vpop.xlane.xlu0 %3049
    %3051 = vadd.xlane.f32.xlu0 %v3038
    %v3052 = vpop.xlane.xlu0 %3051
    %3053 = vadd.xlane.f32.xlu0 %v3039
    %v3054 = vpop.xlane.xlu0 %3053
    %3055 = vadd.xlane.f32.xlu0 %v3040
    %v3056 = vpop.xlane.xlu0 %3055
    %3057 = vadd.xlane.f32.xlu0 %v3041
    %v3058 = vpop.xlane.xlu0 %3057
    %3059 = vadd.xlane.f32.xlu0 %v3042
    %v3060 = vpop.xlane.xlu0 %3059
    %3061 = vadd.xlane.f32.xlu0 %v3043
    %v3062 = vpop.xlane.xlu0 %3061
    %3063 = vadd.xlane.f32.xlu0 %v3044
    %v3064 = vpop.xlane.xlu0 %3063
    %v3065 = vmul.f32 %v3050, 0.03125
    %v3066 = vmul.f32 %v3052, 0.03125
    %v3067 = vmul.f32 %v3054, 0.03125
    %v3068 = vmul.f32 %v3056, 0.03125
    %v3069 = vmul.f32 %v3058, 0.03125
    %v3070 = vmul.f32 %v3060, 0.03125
    %v3071 = vmul.f32 %v3062, 0.03125
    %v3072 = vmul.f32 %v3064, 0.03125
    %v3073 = vmul.f32 %v3037, %v3037
    %v3074 = vmul.f32 %v3038, %v3038
    %v3075 = vmul.f32 %v3039, %v3039
    %v3076 = vmul.f32 %v3040, %v3040
    %v3077 = vmul.f32 %v3041, %v3041
    %v3078 = vmul.f32 %v3042, %v3042
    %v3079 = vmul.f32 %v3043, %v3043
    %v3080 = vmul.f32 %v3044, %v3044
    %3081 = vadd.xlane.f32.xlu0 %v3073
    %v3082 = vpop.xlane.xlu0 %3081
    %3083 = vadd.xlane.f32.xlu0 %v3074
    %v3084 = vpop.xlane.xlu0 %3083
    %3085 = vadd.xlane.f32.xlu0 %v3075
    %v3086 = vpop.xlane.xlu0 %3085
    %3087 = vadd.xlane.f32.xlu0 %v3076
    %v3088 = vpop.xlane.xlu0 %3087
    %3089 = vadd.xlane.f32.xlu0 %v3077
    %v3090 = vpop.xlane.xlu0 %3089
    %3091 = vadd.xlane.f32.xlu0 %v3078
    %v3092 = vpop.xlane.xlu0 %3091
    %3093 = vadd.xlane.f32.xlu0 %v3079
    %v3094 = vpop.xlane.xlu0 %3093
    %3095 = vadd.xlane.f32.xlu0 %v3080
    %v3096 = vpop.xlane.xlu0 %3095
    %v3097 = vmul.f32 %v3082, 0.03125
    %v3098 = vmul.f32 %v3084, 0.03125
    %v3099 = vmul.f32 %v3086, 0.03125
    %v3100 = vmul.f32 %v3088, 0.03125
    %v3101 = vmul.f32 %v3090, 0.03125
    %v3102 = vmul.f32 %v3092, 0.03125
    %v3103 = vmul.f32 %v3094, 0.03125
    %v3104 = vmul.f32 %v3096, 0.03125
    %v3105 = vmul.f32 %v3065, %v3065
    %v3106 = vmul.f32 %v3066, %v3066
    %v3107 = vmul.f32 %v3067, %v3067
    %v3108 = vmul.f32 %v3068, %v3068
    %v3109 = vmul.f32 %v3069, %v3069
    %v3110 = vmul.f32 %v3070, %v3070
    %v3111 = vmul.f32 %v3071, %v3071
    %v3112 = vmul.f32 %v3072, %v3072
    %v3113 = vsub.f32 %v3097, %v3105
    %v3114 = vsub.f32 %v3098, %v3106
    %v3115 = vsub.f32 %v3099, %v3107
    %v3116 = vsub.f32 %v3100, %v3108
    %v3117 = vsub.f32 %v3101, %v3109
    %v3118 = vsub.f32 %v3102, %v3110
    %v3119 = vsub.f32 %v3103, %v3111
    %v3120 = vsub.f32 %v3104, %v3112
    %v3121 = vadd.f32 %v3113, 1e-05
    %v3122 = vadd.f32 %v3114, 1e-05
    %v3123 = vadd.f32 %v3115, 1e-05
    %v3124 = vadd.f32 %v3116, 1e-05
    %v3125 = vadd.f32 %v3117, 1e-05
    %v3126 = vadd.f32 %v3118, 1e-05
    %v3127 = vadd.f32 %v3119, 1e-05
    %v3128 = vadd.f32 %v3120, 1e-05
    %v3129 = vrsqrt.pop %v3121
    %v3130 = vrsqrt.pop %v3122
    %v3131 = vrsqrt.pop %v3123
    %v3132 = vrsqrt.pop %v3124
    %v3133 = vrsqrt.pop %v3125
    %v3134 = vrsqrt.pop %v3126
    %v3135 = vrsqrt.pop %v3127
    %v3136 = vrsqrt.pop %v3128
    %v3137 = vsub.f32 %v3037, %v3065
    %v3138 = vsub.f32 %v3038, %v3066
    %v3139 = vsub.f32 %v3039, %v3067
    %v3140 = vsub.f32 %v3040, %v3068
    %v3141 = vsub.f32 %v3041, %v3069
    %v3142 = vsub.f32 %v3042, %v3070
    %v3143 = vsub.f32 %v3043, %v3071
    %v3144 = vsub.f32 %v3044, %v3072
    %v3145 = vmul.f32 %v3137, %v3129
    %v3146 = vmul.f32 %v3138, %v3130
    %v3147 = vmul.f32 %v3139, %v3131
    %v3148 = vmul.f32 %v3140, %v3132
    %v3149 = vmul.f32 %v3141, %v3133
    %v3150 = vmul.f32 %v3142, %v3134
    %v3151 = vmul.f32 %v3143, %v3135
    %v3152 = vmul.f32 %v3144, %v3136
    %v3154 = vlaneseq
    %v3155 = vshrl.u32 %v3154, 7
    %v3156 = vsub.s32 0, %v3155
    %v3157 = vrot.slane %v3046, %v3156
    %v3159 = vmul.f32 %v3145, %v3157
    %v3160 = vmul.f32 %v3146, %v3157
    %v3161 = vmul.f32 %v3147, %v3157
    %v3162 = vmul.f32 %v3148, %v3157
    %v3163 = vmul.f32 %v3149, %v3157
    %v3164 = vmul.f32 %v3150, %v3157
    %v3165 = vmul.f32 %v3151, %v3157
    %v3166 = vmul.f32 %v3152, %v3157
    %v3168 = vlaneseq
    %v3169 = vshrl.u32 %v3168, 7
    %v3170 = vsub.s32 0, %v3169
    %v3171 = vrot.slane %v3048, %v3170
    %v3173 = vadd.f32 %v3159, %v3171
    %v3174 = vadd.f32 %v3160, %v3171
    %v3175 = vadd.f32 %v3161, %v3171
    %v3176 = vadd.f32 %v3162, %v3171
    %v3177 = vadd.f32 %v3163, %v3171
    %v3178 = vadd.f32 %v3164, %v3171
    %v3179 = vadd.f32 %v3165, %v3171
    %v3180 = vadd.f32 %v3166, %v3171
    %s3181 = scalar_lea.vmem %s11, 64
    %v3182 = vld [vmem:[%s3181] sm:$0xf]
    %v3183 = vld [vmem:[%s3181 + $0x4] sm:$0xf]
    %v3184 = vld [vmem:[%s3181 + $0x8] sm:$0xf]
    %v3185 = vld [vmem:[%s3181 + $0xc] sm:$0xf]
    %v3186 = vld [vmem:[%s3181 + $0x10] sm:$0xf]
    %v3187 = vld [vmem:[%s3181 + $0x14] sm:$0xf]
    %v3188 = vld [vmem:[%s3181 + $0x18] sm:$0xf]
    %v3189 = vld [vmem:[%s3181 + $0x1c] sm:$0xf]
    %v3190 = vld [vmem:[%s3181 + $0x20] sm:$0xf]
    %v3191 = vld [vmem:[%s3181 + $0x24] sm:$0xf]
    %v3192 = vld [vmem:[%s3181 + $0x28] sm:$0xf]
    %v3193 = vld [vmem:[%s3181 + $0x2c] sm:$0xf]
    %v3194 = vld [vmem:[%s3181 + $0x30] sm:$0xf]
    %v3195 = vld [vmem:[%s3181 + $0x34] sm:$0xf]
    %v3196 = vld [vmem:[%s3181 + $0x38] sm:$0xf]
    %v3197 = vld [vmem:[%s3181 + $0x3c] sm:$0xf]
    %v3198 = vpack.c.bf16 %v3174, %v3173
    %v3199 = vpack.c.bf16 %v3176, %v3175
    %v3200 = vpack.c.bf16 %v3178, %v3177
    %v3201 = vpack.c.bf16 %v3180, %v3179
    %s3202 = scalar_lea.vmem %s12, 1
    %v3203 = vld [vmem:[%s3202] sm:$0x1]
    %v3205 = vlaneseq
    %v3206 = vshrl.u32 %v3205, 7
    %v3207 = vsub.s32 0, %v3206
    %v3208 = vrot.slane %v3203, %v3207
    %v3226 = vunpack.c.l.b16 %v3182
    %v3227 = vunpack.c.l.b16 %v3183
    %v3228 = vunpack.c.l.b16 %v3184
    %v3229 = vunpack.c.l.b16 %v3185
    %v3230 = vunpack.c.l.b16 %v3186
    %v3231 = vunpack.c.l.b16 %v3187
    %v3232 = vunpack.c.l.b16 %v3188
    %v3233 = vunpack.c.l.b16 %v3189
    %v3234 = vunpack.c.l.b16 %v3190
    %v3235 = vunpack.c.l.b16 %v3191
    %v3236 = vunpack.c.l.b16 %v3192
    %v3237 = vunpack.c.l.b16 %v3193
    %v3238 = vunpack.c.l.b16 %v3194
    %v3239 = vunpack.c.l.b16 %v3195
    %v3240 = vunpack.c.l.b16 %v3196
    %v3241 = vunpack.c.l.b16 %v3197
    %v3242 = vpack.c.b16 %v3227, %v3226
    %v3243 = vpack.c.b16 %v3229, %v3228
    %v3244 = vpack.c.b16 %v3231, %v3230
    %v3245 = vpack.c.b16 %v3233, %v3232
    %v3246 = vpack.c.b16 %v3235, %v3234
    %v3247 = vpack.c.b16 %v3237, %v3236
    %v3248 = vpack.c.b16 %v3239, %v3238
    %v3249 = vpack.c.b16 %v3241, %v3240
    %3258 = vmatprep.subr.bf16.mxu0 0
    %3259 = vmatpush1.bf16.msra.mxu0 %v3242
    %3260 = vmatprep.subr.bf16.mxu0 0
    %3261 = vmatpush1.bf16.msra.mxu0 %v3243
    %3262 = vmatprep.subr.bf16.mxu0 0
    %3263 = vmatpush1.bf16.msra.mxu0 %v3244
    %3264 = vmatprep.subr.bf16.mxu0 0
    %3265 = vmatpush1.bf16.msra.mxu0 %v3245
    %3266 = vmatprep.subr.bf16.mxu0 0
    %3267 = vmatpush1.bf16.msra.mxu0 %v3246
    %3268 = vmatprep.subr.bf16.mxu0 0
    %3269 = vmatpush1.bf16.msra.mxu0 %v3247
    %3270 = vmatprep.subr.bf16.mxu0 0
    %3271 = vmatpush1.bf16.msra.mxu0 %v3248
    %3272 = vmatprep.subr.bf16.mxu0 0
    %3273 = vmatpush1.bf16.msra.mxu0 %v3249
    %3274 = vmatprep.subr.bf16.mxu0 0
    %3275 = vmatpush1.bf16.msra.mxu0 0
    %3276 = vmatprep.subr.bf16.mxu0 0
    %3277 = vmatpush1.bf16.msra.mxu0 0
    %3278 = vmatprep.subr.bf16.mxu0 0
    %3279 = vmatpush1.bf16.msra.mxu0 0
    %3280 = vmatprep.subr.bf16.mxu0 0
    %3281 = vmatpush1.bf16.msra.mxu0 0
    %3282 = vmatprep.subr.bf16.mxu0 0
    %3283 = vmatpush1.bf16.msra.mxu0 0
    %3284 = vmatprep.subr.bf16.mxu0 0
    %3285 = vmatpush1.bf16.msra.mxu0 0
    %3286 = vmatprep.subr.bf16.mxu0 0
    %3287 = vmatpush1.bf16.msra.mxu0 0
    %3288 = vmatprep.subr.bf16.mxu0 0
    %3289 = vmatpush1.bf16.msra.mxu0 0
    %3290 = vmatprep.mubr.bf16.mxu0 0
    %3291 = vmatmul.mubr.bf16.gmra.mrb[0].mxu0 %v3198
    %v3292 = vpop.f32.mrb[0].mxu0
    %v3293 = vadd.f32 %v3208, %v3292
    %v3294 = vpop.f32.mrb[0].mxu0
    %v3295 = vpop.f32.mrb[0].mxu0
    %v3296 = vadd.f32 %v3208, %v3295
    %v3297 = vpop.f32.mrb[0].mxu0
    %3298 = vmatprep.mubr.bf16.mxu0 0
    %3299 = vmatmul.mubr.bf16.gmra.mrb[0].mxu0 %v3199
    %v3300 = vpop.f32.mrb[0].mxu0
    %v3301 = vadd.f32 %v3208, %v3300
    %v3302 = vpop.f32.mrb[0].mxu0
    %v3303 = vpop.f32.mrb[0].mxu0
    %v3304 = vadd.f32 %v3208, %v3303
    %v3305 = vpop.f32.mrb[0].mxu0
    %3306 = vmatprep.mubr.bf16.mxu0 0
    %3307 = vmatmul.mubr.bf16.gmra.mrb[0].mxu0 %v3200
    %v3308 = vpop.f32.mrb[0].mxu0
    %v3309 = vadd.f32 %v3208, %v3308
    %v3310 = vpop.f32.mrb[0].mxu0
    %v3311 = vpop.f32.mrb[0].mxu0
    %v3312 = vadd.f32 %v3208, %v3311
    %v3313 = vpop.f32.mrb[0].mxu0
    %3314 = vmatprep.mubr.bf16.mxu0 0
    %3315 = vmatmul.mubr.bf16.gmra.mrb[0].mxu0 %v3201
    %v3316 = vpop.f32.mrb[0].mxu0
    %v3317 = vadd.f32 %v3208, %v3316
    %v3318 = vpop.f32.mrb[0].mxu0
    %v3319 = vpop.f32.mrb[0].mxu0
    %v3320 = vadd.f32 %v3208, %v3319
    %v3321 = vpop.f32.mrb[0].mxu0
    %3322 = vdwg.mxu0
    %v3323 = vmul.f32 %v3293, 0.5
    %v3324 = vmul.f32 %v3296, 0.5
    %v3325 = vmul.f32 %v3301, 0.5
    %v3326 = vmul.f32 %v3304, 0.5
    %v3327 = vmul.f32 %v3309, 0.5
    %v3328 = vmul.f32 %v3312, 0.5
    %v3329 = vmul.f32 %v3317, 0.5
    %v3330 = vmul.f32 %v3320, 0.5
    %v3331 = vmul.f32 %v3293, 0.70710677
    %v3332 = vmul.f32 %v3296, 0.70710677
    %v3333 = vmul.f32 %v3301, 0.70710677
    %v3334 = vmul.f32 %v3304, 0.70710677
    %v3335 = vmul.f32 %v3309, 0.70710677
    %v3336 = vmul.f32 %v3312, 0.70710677
    %v3337 = vmul.f32 %v3317, 0.70710677
    %v3338 = vmul.f32 %v3320, 0.70710677
    %v3339 = verf.f32.pop %v3331
    %v3340 = verf.f32.pop %v3332
    %v3341 = verf.f32.pop %v3333
    %v3342 = verf.f32.pop %v3334
    %v3343 = verf.f32.pop %v3335
    %v3344 = verf.f32.pop %v3336
    %v3345 = verf.f32.pop %v3337
    %v3346 = verf.f32.pop %v3338
    %v3347 = vadd.f32 %v3339, 1.0
    %v3348 = vadd.f32 %v3340, 1.0
    %v3349 = vadd.f32 %v3341, 1.0
    %v3350 = vadd.f32 %v3342, 1.0
    %v3351 = vadd.f32 %v3343, 1.0
    %v3352 = vadd.f32 %v3344, 1.0
    %v3353 = vadd.f32 %v3345, 1.0
    %v3354 = vadd.f32 %v3346, 1.0
    %v3355 = vmul.f32 %v3323, %v3347
    %v3356 = vmul.f32 %v3324, %v3348
    %v3357 = vmul.f32 %v3325, %v3349
    %v3358 = vmul.f32 %v3326, %v3350
    %v3359 = vmul.f32 %v3327, %v3351
    %v3360 = vmul.f32 %v3328, %v3352
    %v3361 = vmul.f32 %v3329, %v3353
    %v3362 = vmul.f32 %v3330, %v3354
    %s3363 = scalar_lea.vmem %s13, 64
    %v3364 = vld [vmem:[%s3363] sm:$0xf]
    %v3365 = vld [vmem:[%s3363 + $0x4] sm:$0xf]
    %v3366 = vld [vmem:[%s3363 + $0x8] sm:$0xf]
    %v3367 = vld [vmem:[%s3363 + $0xc] sm:$0xf]
    %v3368 = vld [vmem:[%s3363 + $0x10] sm:$0xf]
    %v3369 = vld [vmem:[%s3363 + $0x14] sm:$0xf]
    %v3370 = vld [vmem:[%s3363 + $0x18] sm:$0xf]
    %v3371 = vld [vmem:[%s3363 + $0x1c] sm:$0xf]
    %v3372 = vld [vmem:[%s3363 + $0x20] sm:$0xf]
    %v3373 = vld [vmem:[%s3363 + $0x24] sm:$0xf]
    %v3374 = vld [vmem:[%s3363 + $0x28] sm:$0xf]
    %v3375 = vld [vmem:[%s3363 + $0x2c] sm:$0xf]
    %v3376 = vld [vmem:[%s3363 + $0x30] sm:$0xf]
    %v3377 = vld [vmem:[%s3363 + $0x34] sm:$0xf]
    %v3378 = vld [vmem:[%s3363 + $0x38] sm:$0xf]
    %v3379 = vld [vmem:[%s3363 + $0x3c] sm:$0xf]
    %v3380 = vpack.c.bf16 %v3356, %v3355
    %v3381 = vpack.c.bf16 %v3358, %v3357
    %v3382 = vpack.c.bf16 %v3360, %v3359
    %v3383 = vpack.c.bf16 %v3362, %v3361
    %v3400 = vunpack.c.l.b16 %v3364
    %v3401 = vunpack.c.l.b16 %v3365
    %v3402 = vunpack.c.l.b16 %v3366
    %v3403 = vunpack.c.l.b16 %v3367
    %v3404 = vunpack.c.l.b16 %v3368
    %v3405 = vunpack.c.l.b16 %v3369
    %v3406 = vunpack.c.l.b16 %v3370
    %v3407 = vunpack.c.l.b16 %v3371
    %v3408 = vunpack.c.l.b16 %v3372
    %v3409 = vunpack.c.l.b16 %v3373
    %v3410 = vunpack.c.l.b16 %v3374
    %v3411 = vunpack.c.l.b16 %v3375
    %v3412 = vunpack.c.l.b16 %v3376
    %v3413 = vunpack.c.l.b16 %v3377
    %v3414 = vunpack.c.l.b16 %v3378
    %v3415 = vunpack.c.l.b16 %v3379
    %v3416 = vpack.c.b16 %v3401, %v3400
    %v3417 = vpack.c.b16 %v3403, %v3402
    %v3418 = vpack.c.b16 %v3405, %v3404
    %v3419 = vpack.c.b16 %v3407, %v3406
    %v3420 = vpack.c.b16 %v3409, %v3408
    %v3421 = vpack.c.b16 %v3411, %v3410
    %v3422 = vpack.c.b16 %v3413, %v3412
    %v3423 = vpack.c.b16 %v3415, %v3414
    %3432 = vmatprep.subr.bf16.mxu0 0
    %3433 = vmatpush1.bf16.msra.mxu0 %v3416
    %3434 = vmatprep.subr.bf16.mxu0 0
    %3435 = vmatpush1.bf16.msra.mxu0 %v3417
    %3436 = vmatprep.subr.bf16.mxu0 0
    %3437 = vmatpush1.bf16.msra.mxu0 %v3418
    %3438 = vmatprep.subr.bf16.mxu0 0
    %3439 = vmatpush1.bf16.msra.mxu0 %v3419
    %3440 = vmatprep.subr.bf16.mxu0 0
    %3441 = vmatpush1.bf16.msra.mxu0 %v3420
    %3442 = vmatprep.subr.bf16.mxu0 0
    %3443 = vmatpush1.bf16.msra.mxu0 %v3421
    %3444 = vmatprep.subr.bf16.mxu0 0
    %3445 = vmatpush1.bf16.msra.mxu0 %v3422
    %3446 = vmatprep.subr.bf16.mxu0 0
    %3447 = vmatpush1.bf16.msra.mxu0 %v3423
    %3448 = vmatprep.subr.bf16.mxu0 0
    %3449 = vmatpush1.bf16.msra.mxu0 0
    %3450 = vmatprep.subr.bf16.mxu0 0
    %3451 = vmatpush1.bf16.msra.mxu0 0
    %3452 = vmatprep.subr.bf16.mxu0 0
    %3453 = vmatpush1.bf16.msra.mxu0 0
    %3454 = vmatprep.subr.bf16.mxu0 0
    %3455 = vmatpush1.bf16.msra.mxu0 0
    %3456 = vmatprep.subr.bf16.mxu0 0
    %3457 = vmatpush1.bf16.msra.mxu0 0
    %3458 = vmatprep.subr.bf16.mxu0 0
    %3459 = vmatpush1.bf16.msra.mxu0 0
    %3460 = vmatprep.subr.bf16.mxu0 0
    %3461 = vmatpush1.bf16.msra.mxu0 0
    %3462 = vmatprep.subr.bf16.mxu0 0
    %3463 = vmatpush1.bf16.msra.mxu0 0
    %3464 = vmatprep.mubr.bf16.mxu0 0
    %3465 = vmatmul.mubr.bf16.gmra.mrb[0].mxu0 %v3380
    %v3466 = vpop.f32.mrb[0].mxu0
    %v3467 = vadd.f32 0.0, %v3466
    %v3468 = vpop.f32.mrb[0].mxu0
    %v3469 = vpop.f32.mrb[0].mxu0
    %v3470 = vadd.f32 0.0, %v3469
    %v3471 = vpop.f32.mrb[0].mxu0
    %3472 = vmatprep.mubr.bf16.mxu0 0
    %3473 = vmatmul.mubr.bf16.gmra.mrb[0].mxu0 %v3381
    %v3474 = vpop.f32.mrb[0].mxu0
    %v3475 = vadd.f32 0.0, %v3474
    %v3476 = vpop.f32.mrb[0].mxu0
    %v3477 = vpop.f32.mrb[0].mxu0
    %v3478 = vadd.f32 0.0, %v3477
    %v3479 = vpop.f32.mrb[0].mxu0
    %3480 = vmatprep.mubr.bf16.mxu0 0
    %3481 = vmatmul.mubr.bf16.gmra.mrb[0].mxu0 %v3382
    %v3482 = vpop.f32.mrb[0].mxu0
    %v3483 = vadd.f32 0.0, %v3482
    %v3484 = vpop.f32.mrb[0].mxu0
    %v3485 = vpop.f32.mrb[0].mxu0
    %v3486 = vadd.f32 0.0, %v3485
    %v3487 = vpop.f32.mrb[0].mxu0
    %3488 = vmatprep.mubr.bf16.mxu0 0
    %3489 = vmatmul.mubr.bf16.gmra.mrb[0].mxu0 %v3383
    %v3490 = vpop.f32.mrb[0].mxu0
    %v3491 = vadd.f32 0.0, %v3490
    %v3492 = vpop.f32.mrb[0].mxu0
    %v3493 = vpop.f32.mrb[0].mxu0
    %v3494 = vadd.f32 0.0, %v3493
    %v3495 = vpop.f32.mrb[0].mxu0
    %3496 = vdwg.mxu0
    %v3497 = vadd.f32 %v3037, %v3467
    %v3498 = vadd.f32 %v3038, %v3470
    %v3499 = vadd.f32 %v3039, %v3475
    %v3500 = vadd.f32 %v3040, %v3478
    %v3501 = vadd.f32 %v3041, %v3483
    %v3502 = vadd.f32 %v3042, %v3486
    %v3503 = vadd.f32 %v3043, %v3491
    %v3504 = vadd.f32 %v3044, %v3494
    %s3505 = scalar_lea.vmem %s14, 1
    %v3506 = vld [vmem:[%s3505] sm:$0x1]
    %v3508 = vlaneseq
    %v3509 = vshrl.u32 %v3508, 7
    %v3510 = vsub.s32 0, %v3509
    %v3511 = vrot.slane %v3506, %v3510
    %v3513 = vadd.f32 %v3497, %v3511
    %v3514 = vadd.f32 %v3498, %v3511
    %v3515 = vadd.f32 %v3499, %v3511
    %v3516 = vadd.f32 %v3500, %v3511
    %v3517 = vadd.f32 %v3501, %v3511
    %v3518 = vadd.f32 %v3502, %v3511
    %v3519 = vadd.f32 %v3503, %v3511
    %v3520 = vadd.f32 %v3504, %v3511
    %v3521 = vmul.f32 %v3513, %v80
    %v3522 = vmul.f32 %v3514, %v81
    %v3523 = vmul.f32 %v3515, %v82
    %v3524 = vmul.f32 %v3516, %v83
    %v3525 = vmul.f32 %v3517, %v80
    %v3526 = vmul.f32 %v3518, %v81
    %v3527 = vmul.f32 %v3519, %v82
    %v3528 = vmul.f32 %v3520, %v83
    %v3529 = vadd.f32 %v3521, %v3522
    %v3530 = vadd.f32 %v3529, %v3523
    %v3531 = vadd.f32 %v3530, %v3524
    %v3532 = vrot.slane %v3531, 4
    %v3533 = vadd.f32 %v3531, %v3532
    %v3534 = vrot.slane %v3533, 2
    %v3535 = vadd.f32 %v3533, %v3534
    %v3536 = vrot.slane %v3535, 1
    %v3537 = vadd.f32 %v3535, %v3536
    %v3538 = vadd.f32 %v3525, %v3526
    %v3539 = vadd.f32 %v3538, %v3527
    %v3540 = vadd.f32 %v3539, %v3528
    %v3541 = vrot.slane %v3540, 4
    %v3542 = vadd.f32 %v3540, %v3541
    %v3543 = vrot.slane %v3542, 2
    %v3544 = vadd.f32 %v3542, %v3543
    %v3545 = vrot.slane %v3544, 1
    %v3546 = vadd.f32 %v3544, %v3545
    %v3547 = vld [vmem:[%s15] sm:$0x1]
    %v3548 = vld [vmem:[%s16] sm:$0x1]
    %vm3551 = vcmask 1041409
    %v3552 = vsel %vm3551, %v3546, %v3537
    %vm3554 = vcmask 1041408
    %v3555 = vsel %vm3554, %v3552, 0.0
    %3556 = vadd.xlane.f32.xlu0 %v3555
    %v3557 = vpop.xlane.xlu0 %3556
    %v3558 = vmul.f32 %v3557, 0.03125
    %v3559 = vmul.f32 %v3537, %v3537
    %v3560 = vmul.f32 %v3546, %v3546
    %v3563 = vsel %vm3551, %v3560, %v3559
    %v3565 = vsel %vm3554, %v3563, 0.0
    %3566 = vadd.xlane.f32.xlu0 %v3565
    %v3567 = vpop.xlane.xlu0 %3566
    %v3568 = vmul.f32 %v3567, 0.03125
    %v3569 = vmul.f32 %v3558, %v3558
    %v3570 = vsub.f32 %v3568, %v3569
    %v3571 = vadd.f32 %v3570, 1e-05
    %v3572 = vrsqrt.pop %v3571
    %v3574 = vrot.slane %v3558, 1
    %v3577 = vsub.f32 %v3537, %v3558
    %v3578 = vsub.f32 %v3546, %v3574
    %v3580 = vrot.slane %v3572, 1
    %v3583 = vmul.f32 %v3577, %v3572
    %v3584 = vmul.f32 %v3578, %v3580
    %v3586 = vlaneseq
    %v3587 = vshrl.u32 %v3586, 7
    %v3588 = vsub.s32 0, %v3587
    %v3589 = vrot.slane %v3547, %v3588
    %v3591 = vmul.f32 %v3583, %v3589
    %v3592 = vmul.f32 %v3584, %v3589
    %v3594 = vlaneseq
    %v3595 = vshrl.u32 %v3594, 7
    %v3596 = vsub.s32 0, %v3595
    %v3597 = vrot.slane %v3548, %v3596
    %v3599 = vadd.f32 %v3591, %v3597
    %v3600 = vadd.f32 %v3592, %v3597
    %v3601 = vld [vmem:[%s17] sm:$0xf]
    %v3602 = vld [vmem:[%s17 + $0x4] sm:$0xf]
    %v3603 = vld [vmem:[%s17 + $0x8] sm:$0xf]
    %v3604 = vld [vmem:[%s17 + $0xc] sm:$0xf]
    %v3605 = vld [vmem:[%s17 + $0x10] sm:$0xf]
    %v3606 = vld [vmem:[%s17 + $0x14] sm:$0xf]
    %v3607 = vld [vmem:[%s17 + $0x18] sm:$0xf]
    %v3608 = vld [vmem:[%s17 + $0x1c] sm:$0xf]
    %v3609 = vld [vmem:[%s17 + $0x20] sm:$0xf]
    %v3610 = vld [vmem:[%s17 + $0x24] sm:$0xf]
    %v3611 = vld [vmem:[%s17 + $0x28] sm:$0xf]
    %v3612 = vld [vmem:[%s17 + $0x2c] sm:$0xf]
    %v3613 = vld [vmem:[%s17 + $0x30] sm:$0xf]
    %v3614 = vld [vmem:[%s17 + $0x34] sm:$0xf]
    %v3615 = vld [vmem:[%s17 + $0x38] sm:$0xf]
    %v3616 = vld [vmem:[%s17 + $0x3c] sm:$0xf]
    %v3617 = vpack.c.bf16 %v3599, %v3599
    %v3618 = vpack.c.bf16 %v3600, %v3600
    %v3619 = vld [vmem:[%s18] sm:$0x1]
    %v3621 = vlaneseq
    %v3622 = vshrl.u32 %v3621, 7
    %v3623 = vsub.s32 0, %v3622
    %v3624 = vrot.slane %v3619, %v3623
    %v3628 = vunpack.c.l.b16 %v3617
    %v3629 = vunpack.c.l.b16 %v3618
    %v3630 = vrot.slane %v3629, 7
    %v3631 = vsel %vm3551, %v3630, %v3628
    %v3632 = vpack.c.b16 %v3631, %v3631
    %v3650 = vunpack.c.l.b16 %v3601
    %v3651 = vunpack.c.l.b16 %v3602
    %v3652 = vunpack.c.l.b16 %v3603
    %v3653 = vunpack.c.l.b16 %v3604
    %v3654 = vunpack.c.l.b16 %v3605
    %v3655 = vunpack.c.l.b16 %v3606
    %v3656 = vunpack.c.l.b16 %v3607
    %v3657 = vunpack.c.l.b16 %v3608
    %v3658 = vunpack.c.l.b16 %v3609
    %v3659 = vunpack.c.l.b16 %v3610
    %v3660 = vunpack.c.l.b16 %v3611
    %v3661 = vunpack.c.l.b16 %v3612
    %v3662 = vunpack.c.l.b16 %v3613
    %v3663 = vunpack.c.l.b16 %v3614
    %v3664 = vunpack.c.l.b16 %v3615
    %v3665 = vunpack.c.l.b16 %v3616
    %v3666 = vpack.c.b16 %v3651, %v3650
    %v3667 = vpack.c.b16 %v3653, %v3652
    %v3668 = vpack.c.b16 %v3655, %v3654
    %v3669 = vpack.c.b16 %v3657, %v3656
    %v3670 = vpack.c.b16 %v3659, %v3658
    %v3671 = vpack.c.b16 %v3661, %v3660
    %v3672 = vpack.c.b16 %v3663, %v3662
    %v3673 = vpack.c.b16 %v3665, %v3664
    %3682 = vmatprep.subr.bf16.mxu0 0
    %3683 = vmatpush1.bf16.msra.mxu0 %v3666
    %3684 = vmatprep.subr.bf16.mxu0 0
    %3685 = vmatpush1.bf16.msra.mxu0 %v3667
    %3686 = vmatprep.subr.bf16.mxu0 0
    %3687 = vmatpush1.bf16.msra.mxu0 %v3668
    %3688 = vmatprep.subr.bf16.mxu0 0
    %3689 = vmatpush1.bf16.msra.mxu0 %v3669
    %3690 = vmatprep.subr.bf16.mxu0 0
    %3691 = vmatpush1.bf16.msra.mxu0 %v3670
    %3692 = vmatprep.subr.bf16.mxu0 0
    %3693 = vmatpush1.bf16.msra.mxu0 %v3671
    %3694 = vmatprep.subr.bf16.mxu0 0
    %3695 = vmatpush1.bf16.msra.mxu0 %v3672
    %3696 = vmatprep.subr.bf16.mxu0 0
    %3697 = vmatpush1.bf16.msra.mxu0 %v3673
    %3698 = vmatprep.subr.bf16.mxu0 0
    %3699 = vmatpush1.bf16.msra.mxu0 0
    %3700 = vmatprep.subr.bf16.mxu0 0
    %3701 = vmatpush1.bf16.msra.mxu0 0
    %3702 = vmatprep.subr.bf16.mxu0 0
    %3703 = vmatpush1.bf16.msra.mxu0 0
    %3704 = vmatprep.subr.bf16.mxu0 0
    %3705 = vmatpush1.bf16.msra.mxu0 0
    %3706 = vmatprep.subr.bf16.mxu0 0
    %3707 = vmatpush1.bf16.msra.mxu0 0
    %3708 = vmatprep.subr.bf16.mxu0 0
    %3709 = vmatpush1.bf16.msra.mxu0 0
    %3710 = vmatprep.subr.bf16.mxu0 0
    %3711 = vmatpush1.bf16.msra.mxu0 0
    %3712 = vmatprep.subr.bf16.mxu0 0
    %3713 = vmatpush1.bf16.msra.mxu0 0
    %3714 = vmatprep.mubr.bf16.mxu0 0
    %3715 = vmatmul.mubr.bf16.gmra.mrb[0].mxu0 %v3632
    %v3716 = vpop.f32.mrb[0].mxu0
    %v3717 = vadd.f32 %v3624, %v3716
    %v3718 = vpop.f32.mrb[0].mxu0
    %v3719 = vpop.f32.mrb[0].mxu0
    %v3720 = vpop.f32.mrb[0].mxu0
    %3721 = vdwg.mxu0
    %3722 = vst [vmem:[#allocation2] sm:$0x3] %v3717
    // Predicated region
    $region78: #{vit_forward.1} parent=1 // pred_check
      _
    $region79: #{vit_forward.1} parent=1 // pred_check_branch
      %3724 = sbr.rel (0) target = $region81
    $region80: #{vit_forward.1} parent=1 // pred_region
      %s3726 = ssub.s32 32, 32
      %3727 = vsyncadd [#allocation3], %s3726
      %s3729 = sshll.u32 [#allocation2], 4
      %s3730 = int_to_ptr.vmem [resolvable:$true] %s3729
      %3732 = dma.vmem_to_hbm [thread:$0]  %s3730, 32, %s19, [#allocation3]
    $region81: #{vit_forward.1} parent=1 // pred_fallthru
      _
    // Predicated region
    $region82: #{vit_forward.1} parent=1 // pred_check
      _
    $region83: #{vit_forward.1} parent=1 // pred_check_branch
      %3734 = sbr.rel (0) target = $region85
    $region84: #{vit_forward.1} parent=1 // pred_region
      %3735 = dma.done [#allocation3], 32
    $region85: #{vit_forward.1} parent=1 // pred_fallthru
      _
    %3736 = vsyncpa [#allocation3], 1

</llo_original>
